<compile_context>
chip_gen: v6e
topology: v6e:2x2x1
jax: 0.10.0
libtpu: 0.0.40
codegen_flags: <defaults>
</compile_context>

<pallas_src>
import functools
import numpy as np

import jax
import jax.numpy as jnp
from jax import lax
from jax.experimental import pallas as pl
from jax.experimental.pallas import tpu as pltpu


# ----------------------------- Pallas kernels -------------------------------

def conv3_in_lrelu_kernel(x_ref, m_ref, w_ref, b_ref, o_ref, *, D, H, W, eps, slope):
    """Fused Conv3d(3x3x3, pad=1) + bias + InstanceNorm3d + LeakyReLU.

    x_ref: (1, DHW, Cin)  flattened spatial, channels last (lanes)
    m_ref: (DHW, 27)      0/1 validity mask per conv tap
    w_ref: (27, Cin, Cout) per-tap weight matrices
    b_ref: (1, Cout)      conv bias
    o_ref: (1, DHW, Cout)
    """
    x = x_ref[0]                                   # (DHW, Cin)
    DHW = D * H * W
    cout = w_ref.shape[2]

    acc = jnp.zeros((DHW, cout), jnp.float32)
    k = 0
    for kd in range(3):
        for kh in range(3):
            for kw in range(3):
                # source row for output row p is p + s (zero-padded conv)
                s = (kd - 1) * H * W + (kh - 1) * W + (kw - 1)
                t = s % DHW
                if t == 0:
                    shifted = x
                else:
                    # shifted[p] = x[(p + s) mod DHW]  (2-slice sublane concat)
                    shifted = jnp.concatenate([x[t:, :], x[:t, :]], axis=0)
                xk = shifted * m_ref[:, k:k + 1]   # zero out-of-range rows
                acc = acc + jnp.dot(xk, w_ref[k],
                                    preferred_element_type=jnp.float32)
                k += 1

    acc = acc + b_ref[...]                          # conv bias

    # InstanceNorm3d (affine=False): per-channel stats over all spatial rows
    mu = jnp.mean(acc, axis=0, keepdims=True)
    var = jnp.mean((acc - mu) ** 2, axis=0, keepdims=True)
    yn = (acc - mu) * lax.rsqrt(var + eps)

    # LeakyReLU
    o_ref[0] = jnp.where(yn >= 0, yn, slope * yn)


def upsample_trilinear2x_kernel(x_ref, o_ref):
    """Trilinear 2x upsample, align_corners=False (PyTorch nn.Upsample).

    x_ref: (1, D, H, W, C) -> o_ref: (1, 2D, 2H, 2W, C)
    Per axis: out[2m]   = 0.25*x[max(m-1,0)] + 0.75*x[m]
              out[2m+1] = 0.75*x[m] + 0.25*x[min(m+1,N-1)]
    """
    x = x_ref[0]                                   # (D, H, W, C)
    D, H, W, C = x.shape

    def up_leading_axis(t, axis):
        n = t.shape[axis]
        pieces = []
        for m in range(n):
            cur = lax.slice_in_dim(t, m, m + 1, axis=axis)
            pm = max(m - 1, 0)
            nm = min(m + 1, n - 1)
            prv = lax.slice_in_dim(t, pm, pm + 1, axis=axis)
            nxt = lax.slice_in_dim(t, nm, nm + 1, axis=axis)
            pieces.append(0.25 * prv + 0.75 * cur)
            pieces.append(0.75 * cur + 0.25 * nxt)
        return jnp.concatenate(pieces, axis=axis)

    y = up_leading_axis(x, 0)                      # (2D, H, W, C)
    y = up_leading_axis(y, 1)                      # (2D, 2H, W, C)

    # W is the sublane axis: blend and store each output slice directly into
    # o_ref to keep padded intermediates small (no big sublane concat).
    for m in range(W):
        pm = max(m - 1, 0)
        nm = min(m + 1, W - 1)
        cur = y[:, :, m:m + 1, :]
        prv = y[:, :, pm:pm + 1, :]
        nxt = y[:, :, nm:nm + 1, :]
        o_ref[0, :, :, 2 * m:2 * m + 1, :] = 0.25 * prv + 0.75 * cur
        o_ref[0, :, :, 2 * m + 1:2 * m + 2, :] = 0.75 * cur + 0.25 * nxt


def conv1x1_kernel(x_ref, w_ref, b_ref, o_ref):
    """1x1x1 Conv3d == per-voxel matmul over channels."""
    o_ref[0] = jnp.dot(x_ref[0], w_ref[...],
                       preferred_element_type=jnp.float32) + b_ref[...]


# ------------------------------- wrappers -----------------------------------

_CPARAMS = pltpu.CompilerParams(dimension_semantics=("parallel",),
                                vmem_limit_bytes=48 * 1024 * 1024)


def _tap_valid_masks(D, H, W):
    """(DHW, 27) float mask: 1 where the conv tap's source voxel is in range."""
    d, h, w = np.meshgrid(np.arange(D), np.arange(H), np.arange(W), indexing="ij")
    cols = []
    for kd in range(3):
        for kh in range(3):
            for kw in range(3):
                od, oh, ow = kd - 1, kh - 1, kw - 1
                ok = ((d + od >= 0) & (d + od < D) &
                      (h + oh >= 0) & (h + oh < H) &
                      (w + ow >= 0) & (w + ow < W))
                cols.append(ok.reshape(-1))
    return jnp.asarray(np.stack(cols, axis=1).astype(np.float32))


def conv3_in_lrelu(x_flat, masks, w27, bias, *, D, H, W, eps=1e-5, slope=0.01):
    B, DHW, cin = x_flat.shape
    cout = w27.shape[2]
    kern = functools.partial(conv3_in_lrelu_kernel,
                             D=D, H=H, W=W, eps=eps, slope=slope)
    return pl.pallas_call(
        kern,
        out_shape=jax.ShapeDtypeStruct((B, DHW, cout), jnp.float32),
        grid=(B,),
        in_specs=[
            pl.BlockSpec((1, DHW, cin), lambda b_: (b_, 0, 0)),
            pl.BlockSpec((DHW, 27), lambda b_: (0, 0)),
            pl.BlockSpec((27, cin, cout), lambda b_: (0, 0, 0)),
            pl.BlockSpec((1, cout), lambda b_: (0, 0)),
        ],
        out_specs=pl.BlockSpec((1, DHW, cout), lambda b_: (b_, 0, 0)),
        compiler_params=_CPARAMS,
    )(x_flat, masks, w27, bias)


def upsample_trilinear2x(x):
    B, D, H, W, C = x.shape
    return pl.pallas_call(
        upsample_trilinear2x_kernel,
        out_shape=jax.ShapeDtypeStruct((B, 2 * D, 2 * H, 2 * W, C), jnp.float32),
        grid=(B,),
        in_specs=[pl.BlockSpec((1, D, H, W, C), lambda b_: (b_, 0, 0, 0, 0))],
        out_specs=pl.BlockSpec((1, 2 * D, 2 * H, 2 * W, C),
                               lambda b_: (b_, 0, 0, 0, 0)),
        compiler_params=_CPARAMS,
    )(x)


def conv1x1(x_flat, w, bias):
    B, N, cin = x_flat.shape
    cout = w.shape[1]
    return pl.pallas_call(
        conv1x1_kernel,
        out_shape=jax.ShapeDtypeStruct((B, N, cout), jnp.float32),
        grid=(B,),
        in_specs=[
            pl.BlockSpec((1, N, cin), lambda b_: (b_, 0, 0)),
            pl.BlockSpec((cin, cout), lambda b_: (0, 0)),
            pl.BlockSpec((1, cout), lambda b_: (0, 0)),
        ],
        out_specs=pl.BlockSpec((1, N, cout), lambda b_: (b_, 0, 0)),
        compiler_params=_CPARAMS,
    )(x_flat, w, bias)


def unet_block_forward(x_ncdhw, up_weights, up_biases, out_w, out_b):
    """UNetBlock.forward.  x: (B, C, D, H, W) -> (B, out_ch, D*2^n, H*2^n, W*2^n)."""
    x = jnp.transpose(x_ncdhw, (0, 2, 3, 4, 1))     # channels last (lanes)
    B, D, H, W, C = x.shape
    for w_dhwio, bias in zip(up_weights, up_biases):
        cin, cout = w_dhwio.shape[3], w_dhwio.shape[4]
        masks = _tap_valid_masks(D, H, W)           # (DHW, 27)
        w27 = w_dhwio.reshape(27, cin, cout)
        y = conv3_in_lrelu(x.reshape(B, D * H * W, cin), masks, w27,
                           bias.reshape(1, cout), D=D, H=H, W=W)
        y = y.reshape(B, D, H, W, cout)
        x = upsample_trilinear2x(y)
        D, H, W, C = 2 * D, 2 * H, 2 * W, cout
    out = conv1x1(x.reshape(B, D * H * W, C), out_w, out_b.reshape(1, -1))
    out = out.reshape(B, D, H, W, out_w.shape[1])
    return jnp.transpose(out, (0, 4, 1, 2, 3))      # back to NCDHW


# ---------------------------- pure-JAX reference ----------------------------

def _ref_unet_block(x_ncdhw, up_weights, up_biases, out_w, out_b,
                    eps=1e-5, slope=0.01):
    x = jnp.transpose(x_ncdhw, (0, 2, 3, 4, 1))
    for w_dhwio, bias in zip(up_weights, up_biases):
        y = lax.conv_general_dilated(
            x, w_dhwio, window_strides=(1, 1, 1), padding="SAME",
            dimension_numbers=("NDHWC", "DHWIO", "NDHWC"),
            precision=lax.Precision.HIGHEST) + bias
        mu = y.mean(axis=(1, 2, 3), keepdims=True)
        var = ((y - mu) ** 2).mean(axis=(1, 2, 3), keepdims=True)
        y = (y - mu) * lax.rsqrt(var + eps)
        y = jnp.where(y >= 0, y, slope * y)
        B, D, H, W, C = y.shape
        x = jax.image.resize(y, (B, 2 * D, 2 * H, 2 * W, C), method="trilinear")
    out = jnp.einsum("bdhwc,co->bdhwo", x, out_w,
                     precision=lax.Precision.HIGHEST) + out_b
    return jnp.transpose(out, (0, 4, 1, 2, 3))


# ---------------------------------- main -------------------------------------

if __name__ == "__main__":
    # Small UNetBlock config: in_channels=16, out_channels=3, num_upsample=2
    # (channels 16 -> 8 -> 4, spatial 4^3 -> 8^3 -> 16^3, then 1x1x1 conv 4->3).
    B = 2
    in_channels, out_channels, num_upsample = 16, 3, 2
    D0 = H0 = W0 = 4

    key = jax.random.PRNGKey(0)
    up_weights, up_biases = [], []
    c = in_channels
    for _ in range(num_upsample):
        cin, cout = c, c // 2
        key, kw_, kb_ = jax.random.split(key, 3)
        up_weights.append(
            (0.1 * jax.random.normal(kw_, (3, 3, 3, cin, cout))).astype(jnp.float32))
        up_biases.append(
            (0.1 * jax.random.normal(kb_, (cout,))).astype(jnp.float32))
        c = cout
    key, kw_, kb_, kx_ = jax.random.split(key, 4)
    out_w = (0.1 * jax.random.normal(kw_, (c, out_channels))).astype(jnp.float32)
    out_b = (0.1 * jax.random.normal(kb_, (out_channels,))).astype(jnp.float32)

    x = jax.random.normal(kx_, (B, in_channels, D0, H0, W0), dtype=jnp.float32)

    out = unet_block_forward(x, up_weights, up_biases, out_w, out_b)
    out = jax.block_until_ready(out)

    scale = 2 ** num_upsample
    assert out.shape == (B, out_channels, D0 * scale, H0 * scale, W0 * scale), out.shape

    ref = _ref_unet_block(x, up_weights, up_biases, out_w, out_b)
    err = float(jnp.max(jnp.abs(out - ref)))
    assert jnp.allclose(out, ref, atol=5e-4, rtol=5e-4), f"max abs err {err}"

    print("KERNEL_OK")
</pallas_src>

<mosaic_0001>
module attributes {stable_mosaic.version = 11 : i64} {
  func.func @conv3_in_lrelu_kernel(%arg0: i32, %arg1: memref<1x64x16xf32, #tpu.memory_space<vmem>>, %arg2: memref<64x27xf32, #tpu.memory_space<vmem>>, %arg3: memref<27x16x8xf32, #tpu.memory_space<vmem>>, %arg4: memref<1x8xf32, #tpu.memory_space<vmem>>, %arg5: memref<1x64x8xf32, #tpu.memory_space<vmem>>) attributes {dimension_semantics = [#tpu.dimension_semantics<parallel>], iteration_bounds = array<i64: 2>, scalar_prefetch = 0 : i64, scratch_operands = 0 : i64, tpu.core_type = #tpu.core_type<tc>, window_params = [{transform_indices = @transform_0, window_bounds = array<i64: 1, 64, 16>}, {pipeline_mode = #tpu.pipeline_mode<synchronous>, transform_indices = @transform_1, window_bounds = array<i64: 64, 27>}, {pipeline_mode = #tpu.pipeline_mode<synchronous>, transform_indices = @transform_2, window_bounds = array<i64: 27, 16, 8>}, {pipeline_mode = #tpu.pipeline_mode<synchronous>, transform_indices = @transform_3, window_bounds = array<i64: 1, 8>}, {transform_indices = @transform_4, window_bounds = array<i64: 1, 64, 8>}]} {
    %c0 = arith.constant 0 : index
    %c0_0 = arith.constant 0 : index
    %c0_1 = arith.constant 0 : index
    %0 = vector.load %arg1[%c0, %c0_0, %c0_1] : memref<1x64x16xf32, #tpu.memory_space<vmem>>, vector<1x64x16xf32>
    %1 = vector.shape_cast %0 : vector<1x64x16xf32> to vector<64x16xf32>
    %cst = arith.constant 0.000000e+00 : f32
    %2 = vector.broadcast %cst : f32 to vector<64x8xf32>
    %3 = vector.extract_strided_slice %1 {offsets = [43, 0], sizes = [21, 16], strides = [1, 1]} : vector<64x16xf32> to vector<21x16xf32>
    %4 = vector.extract_strided_slice %1 {offsets = [0, 0], sizes = [43, 16], strides = [1, 1]} : vector<64x16xf32> to vector<43x16xf32>
    %5 = tpu.concatenate %3, %4 in 0 : vector<21x16xf32>, vector<43x16xf32> -> vector<64x16xf32>
    %c0_2 = arith.constant 0 : index
    %c0_3 = arith.constant 0 : index
    %6 = vector.load %arg2[%c0_2, %c0_3] : memref<64x27xf32, #tpu.memory_space<vmem>>, vector<64x1xf32>
    %7 = vector.broadcast %6 : vector<64x1xf32> to vector<64x16xf32>
    %8 = arith.mulf %5, %7 : vector<64x16xf32>
    %c0_4 = arith.constant 0 : index
    %c0_5 = arith.constant 0 : index
    %c0_6 = arith.constant 0 : index
    %9 = vector.load %arg3[%c0_4, %c0_5, %c0_6] : memref<27x16x8xf32, #tpu.memory_space<vmem>>, vector<1x16x8xf32>
    %10 = vector.shape_cast %9 : vector<1x16x8xf32> to vector<16x8xf32>
    %cst_7 = arith.constant dense<0.000000e+00> : vector<64x8xf32>
    %11 = tpu.matmul %8, %10, %cst_7 {dimension_numbers = #tpu.dot_dimension_numbers<[1], [0], [0], [1], [0, 0, 1, 1], [], []>} : vector<64x16xf32>, vector<16x8xf32>, vector<64x8xf32> -> vector<64x8xf32>
    %12 = arith.addf %2, %11 : vector<64x8xf32>
    %13 = vector.extract_strided_slice %1 {offsets = [44, 0], sizes = [20, 16], strides = [1, 1]} : vector<64x16xf32> to vector<20x16xf32>
    %14 = vector.extract_strided_slice %1 {offsets = [0, 0], sizes = [44, 16], strides = [1, 1]} : vector<64x16xf32> to vector<44x16xf32>
    %15 = tpu.concatenate %13, %14 in 0 : vector<20x16xf32>, vector<44x16xf32> -> vector<64x16xf32>
    %c0_8 = arith.constant 0 : index
    %c1 = arith.constant 1 : index
    %16 = vector.load %arg2[%c0_8, %c1] : memref<64x27xf32, #tpu.memory_space<vmem>>, vector<64x1xf32>
    %17 = vector.broadcast %16 : vector<64x1xf32> to vector<64x16xf32>
    %18 = arith.mulf %15, %17 : vector<64x16xf32>
    %c1_9 = arith.constant 1 : index
    %c0_10 = arith.constant 0 : index
    %c0_11 = arith.constant 0 : index
    %19 = vector.load %arg3[%c1_9, %c0_10, %c0_11] : memref<27x16x8xf32, #tpu.memory_space<vmem>>, vector<1x16x8xf32>
    %20 = vector.shape_cast %19 : vector<1x16x8xf32> to vector<16x8xf32>
    %cst_12 = arith.constant dense<0.000000e+00> : vector<64x8xf32>
    %21 = tpu.matmul %18, %20, %cst_12 {dimension_numbers = #tpu.dot_dimension_numbers<[1], [0], [0], [1], [0, 0, 1, 1], [], []>} : vector<64x16xf32>, vector<16x8xf32>, vector<64x8xf32> -> vector<64x8xf32>
    %22 = arith.addf %12, %21 : vector<64x8xf32>
    %23 = vector.extract_strided_slice %1 {offsets = [45, 0], sizes = [19, 16], strides = [1, 1]} : vector<64x16xf32> to vector<19x16xf32>
    %24 = vector.extract_strided_slice %1 {offsets = [0, 0], sizes = [45, 16], strides = [1, 1]} : vector<64x16xf32> to vector<45x16xf32>
    %25 = tpu.concatenate %23, %24 in 0 : vector<19x16xf32>, vector<45x16xf32> -> vector<64x16xf32>
    %c0_13 = arith.constant 0 : index
    %c2 = arith.constant 2 : index
    %26 = vector.load %arg2[%c0_13, %c2] : memref<64x27xf32, #tpu.memory_space<vmem>>, vector<64x1xf32>
    %27 = vector.broadcast %26 : vector<64x1xf32> to vector<64x16xf32>
    %28 = arith.mulf %25, %27 : vector<64x16xf32>
    %c2_14 = arith.constant 2 : index
    %c0_15 = arith.constant 0 : index
    %c0_16 = arith.constant 0 : index
    %29 = vector.load %arg3[%c2_14, %c0_15, %c0_16] : memref<27x16x8xf32, #tpu.memory_space<vmem>>, vector<1x16x8xf32>
    %30 = vector.shape_cast %29 : vector<1x16x8xf32> to vector<16x8xf32>
    %cst_17 = arith.constant dense<0.000000e+00> : vector<64x8xf32>
    %31 = tpu.matmul %28, %30, %cst_17 {dimension_numbers = #tpu.dot_dimension_numbers<[1], [0], [0], [1], [0, 0, 1, 1], [], []>} : vector<64x16xf32>, vector<16x8xf32>, vector<64x8xf32> -> vector<64x8xf32>
    %32 = arith.addf %22, %31 : vector<64x8xf32>
    %33 = vector.extract_strided_slice %1 {offsets = [47, 0], sizes = [17, 16], strides = [1, 1]} : vector<64x16xf32> to vector<17x16xf32>
    %34 = vector.extract_strided_slice %1 {offsets = [0, 0], sizes = [47, 16], strides = [1, 1]} : vector<64x16xf32> to vector<47x16xf32>
    %35 = tpu.concatenate %33, %34 in 0 : vector<17x16xf32>, vector<47x16xf32> -> vector<64x16xf32>
    %c0_18 = arith.constant 0 : index
    %c3 = arith.constant 3 : index
    %36 = vector.load %arg2[%c0_18, %c3] : memref<64x27xf32, #tpu.memory_space<vmem>>, vector<64x1xf32>
    %37 = vector.broadcast %36 : vector<64x1xf32> to vector<64x16xf32>
    %38 = arith.mulf %35, %37 : vector<64x16xf32>
    %c3_19 = arith.constant 3 : index
    %c0_20 = arith.constant 0 : index
    %c0_21 = arith.constant 0 : index
    %39 = vector.load %arg3[%c3_19, %c0_20, %c0_21] : memref<27x16x8xf32, #tpu.memory_space<vmem>>, vector<1x16x8xf32>
    %40 = vector.shape_cast %39 : vector<1x16x8xf32> to vector<16x8xf32>
    %cst_22 = arith.constant dense<0.000000e+00> : vector<64x8xf32>
    %41 = tpu.matmul %38, %40, %cst_22 {dimension_numbers = #tpu.dot_dimension_numbers<[1], [0], [0], [1], [0, 0, 1, 1], [], []>} : vector<64x16xf32>, vector<16x8xf32>, vector<64x8xf32> -> vector<64x8xf32>
    %42 = arith.addf %32, %41 : vector<64x8xf32>
    %43 = vector.extract_strided_slice %1 {offsets = [48, 0], sizes = [16, 16], strides = [1, 1]} : vector<64x16xf32> to vector<16x16xf32>
    %44 = vector.extract_strided_slice %1 {offsets = [0, 0], sizes = [48, 16], strides = [1, 1]} : vector<64x16xf32> to vector<48x16xf32>
    %45 = tpu.concatenate %43, %44 in 0 : vector<16x16xf32>, vector<48x16xf32> -> vector<64x16xf32>
    %c0_23 = arith.constant 0 : index
    %c4 = arith.constant 4 : index
    %46 = vector.load %arg2[%c0_23, %c4] : memref<64x27xf32, #tpu.memory_space<vmem>>, vector<64x1xf32>
    %47 = vector.broadcast %46 : vector<64x1xf32> to vector<64x16xf32>
    %48 = arith.mulf %45, %47 : vector<64x16xf32>
    %c4_24 = arith.constant 4 : index
    %c0_25 = arith.constant 0 : index
    %c0_26 = arith.constant 0 : index
    %49 = vector.load %arg3[%c4_24, %c0_25, %c0_26] : memref<27x16x8xf32, #tpu.memory_space<vmem>>, vector<1x16x8xf32>
    %50 = vector.shape_cast %49 : vector<1x16x8xf32> to vector<16x8xf32>
    %cst_27 = arith.constant dense<0.000000e+00> : vector<64x8xf32>
    %51 = tpu.matmul %48, %50, %cst_27 {dimension_numbers = #tpu.dot_dimension_numbers<[1], [0], [0], [1], [0, 0, 1, 1], [], []>} : vector<64x16xf32>, vector<16x8xf32>, vector<64x8xf32> -> vector<64x8xf32>
    %52 = arith.addf %42, %51 : vector<64x8xf32>
    %53 = vector.extract_strided_slice %1 {offsets = [49, 0], sizes = [15, 16], strides = [1, 1]} : vector<64x16xf32> to vector<15x16xf32>
    %54 = vector.extract_strided_slice %1 {offsets = [0, 0], sizes = [49, 16], strides = [1, 1]} : vector<64x16xf32> to vector<49x16xf32>
    %55 = tpu.concatenate %53, %54 in 0 : vector<15x16xf32>, vector<49x16xf32> -> vector<64x16xf32>
    %c0_28 = arith.constant 0 : index
    %c5 = arith.constant 5 : index
    %56 = vector.load %arg2[%c0_28, %c5] : memref<64x27xf32, #tpu.memory_space<vmem>>, vector<64x1xf32>
    %57 = vector.broadcast %56 : vector<64x1xf32> to vector<64x16xf32>
    %58 = arith.mulf %55, %57 : vector<64x16xf32>
    %c5_29 = arith.constant 5 : index
    %c0_30 = arith.constant 0 : index
    %c0_31 = arith.constant 0 : index
    %59 = vector.load %arg3[%c5_29, %c0_30, %c0_31] : memref<27x16x8xf32, #tpu.memory_space<vmem>>, vector<1x16x8xf32>
    %60 = vector.shape_cast %59 : vector<1x16x8xf32> to vector<16x8xf32>
    %cst_32 = arith.constant dense<0.000000e+00> : vector<64x8xf32>
    %61 = tpu.matmul %58, %60, %cst_32 {dimension_numbers = #tpu.dot_dimension_numbers<[1], [0], [0], [1], [0, 0, 1, 1], [], []>} : vector<64x16xf32>, vector<16x8xf32>, vector<64x8xf32> -> vector<64x8xf32>
    %62 = arith.addf %52, %61 : vector<64x8xf32>
    %63 = vector.extract_strided_slice %1 {offsets = [51, 0], sizes = [13, 16], strides = [1, 1]} : vector<64x16xf32> to vector<13x16xf32>
    %64 = vector.extract_strided_slice %1 {offsets = [0, 0], sizes = [51, 16], strides = [1, 1]} : vector<64x16xf32> to vector<51x16xf32>
    %65 = tpu.concatenate %63, %64 in 0 : vector<13x16xf32>, vector<51x16xf32> -> vector<64x16xf32>
    %c0_33 = arith.constant 0 : index
    %c6 = arith.constant 6 : index
    %66 = vector.load %arg2[%c0_33, %c6] : memref<64x27xf32, #tpu.memory_space<vmem>>, vector<64x1xf32>
    %67 = vector.broadcast %66 : vector<64x1xf32> to vector<64x16xf32>
    %68 = arith.mulf %65, %67 : vector<64x16xf32>
    %c6_34 = arith.constant 6 : index
    %c0_35 = arith.constant 0 : index
    %c0_36 = arith.constant 0 : index
    %69 = vector.load %arg3[%c6_34, %c0_35, %c0_36] : memref<27x16x8xf32, #tpu.memory_space<vmem>>, vector<1x16x8xf32>
    %70 = vector.shape_cast %69 : vector<1x16x8xf32> to vector<16x8xf32>
    %cst_37 = arith.constant dense<0.000000e+00> : vector<64x8xf32>
    %71 = tpu.matmul %68, %70, %cst_37 {dimension_numbers = #tpu.dot_dimension_numbers<[1], [0], [0], [1], [0, 0, 1, 1], [], []>} : vector<64x16xf32>, vector<16x8xf32>, vector<64x8xf32> -> vector<64x8xf32>
    %72 = arith.addf %62, %71 : vector<64x8xf32>
    %73 = vector.extract_strided_slice %1 {offsets = [52, 0], sizes = [12, 16], strides = [1, 1]} : vector<64x16xf32> to vector<12x16xf32>
    %74 = vector.extract_strided_slice %1 {offsets = [0, 0], sizes = [52, 16], strides = [1, 1]} : vector<64x16xf32> to vector<52x16xf32>
    %75 = tpu.concatenate %73, %74 in 0 : vector<12x16xf32>, vector<52x16xf32> -> vector<64x16xf32>
    %c0_38 = arith.constant 0 : index
    %c7 = arith.constant 7 : index
    %76 = vector.load %arg2[%c0_38, %c7] : memref<64x27xf32, #tpu.memory_space<vmem>>, vector<64x1xf32>
    %77 = vector.broadcast %76 : vector<64x1xf32> to vector<64x16xf32>
    %78 = arith.mulf %75, %77 : vector<64x16xf32>
    %c7_39 = arith.constant 7 : index
    %c0_40 = arith.constant 0 : index
    %c0_41 = arith.constant 0 : index
    %79 = vector.load %arg3[%c7_39, %c0_40, %c0_41] : memref<27x16x8xf32, #tpu.memory_space<vmem>>, vector<1x16x8xf32>
    %80 = vector.shape_cast %79 : vector<1x16x8xf32> to vector<16x8xf32>
    %cst_42 = arith.constant dense<0.000000e+00> : vector<64x8xf32>
    %81 = tpu.matmul %78, %80, %cst_42 {dimension_numbers = #tpu.dot_dimension_numbers<[1], [0], [0], [1], [0, 0, 1, 1], [], []>} : vector<64x16xf32>, vector<16x8xf32>, vector<64x8xf32> -> vector<64x8xf32>
    %82 = arith.addf %72, %81 : vector<64x8xf32>
    %83 = vector.extract_strided_slice %1 {offsets = [53, 0], sizes = [11, 16], strides = [1, 1]} : vector<64x16xf32> to vector<11x16xf32>
    %84 = vector.extract_strided_slice %1 {offsets = [0, 0], sizes = [53, 16], strides = [1, 1]} : vector<64x16xf32> to vector<53x16xf32>
    %85 = tpu.concatenate %83, %84 in 0 : vector<11x16xf32>, vector<53x16xf32> -> vector<64x16xf32>
    %c0_43 = arith.constant 0 : index
    %c8 = arith.constant 8 : index
    %86 = vector.load %arg2[%c0_43, %c8] : memref<64x27xf32, #tpu.memory_space<vmem>>, vector<64x1xf32>
    %87 = vector.broadcast %86 : vector<64x1xf32> to vector<64x16xf32>
    %88 = arith.mulf %85, %87 : vector<64x16xf32>
    %c8_44 = arith.constant 8 : index
    %c0_45 = arith.constant 0 : index
    %c0_46 = arith.constant 0 : index
    %89 = vector.load %arg3[%c8_44, %c0_45, %c0_46] : memref<27x16x8xf32, #tpu.memory_space<vmem>>, vector<1x16x8xf32>
    %90 = vector.shape_cast %89 : vector<1x16x8xf32> to vector<16x8xf32>
    %cst_47 = arith.constant dense<0.000000e+00> : vector<64x8xf32>
    %91 = tpu.matmul %88, %90, %cst_47 {dimension_numbers = #tpu.dot_dimension_numbers<[1], [0], [0], [1], [0, 0, 1, 1], [], []>} : vector<64x16xf32>, vector<16x8xf32>, vector<64x8xf32> -> vector<64x8xf32>
    %92 = arith.addf %82, %91 : vector<64x8xf32>
    %93 = vector.extract_strided_slice %1 {offsets = [59, 0], sizes = [5, 16], strides = [1, 1]} : vector<64x16xf32> to vector<5x16xf32>
    %94 = vector.extract_strided_slice %1 {offsets = [0, 0], sizes = [59, 16], strides = [1, 1]} : vector<64x16xf32> to vector<59x16xf32>
    %95 = tpu.concatenate %93, %94 in 0 : vector<5x16xf32>, vector<59x16xf32> -> vector<64x16xf32>
    %c0_48 = arith.constant 0 : index
    %c9 = arith.constant 9 : index
    %96 = vector.load %arg2[%c0_48, %c9] : memref<64x27xf32, #tpu.memory_space<vmem>>, vector<64x1xf32>
    %97 = vector.broadcast %96 : vector<64x1xf32> to vector<64x16xf32>
    %98 = arith.mulf %95, %97 : vector<64x16xf32>
    %c9_49 = arith.constant 9 : index
    %c0_50 = arith.constant 0 : index
    %c0_51 = arith.constant 0 : index
    %99 = vector.load %arg3[%c9_49, %c0_50, %c0_51] : memref<27x16x8xf32, #tpu.memory_space<vmem>>, vector<1x16x8xf32>
    %100 = vector.shape_cast %99 : vector<1x16x8xf32> to vector<16x8xf32>
    %cst_52 = arith.constant dense<0.000000e+00> : vector<64x8xf32>
    %101 = tpu.matmul %98, %100, %cst_52 {dimension_numbers = #tpu.dot_dimension_numbers<[1], [0], [0], [1], [0, 0, 1, 1], [], []>} : vector<64x16xf32>, vector<16x8xf32>, vector<64x8xf32> -> vector<64x8xf32>
    %102 = arith.addf %92, %101 : vector<64x8xf32>
    %103 = vector.extract_strided_slice %1 {offsets = [60, 0], sizes = [4, 16], strides = [1, 1]} : vector<64x16xf32> to vector<4x16xf32>
    %104 = vector.extract_strided_slice %1 {offsets = [0, 0], sizes = [60, 16], strides = [1, 1]} : vector<64x16xf32> to vector<60x16xf32>
    %105 = tpu.concatenate %103, %104 in 0 : vector<4x16xf32>, vector<60x16xf32> -> vector<64x16xf32>
    %c0_53 = arith.constant 0 : index
    %c10 = arith.constant 10 : index
    %106 = vector.load %arg2[%c0_53, %c10] : memref<64x27xf32, #tpu.memory_space<vmem>>, vector<64x1xf32>
    %107 = vector.broadcast %106 : vector<64x1xf32> to vector<64x16xf32>
    %108 = arith.mulf %105, %107 : vector<64x16xf32>
    %c10_54 = arith.constant 10 : index
    %c0_55 = arith.constant 0 : index
    %c0_56 = arith.constant 0 : index
    %109 = vector.load %arg3[%c10_54, %c0_55, %c0_56] : memref<27x16x8xf32, #tpu.memory_space<vmem>>, vector<1x16x8xf32>
    %110 = vector.shape_cast %109 : vector<1x16x8xf32> to vector<16x8xf32>
    %cst_57 = arith.constant dense<0.000000e+00> : vector<64x8xf32>
    %111 = tpu.matmul %108, %110, %cst_57 {dimension_numbers = #tpu.dot_dimension_numbers<[1], [0], [0], [1], [0, 0, 1, 1], [], []>} : vector<64x16xf32>, vector<16x8xf32>, vector<64x8xf32> -> vector<64x8xf32>
    %112 = arith.addf %102, %111 : vector<64x8xf32>
    %113 = vector.extract_strided_slice %1 {offsets = [61, 0], sizes = [3, 16], strides = [1, 1]} : vector<64x16xf32> to vector<3x16xf32>
    %114 = vector.extract_strided_slice %1 {offsets = [0, 0], sizes = [61, 16], strides = [1, 1]} : vector<64x16xf32> to vector<61x16xf32>
    %115 = tpu.concatenate %113, %114 in 0 : vector<3x16xf32>, vector<61x16xf32> -> vector<64x16xf32>
    %c0_58 = arith.constant 0 : index
    %c11 = arith.constant 11 : index
    %116 = vector.load %arg2[%c0_58, %c11] : memref<64x27xf32, #tpu.memory_space<vmem>>, vector<64x1xf32>
    %117 = vector.broadcast %116 : vector<64x1xf32> to vector<64x16xf32>
    %118 = arith.mulf %115, %117 : vector<64x16xf32>
    %c11_59 = arith.constant 11 : index
    %c0_60 = arith.constant 0 : index
    %c0_61 = arith.constant 0 : index
    %119 = vector.load %arg3[%c11_59, %c0_60, %c0_61] : memref<27x16x8xf32, #tpu.memory_space<vmem>>, vector<1x16x8xf32>
    %120 = vector.shape_cast %119 : vector<1x16x8xf32> to vector<16x8xf32>
    %cst_62 = arith.constant dense<0.000000e+00> : vector<64x8xf32>
    %121 = tpu.matmul %118, %120, %cst_62 {dimension_numbers = #tpu.dot_dimension_numbers<[1], [0], [0], [1], [0, 0, 1, 1], [], []>} : vector<64x16xf32>, vector<16x8xf32>, vector<64x8xf32> -> vector<64x8xf32>
    %122 = arith.addf %112, %121 : vector<64x8xf32>
    %123 = vector.extract_strided_slice %1 {offsets = [63, 0], sizes = [1, 16], strides = [1, 1]} : vector<64x16xf32> to vector<1x16xf32>
    %124 = vector.extract_strided_slice %1 {offsets = [0, 0], sizes = [63, 16], strides = [1, 1]} : vector<64x16xf32> to vector<63x16xf32>
    %125 = tpu.concatenate %123, %124 in 0 : vector<1x16xf32>, vector<63x16xf32> -> vector<64x16xf32>
    %c0_63 = arith.constant 0 : index
    %c12 = arith.constant 12 : index
    %126 = vector.load %arg2[%c0_63, %c12] : memref<64x27xf32, #tpu.memory_space<vmem>>, vector<64x1xf32>
    %127 = vector.broadcast %126 : vector<64x1xf32> to vector<64x16xf32>
    %128 = arith.mulf %125, %127 : vector<64x16xf32>
    %c12_64 = arith.constant 12 : index
    %c0_65 = arith.constant 0 : index
    %c0_66 = arith.constant 0 : index
    %129 = vector.load %arg3[%c12_64, %c0_65, %c0_66] : memref<27x16x8xf32, #tpu.memory_space<vmem>>, vector<1x16x8xf32>
    %130 = vector.shape_cast %129 : vector<1x16x8xf32> to vector<16x8xf32>
    %cst_67 = arith.constant dense<0.000000e+00> : vector<64x8xf32>
    %131 = tpu.matmul %128, %130, %cst_67 {dimension_numbers = #tpu.dot_dimension_numbers<[1], [0], [0], [1], [0, 0, 1, 1], [], []>} : vector<64x16xf32>, vector<16x8xf32>, vector<64x8xf32> -> vector<64x8xf32>
    %132 = arith.addf %122, %131 : vector<64x8xf32>
    %c0_68 = arith.constant 0 : index
    %c13 = arith.constant 13 : index
    %133 = vector.load %arg2[%c0_68, %c13] : memref<64x27xf32, #tpu.memory_space<vmem>>, vector<64x1xf32>
    %134 = vector.broadcast %133 : vector<64x1xf32> to vector<64x16xf32>
    %135 = arith.mulf %1, %134 : vector<64x16xf32>
    %c13_69 = arith.constant 13 : index
    %c0_70 = arith.constant 0 : index
    %c0_71 = arith.constant 0 : index
    %136 = vector.load %arg3[%c13_69, %c0_70, %c0_71] : memref<27x16x8xf32, #tpu.memory_space<vmem>>, vector<1x16x8xf32>
    %137 = vector.shape_cast %136 : vector<1x16x8xf32> to vector<16x8xf32>
    %cst_72 = arith.constant dense<0.000000e+00> : vector<64x8xf32>
    %138 = tpu.matmul %135, %137, %cst_72 {dimension_numbers = #tpu.dot_dimension_numbers<[1], [0], [0], [1], [0, 0, 1, 1], [], []>} : vector<64x16xf32>, vector<16x8xf32>, vector<64x8xf32> -> vector<64x8xf32>
    %139 = arith.addf %132, %138 : vector<64x8xf32>
    %140 = vector.extract_strided_slice %1 {offsets = [1, 0], sizes = [63, 16], strides = [1, 1]} : vector<64x16xf32> to vector<63x16xf32>
    %141 = vector.extract_strided_slice %1 {offsets = [0, 0], sizes = [1, 16], strides = [1, 1]} : vector<64x16xf32> to vector<1x16xf32>
    %142 = tpu.concatenate %140, %141 in 0 : vector<63x16xf32>, vector<1x16xf32> -> vector<64x16xf32>
    %c0_73 = arith.constant 0 : index
    %c14 = arith.constant 14 : index
    %143 = vector.load %arg2[%c0_73, %c14] : memref<64x27xf32, #tpu.memory_space<vmem>>, vector<64x1xf32>
    %144 = vector.broadcast %143 : vector<64x1xf32> to vector<64x16xf32>
    %145 = arith.mulf %142, %144 : vector<64x16xf32>
    %c14_74 = arith.constant 14 : index
    %c0_75 = arith.constant 0 : index
    %c0_76 = arith.constant 0 : index
    %146 = vector.load %arg3[%c14_74, %c0_75, %c0_76] : memref<27x16x8xf32, #tpu.memory_space<vmem>>, vector<1x16x8xf32>
    %147 = vector.shape_cast %146 : vector<1x16x8xf32> to vector<16x8xf32>
    %cst_77 = arith.constant dense<0.000000e+00> : vector<64x8xf32>
    %148 = tpu.matmul %145, %147, %cst_77 {dimension_numbers = #tpu.dot_dimension_numbers<[1], [0], [0], [1], [0, 0, 1, 1], [], []>} : vector<64x16xf32>, vector<16x8xf32>, vector<64x8xf32> -> vector<64x8xf32>
    %149 = arith.addf %139, %148 : vector<64x8xf32>
    %150 = vector.extract_strided_slice %1 {offsets = [3, 0], sizes = [61, 16], strides = [1, 1]} : vector<64x16xf32> to vector<61x16xf32>
    %151 = vector.extract_strided_slice %1 {offsets = [0, 0], sizes = [3, 16], strides = [1, 1]} : vector<64x16xf32> to vector<3x16xf32>
    %152 = tpu.concatenate %150, %151 in 0 : vector<61x16xf32>, vector<3x16xf32> -> vector<64x16xf32>
    %c0_78 = arith.constant 0 : index
    %c15 = arith.constant 15 : index
    %153 = vector.load %arg2[%c0_78, %c15] : memref<64x27xf32, #tpu.memory_space<vmem>>, vector<64x1xf32>
    %154 = vector.broadcast %153 : vector<64x1xf32> to vector<64x16xf32>
    %155 = arith.mulf %152, %154 : vector<64x16xf32>
    %c15_79 = arith.constant 15 : index
    %c0_80 = arith.constant 0 : index
    %c0_81 = arith.constant 0 : index
    %156 = vector.load %arg3[%c15_79, %c0_80, %c0_81] : memref<27x16x8xf32, #tpu.memory_space<vmem>>, vector<1x16x8xf32>
    %157 = vector.shape_cast %156 : vector<1x16x8xf32> to vector<16x8xf32>
    %cst_82 = arith.constant dense<0.000000e+00> : vector<64x8xf32>
    %158 = tpu.matmul %155, %157, %cst_82 {dimension_numbers = #tpu.dot_dimension_numbers<[1], [0], [0], [1], [0, 0, 1, 1], [], []>} : vector<64x16xf32>, vector<16x8xf32>, vector<64x8xf32> -> vector<64x8xf32>
    %159 = arith.addf %149, %158 : vector<64x8xf32>
    %160 = vector.extract_strided_slice %1 {offsets = [4, 0], sizes = [60, 16], strides = [1, 1]} : vector<64x16xf32> to vector<60x16xf32>
    %161 = vector.extract_strided_slice %1 {offsets = [0, 0], sizes = [4, 16], strides = [1, 1]} : vector<64x16xf32> to vector<4x16xf32>
    %162 = tpu.concatenate %160, %161 in 0 : vector<60x16xf32>, vector<4x16xf32> -> vector<64x16xf32>
    %c0_83 = arith.constant 0 : index
    %c16 = arith.constant 16 : index
    %163 = vector.load %arg2[%c0_83, %c16] : memref<64x27xf32, #tpu.memory_space<vmem>>, vector<64x1xf32>
    %164 = vector.broadcast %163 : vector<64x1xf32> to vector<64x16xf32>
    %165 = arith.mulf %162, %164 : vector<64x16xf32>
    %c16_84 = arith.constant 16 : index
    %c0_85 = arith.constant 0 : index
    %c0_86 = arith.constant 0 : index
    %166 = vector.load %arg3[%c16_84, %c0_85, %c0_86] : memref<27x16x8xf32, #tpu.memory_space<vmem>>, vector<1x16x8xf32>
    %167 = vector.shape_cast %166 : vector<1x16x8xf32> to vector<16x8xf32>
    %cst_87 = arith.constant dense<0.000000e+00> : vector<64x8xf32>
    %168 = tpu.matmul %165, %167, %cst_87 {dimension_numbers = #tpu.dot_dimension_numbers<[1], [0], [0], [1], [0, 0, 1, 1], [], []>} : vector<64x16xf32>, vector<16x8xf32>, vector<64x8xf32> -> vector<64x8xf32>
    %169 = arith.addf %159, %168 : vector<64x8xf32>
    %170 = vector.extract_strided_slice %1 {offsets = [5, 0], sizes = [59, 16], strides = [1, 1]} : vector<64x16xf32> to vector<59x16xf32>
    %171 = vector.extract_strided_slice %1 {offsets = [0, 0], sizes = [5, 16], strides = [1, 1]} : vector<64x16xf32> to vector<5x16xf32>
    %172 = tpu.concatenate %170, %171 in 0 : vector<59x16xf32>, vector<5x16xf32> -> vector<64x16xf32>
    %c0_88 = arith.constant 0 : index
    %c17 = arith.constant 17 : index
    %173 = vector.load %arg2[%c0_88, %c17] : memref<64x27xf32, #tpu.memory_space<vmem>>, vector<64x1xf32>
    %174 = vector.broadcast %173 : vector<64x1xf32> to vector<64x16xf32>
    %175 = arith.mulf %172, %174 : vector<64x16xf32>
    %c17_89 = arith.constant 17 : index
    %c0_90 = arith.constant 0 : index
    %c0_91 = arith.constant 0 : index
    %176 = vector.load %arg3[%c17_89, %c0_90, %c0_91] : memref<27x16x8xf32, #tpu.memory_space<vmem>>, vector<1x16x8xf32>
    %177 = vector.shape_cast %176 : vector<1x16x8xf32> to vector<16x8xf32>
    %cst_92 = arith.constant dense<0.000000e+00> : vector<64x8xf32>
    %178 = tpu.matmul %175, %177, %cst_92 {dimension_numbers = #tpu.dot_dimension_numbers<[1], [0], [0], [1], [0, 0, 1, 1], [], []>} : vector<64x16xf32>, vector<16x8xf32>, vector<64x8xf32> -> vector<64x8xf32>
    %179 = arith.addf %169, %178 : vector<64x8xf32>
    %180 = vector.extract_strided_slice %1 {offsets = [11, 0], sizes = [53, 16], strides = [1, 1]} : vector<64x16xf32> to vector<53x16xf32>
    %181 = vector.extract_strided_slice %1 {offsets = [0, 0], sizes = [11, 16], strides = [1, 1]} : vector<64x16xf32> to vector<11x16xf32>
    %182 = tpu.concatenate %180, %181 in 0 : vector<53x16xf32>, vector<11x16xf32> -> vector<64x16xf32>
    %c0_93 = arith.constant 0 : index
    %c18 = arith.constant 18 : index
    %183 = vector.load %arg2[%c0_93, %c18] : memref<64x27xf32, #tpu.memory_space<vmem>>, vector<64x1xf32>
    %184 = vector.broadcast %183 : vector<64x1xf32> to vector<64x16xf32>
    %185 = arith.mulf %182, %184 : vector<64x16xf32>
    %c18_94 = arith.constant 18 : index
    %c0_95 = arith.constant 0 : index
    %c0_96 = arith.constant 0 : index
    %186 = vector.load %arg3[%c18_94, %c0_95, %c0_96] : memref<27x16x8xf32, #tpu.memory_space<vmem>>, vector<1x16x8xf32>
    %187 = vector.shape_cast %186 : vector<1x16x8xf32> to vector<16x8xf32>
    %cst_97 = arith.constant dense<0.000000e+00> : vector<64x8xf32>
    %188 = tpu.matmul %185, %187, %cst_97 {dimension_numbers = #tpu.dot_dimension_numbers<[1], [0], [0], [1], [0, 0, 1, 1], [], []>} : vector<64x16xf32>, vector<16x8xf32>, vector<64x8xf32> -> vector<64x8xf32>
    %189 = arith.addf %179, %188 : vector<64x8xf32>
    %190 = vector.extract_strided_slice %1 {offsets = [12, 0], sizes = [52, 16], strides = [1, 1]} : vector<64x16xf32> to vector<52x16xf32>
    %191 = vector.extract_strided_slice %1 {offsets = [0, 0], sizes = [12, 16], strides = [1, 1]} : vector<64x16xf32> to vector<12x16xf32>
    %192 = tpu.concatenate %190, %191 in 0 : vector<52x16xf32>, vector<12x16xf32> -> vector<64x16xf32>
    %c0_98 = arith.constant 0 : index
    %c19 = arith.constant 19 : index
    %193 = vector.load %arg2[%c0_98, %c19] : memref<64x27xf32, #tpu.memory_space<vmem>>, vector<64x1xf32>
    %194 = vector.broadcast %193 : vector<64x1xf32> to vector<64x16xf32>
    %195 = arith.mulf %192, %194 : vector<64x16xf32>
    %c19_99 = arith.constant 19 : index
    %c0_100 = arith.constant 0 : index
    %c0_101 = arith.constant 0 : index
    %196 = vector.load %arg3[%c19_99, %c0_100, %c0_101] : memref<27x16x8xf32, #tpu.memory_space<vmem>>, vector<1x16x8xf32>
    %197 = vector.shape_cast %196 : vector<1x16x8xf32> to vector<16x8xf32>
    %cst_102 = arith.constant dense<0.000000e+00> : vector<64x8xf32>
    %198 = tpu.matmul %195, %197, %cst_102 {dimension_numbers = #tpu.dot_dimension_numbers<[1], [0], [0], [1], [0, 0, 1, 1], [], []>} : vector<64x16xf32>, vector<16x8xf32>, vector<64x8xf32> -> vector<64x8xf32>
    %199 = arith.addf %189, %198 : vector<64x8xf32>
    %200 = vector.extract_strided_slice %1 {offsets = [13, 0], sizes = [51, 16], strides = [1, 1]} : vector<64x16xf32> to vector<51x16xf32>
    %201 = vector.extract_strided_slice %1 {offsets = [0, 0], sizes = [13, 16], strides = [1, 1]} : vector<64x16xf32> to vector<13x16xf32>
    %202 = tpu.concatenate %200, %201 in 0 : vector<51x16xf32>, vector<13x16xf32> -> vector<64x16xf32>
    %c0_103 = arith.constant 0 : index
    %c20 = arith.constant 20 : index
    %203 = vector.load %arg2[%c0_103, %c20] : memref<64x27xf32, #tpu.memory_space<vmem>>, vector<64x1xf32>
    %204 = vector.broadcast %203 : vector<64x1xf32> to vector<64x16xf32>
    %205 = arith.mulf %202, %204 : vector<64x16xf32>
    %c20_104 = arith.constant 20 : index
    %c0_105 = arith.constant 0 : index
    %c0_106 = arith.constant 0 : index
    %206 = vector.load %arg3[%c20_104, %c0_105, %c0_106] : memref<27x16x8xf32, #tpu.memory_space<vmem>>, vector<1x16x8xf32>
    %207 = vector.shape_cast %206 : vector<1x16x8xf32> to vector<16x8xf32>
    %cst_107 = arith.constant dense<0.000000e+00> : vector<64x8xf32>
    %208 = tpu.matmul %205, %207, %cst_107 {dimension_numbers = #tpu.dot_dimension_numbers<[1], [0], [0], [1], [0, 0, 1, 1], [], []>} : vector<64x16xf32>, vector<16x8xf32>, vector<64x8xf32> -> vector<64x8xf32>
    %209 = arith.addf %199, %208 : vector<64x8xf32>
    %210 = vector.extract_strided_slice %1 {offsets = [15, 0], sizes = [49, 16], strides = [1, 1]} : vector<64x16xf32> to vector<49x16xf32>
    %211 = vector.extract_strided_slice %1 {offsets = [0, 0], sizes = [15, 16], strides = [1, 1]} : vector<64x16xf32> to vector<15x16xf32>
    %212 = tpu.concatenate %210, %211 in 0 : vector<49x16xf32>, vector<15x16xf32> -> vector<64x16xf32>
    %c0_108 = arith.constant 0 : index
    %c21 = arith.constant 21 : index
    %213 = vector.load %arg2[%c0_108, %c21] : memref<64x27xf32, #tpu.memory_space<vmem>>, vector<64x1xf32>
    %214 = vector.broadcast %213 : vector<64x1xf32> to vector<64x16xf32>
    %215 = arith.mulf %212, %214 : vector<64x16xf32>
    %c21_109 = arith.constant 21 : index
    %c0_110 = arith.constant 0 : index
    %c0_111 = arith.constant 0 : index
    %216 = vector.load %arg3[%c21_109, %c0_110, %c0_111] : memref<27x16x8xf32, #tpu.memory_space<vmem>>, vector<1x16x8xf32>
    %217 = vector.shape_cast %216 : vector<1x16x8xf32> to vector<16x8xf32>
    %cst_112 = arith.constant dense<0.000000e+00> : vector<64x8xf32>
    %218 = tpu.matmul %215, %217, %cst_112 {dimension_numbers = #tpu.dot_dimension_numbers<[1], [0], [0], [1], [0, 0, 1, 1], [], []>} : vector<64x16xf32>, vector<16x8xf32>, vector<64x8xf32> -> vector<64x8xf32>
    %219 = arith.addf %209, %218 : vector<64x8xf32>
    %220 = vector.extract_strided_slice %1 {offsets = [16, 0], sizes = [48, 16], strides = [1, 1]} : vector<64x16xf32> to vector<48x16xf32>
    %221 = vector.extract_strided_slice %1 {offsets = [0, 0], sizes = [16, 16], strides = [1, 1]} : vector<64x16xf32> to vector<16x16xf32>
    %222 = tpu.concatenate %220, %221 in 0 : vector<48x16xf32>, vector<16x16xf32> -> vector<64x16xf32>
    %c0_113 = arith.constant 0 : index
    %c22 = arith.constant 22 : index
    %223 = vector.load %arg2[%c0_113, %c22] : memref<64x27xf32, #tpu.memory_space<vmem>>, vector<64x1xf32>
    %224 = vector.broadcast %223 : vector<64x1xf32> to vector<64x16xf32>
    %225 = arith.mulf %222, %224 : vector<64x16xf32>
    %c22_114 = arith.constant 22 : index
    %c0_115 = arith.constant 0 : index
    %c0_116 = arith.constant 0 : index
    %226 = vector.load %arg3[%c22_114, %c0_115, %c0_116] : memref<27x16x8xf32, #tpu.memory_space<vmem>>, vector<1x16x8xf32>
    %227 = vector.shape_cast %226 : vector<1x16x8xf32> to vector<16x8xf32>
    %cst_117 = arith.constant dense<0.000000e+00> : vector<64x8xf32>
    %228 = tpu.matmul %225, %227, %cst_117 {dimension_numbers = #tpu.dot_dimension_numbers<[1], [0], [0], [1], [0, 0, 1, 1], [], []>} : vector<64x16xf32>, vector<16x8xf32>, vector<64x8xf32> -> vector<64x8xf32>
    %229 = arith.addf %219, %228 : vector<64x8xf32>
    %230 = vector.extract_strided_slice %1 {offsets = [17, 0], sizes = [47, 16], strides = [1, 1]} : vector<64x16xf32> to vector<47x16xf32>
    %231 = vector.extract_strided_slice %1 {offsets = [0, 0], sizes = [17, 16], strides = [1, 1]} : vector<64x16xf32> to vector<17x16xf32>
    %232 = tpu.concatenate %230, %231 in 0 : vector<47x16xf32>, vector<17x16xf32> -> vector<64x16xf32>
    %c0_118 = arith.constant 0 : index
    %c23 = arith.constant 23 : index
    %233 = vector.load %arg2[%c0_118, %c23] : memref<64x27xf32, #tpu.memory_space<vmem>>, vector<64x1xf32>
    %234 = vector.broadcast %233 : vector<64x1xf32> to vector<64x16xf32>
    %235 = arith.mulf %232, %234 : vector<64x16xf32>
    %c23_119 = arith.constant 23 : index
    %c0_120 = arith.constant 0 : index
    %c0_121 = arith.constant 0 : index
    %236 = vector.load %arg3[%c23_119, %c0_120, %c0_121] : memref<27x16x8xf32, #tpu.memory_space<vmem>>, vector<1x16x8xf32>
    %237 = vector.shape_cast %236 : vector<1x16x8xf32> to vector<16x8xf32>
    %cst_122 = arith.constant dense<0.000000e+00> : vector<64x8xf32>
    %238 = tpu.matmul %235, %237, %cst_122 {dimension_numbers = #tpu.dot_dimension_numbers<[1], [0], [0], [1], [0, 0, 1, 1], [], []>} : vector<64x16xf32>, vector<16x8xf32>, vector<64x8xf32> -> vector<64x8xf32>
    %239 = arith.addf %229, %238 : vector<64x8xf32>
    %240 = vector.extract_strided_slice %1 {offsets = [19, 0], sizes = [45, 16], strides = [1, 1]} : vector<64x16xf32> to vector<45x16xf32>
    %241 = vector.extract_strided_slice %1 {offsets = [0, 0], sizes = [19, 16], strides = [1, 1]} : vector<64x16xf32> to vector<19x16xf32>
    %242 = tpu.concatenate %240, %241 in 0 : vector<45x16xf32>, vector<19x16xf32> -> vector<64x16xf32>
    %c0_123 = arith.constant 0 : index
    %c24 = arith.constant 24 : index
    %243 = vector.load %arg2[%c0_123, %c24] : memref<64x27xf32, #tpu.memory_space<vmem>>, vector<64x1xf32>
    %244 = vector.broadcast %243 : vector<64x1xf32> to vector<64x16xf32>
    %245 = arith.mulf %242, %244 : vector<64x16xf32>
    %c24_124 = arith.constant 24 : index
    %c0_125 = arith.constant 0 : index
    %c0_126 = arith.constant 0 : index
    %246 = vector.load %arg3[%c24_124, %c0_125, %c0_126] : memref<27x16x8xf32, #tpu.memory_space<vmem>>, vector<1x16x8xf32>
    %247 = vector.shape_cast %246 : vector<1x16x8xf32> to vector<16x8xf32>
    %cst_127 = arith.constant dense<0.000000e+00> : vector<64x8xf32>
    %248 = tpu.matmul %245, %247, %cst_127 {dimension_numbers = #tpu.dot_dimension_numbers<[1], [0], [0], [1], [0, 0, 1, 1], [], []>} : vector<64x16xf32>, vector<16x8xf32>, vector<64x8xf32> -> vector<64x8xf32>
    %249 = arith.addf %239, %248 : vector<64x8xf32>
    %250 = vector.extract_strided_slice %1 {offsets = [20, 0], sizes = [44, 16], strides = [1, 1]} : vector<64x16xf32> to vector<44x16xf32>
    %251 = vector.extract_strided_slice %1 {offsets = [0, 0], sizes = [20, 16], strides = [1, 1]} : vector<64x16xf32> to vector<20x16xf32>
    %252 = tpu.concatenate %250, %251 in 0 : vector<44x16xf32>, vector<20x16xf32> -> vector<64x16xf32>
    %c0_128 = arith.constant 0 : index
    %c25 = arith.constant 25 : index
    %253 = vector.load %arg2[%c0_128, %c25] : memref<64x27xf32, #tpu.memory_space<vmem>>, vector<64x1xf32>
    %254 = vector.broadcast %253 : vector<64x1xf32> to vector<64x16xf32>
    %255 = arith.mulf %252, %254 : vector<64x16xf32>
    %c25_129 = arith.constant 25 : index
    %c0_130 = arith.constant 0 : index
    %c0_131 = arith.constant 0 : index
    %256 = vector.load %arg3[%c25_129, %c0_130, %c0_131] : memref<27x16x8xf32, #tpu.memory_space<vmem>>, vector<1x16x8xf32>
    %257 = vector.shape_cast %256 : vector<1x16x8xf32> to vector<16x8xf32>
    %cst_132 = arith.constant dense<0.000000e+00> : vector<64x8xf32>
    %258 = tpu.matmul %255, %257, %cst_132 {dimension_numbers = #tpu.dot_dimension_numbers<[1], [0], [0], [1], [0, 0, 1, 1], [], []>} : vector<64x16xf32>, vector<16x8xf32>, vector<64x8xf32> -> vector<64x8xf32>
    %259 = arith.addf %249, %258 : vector<64x8xf32>
    %260 = vector.extract_strided_slice %1 {offsets = [21, 0], sizes = [43, 16], strides = [1, 1]} : vector<64x16xf32> to vector<43x16xf32>
    %261 = vector.extract_strided_slice %1 {offsets = [0, 0], sizes = [21, 16], strides = [1, 1]} : vector<64x16xf32> to vector<21x16xf32>
    %262 = tpu.concatenate %260, %261 in 0 : vector<43x16xf32>, vector<21x16xf32> -> vector<64x16xf32>
    %c0_133 = arith.constant 0 : index
    %c26 = arith.constant 26 : index
    %263 = vector.load %arg2[%c0_133, %c26] : memref<64x27xf32, #tpu.memory_space<vmem>>, vector<64x1xf32>
    %264 = vector.broadcast %263 : vector<64x1xf32> to vector<64x16xf32>
    %265 = arith.mulf %262, %264 : vector<64x16xf32>
    %c26_134 = arith.constant 26 : index
    %c0_135 = arith.constant 0 : index
    %c0_136 = arith.constant 0 : index
    %266 = vector.load %arg3[%c26_134, %c0_135, %c0_136] : memref<27x16x8xf32, #tpu.memory_space<vmem>>, vector<1x16x8xf32>
    %267 = vector.shape_cast %266 : vector<1x16x8xf32> to vector<16x8xf32>
    %cst_137 = arith.constant dense<0.000000e+00> : vector<64x8xf32>
    %268 = tpu.matmul %265, %267, %cst_137 {dimension_numbers = #tpu.dot_dimension_numbers<[1], [0], [0], [1], [0, 0, 1, 1], [], []>} : vector<64x16xf32>, vector<16x8xf32>, vector<64x8xf32> -> vector<64x8xf32>
    %269 = arith.addf %259, %268 : vector<64x8xf32>
    %c0_138 = arith.constant 0 : index
    %c0_139 = arith.constant 0 : index
    %270 = vector.load %arg4[%c0_138, %c0_139] : memref<1x8xf32, #tpu.memory_space<vmem>>, vector<1x8xf32>
    %271 = vector.broadcast %270 : vector<1x8xf32> to vector<64x8xf32>
    %272 = arith.addf %269, %271 : vector<64x8xf32>
    %cst_140 = arith.constant dense<0.000000e+00> : vector<8xf32>
    %273 = vector.multi_reduction <add>, %272, %cst_140 [0] : vector<64x8xf32> to vector<8xf32>
    %274 = vector.shape_cast %273 : vector<8xf32> to vector<1x8xf32>
    %cst_141 = arith.constant 6.400000e+01 : f32
    %275 = vector.broadcast %cst_141 : f32 to vector<1x8xf32>
    %276 = arith.divf %274, %275 : vector<1x8xf32>
    %277 = vector.broadcast %276 : vector<1x8xf32> to vector<64x8xf32>
    %278 = arith.subf %272, %277 : vector<64x8xf32>
    %279 = arith.mulf %278, %278 : vector<64x8xf32>
    %cst_142 = arith.constant dense<0.000000e+00> : vector<8xf32>
    %280 = vector.multi_reduction <add>, %279, %cst_142 [0] : vector<64x8xf32> to vector<8xf32>
    %281 = vector.shape_cast %280 : vector<8xf32> to vector<1x8xf32>
    %cst_143 = arith.constant 6.400000e+01 : f32
    %282 = vector.broadcast %cst_143 : f32 to vector<1x8xf32>
    %283 = arith.divf %281, %282 : vector<1x8xf32>
    %284 = vector.broadcast %276 : vector<1x8xf32> to vector<64x8xf32>
    %285 = arith.subf %272, %284 : vector<64x8xf32>
    %cst_144 = arith.constant 9.99999974E-6 : f32
    %286 = vector.broadcast %cst_144 : f32 to vector<1x8xf32>
    %287 = arith.addf %283, %286 : vector<1x8xf32>
    %288 = math.rsqrt %287 : vector<1x8xf32>
    %289 = vector.broadcast %288 : vector<1x8xf32> to vector<64x8xf32>
    %290 = arith.mulf %285, %289 : vector<64x8xf32>
    %cst_145 = arith.constant 0.000000e+00 : f32
    %291 = vector.broadcast %cst_145 : f32 to vector<64x8xf32>
    %292 = arith.cmpf oge, %290, %291 : vector<64x8xf32>
    %cst_146 = arith.constant 0.00999999977 : f32
    %293 = vector.broadcast %cst_146 : f32 to vector<64x8xf32>
    %294 = arith.mulf %293, %290 : vector<64x8xf32>
    %295 = arith.select %292, %290, %294 : vector<64x8xi1>, vector<64x8xf32>
    %c0_147 = arith.constant 0 : index
    %c0_148 = arith.constant 0 : index
    %c0_149 = arith.constant 0 : index
    %296 = vector.load %arg5[%c0_147, %c0_148, %c0_149] : memref<1x64x8xf32, #tpu.memory_space<vmem>>, vector<1x64x8xf32>
    %297 = vector.shape_cast %296 : vector<1x64x8xf32> to vector<64x8xf32>
    %298 = vector.shape_cast %295 : vector<64x8xf32> to vector<1x64x8xf32>
    tpu.vector_store %arg5[%c0_147, %c0_148, %c0_149], %298 {strides = array<i32>} : memref<1x64x8xf32, #tpu.memory_space<vmem>>, vector<1x64x8xf32>,
    return
  }
  func.func @transform_0(%arg0: i32) -> (i32, i32, i32) {
    %c0_i32 = arith.constant 0 : i32
    %c0_i32_0 = arith.constant 0 : i32
    %c0_i32_1 = arith.constant 0 : i32
    return %arg0, %c0_i32, %c0_i32_0 : i32, i32, i32
  }
  func.func @transform_1(%arg0: i32) -> (i32, i32) {
    %c0_i32 = arith.constant 0 : i32
    %c0_i32_0 = arith.constant 0 : i32
    %c0_i32_1 = arith.constant 0 : i32
    return %c0_i32, %c0_i32_0 : i32, i32
  }
  func.func @transform_2(%arg0: i32) -> (i32, i32, i32) {
    %c0_i32 = arith.constant 0 : i32
    %c0_i32_0 = arith.constant 0 : i32
    %c0_i32_1 = arith.constant 0 : i32
    %c0_i32_2 = arith.constant 0 : i32
    return %c0_i32, %c0_i32_0, %c0_i32_1 : i32, i32, i32
  }
  func.func @transform_3(%arg0: i32) -> (i32, i32) {
    %c0_i32 = arith.constant 0 : i32
    %c0_i32_0 = arith.constant 0 : i32
    %c0_i32_1 = arith.constant 0 : i32
    return %c0_i32, %c0_i32_0 : i32, i32
  }
  func.func @transform_4(%arg0: i32) -> (i32, i32, i32) {
    %c0_i32 = arith.constant 0 : i32
    %c0_i32_0 = arith.constant 0 : i32
    %c0_i32_1 = arith.constant 0 : i32
    return %arg0, %c0_i32, %c0_i32_0 : i32, i32, i32
  }
}

</mosaic_0001>

<llo_original>
// kernel: tpu_custom_call.1
$region0: #{tpu_custom_call.1}
  #allocation0 [shape = 'u32[]', space=smem, size = 0x4, offset = 0x4, fixed_abs, tag = 'smem constant byte address 0x4 - core index']
  #allocation1 [shape = 'u32[144,128]{1,0:T(1,128)}', space=vmem, size = 0x12000, scoped, tag = 'internal scratch']
  %s0 = inlined_call_operand.vmem [shape: f32[2,64,16], index: 0, kind: input, shape index: {}]
  %s1 = inlined_call_operand.vmem [shape: f32[64,27], index: 1, kind: input, shape index: {}]
  %s2 = inlined_call_operand.vmem [shape: f32[27,16,8], index: 2, kind: input, shape index: {}]
  %s3 = inlined_call_operand.vmem [shape: f32[1,8], index: 3, kind: input, shape index: {}]
  %s4 = inlined_call_operand.vmem [shape: f32[2,64,8], index: 4, kind: output, shape index: {}]
  %s5 = sld [smem:[#allocation0]]
  $region49: #{tpu_custom_call.1} parent=0
    _
  %s7 = ssub.s32 1, %s5
  %s8 = scalar_select 0, %s7, %s5
  loop: start=0, step=1, limit=4
  $region2: #{tpu_custom_call.1} parent=0 // loop_pre_header
    _
  $region3: #{tpu_custom_call.1} parent=0 // loop_header
    %s10 = sphi 0, %s14
    %p11 = scmp.ge.s32.totalorder %s10, 4
    %s20 = sphi 0, %s22
    %s23 = sphi 0, %s20
    %s24 = sphi 0, %s23
    %s40 = sphi 0, %s24
    %s44 = sphi 0, %s44
    %s46 = sphi 0, %s44
    %s47 = sphi 0, %s46
    %s61 = sphi 0, %s47
    %s65 = sphi 0, %s65
    %s67 = sphi 0, %s65
    %s68 = sphi 0, %s67
    %s82 = sphi 0, %s68
    %s86 = sphi 0, %s86
    %s88 = sphi 0, %s86
    %s89 = sphi 0, %s88
    %s103 = sphi 0, %s89
    %s109 = sphi 0, %s111
    %s112 = sphi 0, %s109
    %s113 = sphi 0, %s112
    %s129 = sphi 0, %s113
  $region4: #{tpu_custom_call.1} parent=0 // loop_header_branch
    %13 = sbr.rel (%p11) target = $region8
  $region5: #{tpu_custom_call.1} parent=0 // loop_body
    %s15 = ssub.s32 %s10, 1
    %s16 = ssub.s32 %s10, 2
    %s17 = sadd.s32 %s10, 1
    %s18 = ssub.s32 %s10, %s17
    %p19 = scmp.eq.s32.totalorder %s18, 0
    %s21 = sadd.s32 %s20, 1
    %s22 = scalar_select %p19, %s20, %s21
    %p25 = pneg %p19
    %p26 = scmp.eq.s32.totalorder %s10, 1
    %p27 = por %p25, %p26
    %p28 = scmp.ne.s32.totalorder %s20, %s23
    %p29 = scmp.eq.s32.totalorder %s10, 0
    %p30 = por %p28, %p29
    %p31 = scmp.ne.s32.totalorder %s20, %s23
    %p32 = scmp.eq.s32.totalorder %s15, 1
    %p33 = por %p31, %p32
    %p34 = scmp.ne.s32.totalorder %s23, %s24
    %p35 = scmp.eq.s32.totalorder %s15, 0
    %p36 = por %p34, %p35
    %p37 = scmp.ne.s32.totalorder %s23, %s24
    %p38 = scmp.eq.s32.totalorder %s16, 1
    %p39 = por %p37, %p38
    %p41 = scmp.ne.s32.totalorder %s24, %s40
    %p42 = scmp.eq.s32.totalorder %s16, 0
    %p43 = por %p41, %p42
    %s45 = sadd.s32 %s44, 1
    %p48 = scmp.eq.s32.totalorder %s10, 1
    %p49 = scmp.ne.s32.totalorder %s44, %s46
    %p50 = scmp.eq.s32.totalorder %s10, 0
    %p51 = por %p49, %p50
    %p52 = scmp.ne.s32.totalorder %s44, %s46
    %p53 = scmp.eq.s32.totalorder %s15, 1
    %p54 = por %p52, %p53
    %p55 = scmp.ne.s32.totalorder %s46, %s47
    %p56 = scmp.eq.s32.totalorder %s15, 0
    %p57 = por %p55, %p56
    %p58 = scmp.ne.s32.totalorder %s46, %s47
    %p59 = scmp.eq.s32.totalorder %s16, 1
    %p60 = por %p58, %p59
    %p62 = scmp.ne.s32.totalorder %s47, %s61
    %p63 = scmp.eq.s32.totalorder %s16, 0
    %p64 = por %p62, %p63
    %s66 = sadd.s32 %s65, 1
    %p69 = scmp.eq.s32.totalorder %s10, 1
    %p70 = scmp.ne.s32.totalorder %s65, %s67
    %p71 = scmp.eq.s32.totalorder %s10, 0
    %p72 = por %p70, %p71
    %p73 = scmp.ne.s32.totalorder %s65, %s67
    %p74 = scmp.eq.s32.totalorder %s15, 1
    %p75 = por %p73, %p74
    %p76 = scmp.ne.s32.totalorder %s67, %s68
    %p77 = scmp.eq.s32.totalorder %s15, 0
    %p78 = por %p76, %p77
    %p79 = scmp.ne.s32.totalorder %s67, %s68
    %p80 = scmp.eq.s32.totalorder %s16, 1
    %p81 = por %p79, %p80
    %p83 = scmp.ne.s32.totalorder %s68, %s82
    %p84 = scmp.eq.s32.totalorder %s16, 0
    %p85 = por %p83, %p84
    %s87 = sadd.s32 %s86, 1
    %p90 = scmp.eq.s32.totalorder %s10, 1
    %p91 = scmp.ne.s32.totalorder %s86, %s88
    %p92 = scmp.eq.s32.totalorder %s10, 0
    %p93 = por %p91, %p92
    %p94 = scmp.ne.s32.totalorder %s86, %s88
    %p95 = scmp.eq.s32.totalorder %s15, 1
    %p96 = por %p94, %p95
    %p97 = scmp.ne.s32.totalorder %s88, %s89
    %p98 = scmp.eq.s32.totalorder %s15, 0
    %p99 = por %p97, %p98
    %p100 = scmp.ne.s32.totalorder %s88, %s89
    %p101 = scmp.eq.s32.totalorder %s16, 1
    %p102 = por %p100, %p101
    %p104 = scmp.ne.s32.totalorder %s89, %s103
    %p105 = scmp.eq.s32.totalorder %s16, 0
    %p106 = por %p104, %p105
    %s107 = ssub.s32 %s10, %s17
    %p108 = scmp.eq.s32.totalorder %s107, 0
    %s110 = sadd.s32 %s109, 1
    %s111 = scalar_select %p108, %s109, %s110
    %p114 = pneg %p108
    %p115 = scmp.eq.s32.totalorder %s10, 1
    %p116 = por %p114, %p115
    %p117 = scmp.ne.s32.totalorder %s109, %s112
    %p118 = scmp.eq.s32.totalorder %s10, 0
    %p119 = por %p117, %p118
    %p120 = scmp.ne.s32.totalorder %s109, %s112
    %p121 = scmp.eq.s32.totalorder %s15, 1
    %p122 = por %p120, %p121
    %p123 = scmp.ne.s32.totalorder %s112, %s113
    %p124 = scmp.eq.s32.totalorder %s15, 0
    %p125 = por %p123, %p124
    %p126 = scmp.ne.s32.totalorder %s112, %s113
    %p127 = scmp.eq.s32.totalorder %s16, 1
    %p128 = por %p126, %p127
    %p130 = scmp.ne.s32.totalorder %s113, %s129
    %p131 = scmp.eq.s32.totalorder %s16, 0
    %p132 = por %p130, %p131
    %p133 = scmp.le.s32.totalorder 1, %s10
    %p134 = scmp.lt.s32.totalorder %s10, 3
    %p135 = pnand %p133, %p134
    %p136 = pneg %p135
    // Predicated region
    $region9: #{tpu_custom_call.1} parent=5 // pred_check
      _
    $region10: #{tpu_custom_call.1} parent=5 // pred_check_branch
      %138 = sbr.rel (%p135) target = $region12
    $region11: #{tpu_custom_call.1} parent=5 // pred_region
      %s139 = ssub.s32 %s10, 1
      // Predicated region
      $region13: #{tpu_custom_call.1} parent=11 // pred_check
        %p140 = pneg %p57
      $region14: #{tpu_custom_call.1} parent=11 // pred_check_branch
        %142 = sbr.rel (%p140) target = $region16
      $region15: #{tpu_custom_call.1} parent=11 // pred_region
        _
      $region16: #{tpu_custom_call.1} parent=11 // pred_fallthru
        _
      // Predicated region
      $region17: #{tpu_custom_call.1} parent=11 // pred_check
        %p143 = pneg %p78
      $region18: #{tpu_custom_call.1} parent=11 // pred_check_branch
        %145 = sbr.rel (%p143) target = $region20
      $region19: #{tpu_custom_call.1} parent=11 // pred_region
        _
      $region20: #{tpu_custom_call.1} parent=11 // pred_fallthru
        _
      // Predicated region
      $region21: #{tpu_custom_call.1} parent=11 // pred_check
        %p146 = pneg %p99
      $region22: #{tpu_custom_call.1} parent=11 // pred_check_branch
        %148 = sbr.rel (%p146) target = $region24
      $region23: #{tpu_custom_call.1} parent=11 // pred_region
        _
      $region24: #{tpu_custom_call.1} parent=11 // pred_fallthru
        _
    $region12: #{tpu_custom_call.1} parent=5 // pred_fallthru
      _
    %p149 = scmp.lt.s32.totalorder %s10, 2
    // Predicated region
    $region25: #{tpu_custom_call.1} parent=5 // pred_check
      %p150 = pneg %p149
    $region26: #{tpu_custom_call.1} parent=5 // pred_check_branch
      %152 = sbr.rel (%p150) target = $region28
    $region27: #{tpu_custom_call.1} parent=5 // pred_region
      // Predicated region
      $region29: #{tpu_custom_call.1} parent=27 // pred_check
        %p153 = pneg %p30
      $region30: #{tpu_custom_call.1} parent=27 // pred_check_branch
        %155 = sbr.rel (%p153) target = $region32
      $region31: #{tpu_custom_call.1} parent=27 // pred_region
        %p156 = scmp.lt.s32.totalorder %s10, 1
        %s157 = scalar_select %p156, %s10, 1
        %s158 = smul.addr %s157, 8
        %s159 = smul.addr %s158, 8
        %s160 = scalar_lea.vmem %s0, %s159
      $region32: #{tpu_custom_call.1} parent=27 // pred_fallthru
        _
    $region28: #{tpu_custom_call.1} parent=5 // pred_fallthru
      _
    %p161 = scmp.le.s32.totalorder 1, %s10
    %p162 = scmp.lt.s32.totalorder %s10, 3
    %p163 = pnand %p161, %p162
    %p164 = pneg %p163
    // Predicated region
    $region33: #{tpu_custom_call.1} parent=5 // pred_check
      _
    $region34: #{tpu_custom_call.1} parent=5 // pred_check_branch
      %166 = sbr.rel (%p163) target = $region36
    $region35: #{tpu_custom_call.1} parent=5 // pred_region
      %s167 = ssub.s32 %s10, 1
      %p168 = scmp.lt.s32.totalorder %s15, 1
      %s169 = scalar_select %p168, %s15, 1
      %s170 = smul.addr %s169, 8
      %s171 = smul.addr %s170, 8
      %s172 = scalar_lea.vmem %s0, %s171
      %p173 = pneg %p36
      %p174 = pneg %p33
      %p175 = pneg %p57
      %p176 = pneg %p54
      %p177 = pneg %p78
      %p178 = pneg %p75
      %p179 = pneg %p99
      %p180 = pneg %p96
      %p181 = pneg %p125
      %p182 = pneg %p122
      %p183 = scmp.lt.s32.totalorder %s15, 1
      %s184 = scalar_select %p183, %s15, 1
      %s185 = smul.addr %s184, 8
      %s186 = smul.addr %s185, 8
      %s187 = scalar_lea.vmem %s4, %s186
      %p188 = scmp.lt.s32.totalorder %s15, 1
      %s189 = scalar_select %p188, %s15, 1
      %s190 = smul.addr %s189, 8
      %s191 = smul.addr %s190, 8
      %s192 = scalar_lea.vmem %s0, %s191
      %p193 = scmp.lt.s32.totalorder %s15, 1
      %s194 = scalar_select %p193, %s15, 1
      %s195 = smul.addr %s194, 8
      %s196 = smul.addr %s195, 8
      %s197 = scalar_lea.vmem %s4, %s196
      %v198 = vld [vmem:[%s192] sm:$0xff]
      %v199 = vld [vmem:[%s192 + $0x8] sm:$0xff]
      %v200 = vld [vmem:[%s192 + $0x10] sm:$0xff]
      %v201 = vld [vmem:[%s192 + $0x18] sm:$0xff]
      %v202 = vld [vmem:[%s192 + $0x20] sm:$0xff]
      %v203 = vld [vmem:[%s192 + $0x28] sm:$0xff]
      %v204 = vld [vmem:[%s192 + $0x30] sm:$0xff]
      %v205 = vld [vmem:[%s192 + $0x38] sm:$0xff]
      %vm209 = vcmask 1044480
      %v210 = vrot.slane %v203, 3
      %v211 = vrot.slane %v204, 3
      %v212 = vsel %vm209, %v210, %v211
      %v213 = vrot.slane %v205, 3
      %v214 = vsel %vm209, %v211, %v213
      %v223 = vrot.slane %v198, 3
      %v224 = vrot.slane %v199, 3
      %v225 = vsel %vm209, %v223, %v224
      %v226 = vrot.slane %v200, 3
      %v227 = vsel %vm209, %v224, %v226
      %v228 = vrot.slane %v201, 3
      %v229 = vsel %vm209, %v226, %v228
      %v230 = vrot.slane %v202, 3
      %v231 = vsel %vm209, %v228, %v230
      %v232 = vsel %vm209, %v230, %v210
      %v239 = vsel %vm209, %v213, %v223
      %v240 = vld [vmem:[%s1] sm:$0xff]
      %v241 = vld [vmem:[%s1 + $0x8] sm:$0xff]
      %v242 = vld [vmem:[%s1 + $0x10] sm:$0xff]
      %v243 = vld [vmem:[%s1 + $0x18] sm:$0xff]
      %v244 = vld [vmem:[%s1 + $0x20] sm:$0xff]
      %v245 = vld [vmem:[%s1 + $0x28] sm:$0xff]
      %v246 = vld [vmem:[%s1 + $0x30] sm:$0xff]
      %v247 = vld [vmem:[%s1 + $0x38] sm:$0xff]
      %249 = vset.pattern.permute.xlu0 0
      %250 = vperm.xlu0 %249, %v240
      %v251 = vpop.permute.xlu0 %250
      %254 = vset.pattern.permute.xlu0 0
      %255 = vperm.xlu0 %254, %v241
      %v256 = vpop.permute.xlu0 %255
      %259 = vset.pattern.permute.xlu0 0
      %260 = vperm.xlu0 %259, %v242
      %v261 = vpop.permute.xlu0 %260
      %264 = vset.pattern.permute.xlu0 0
      %265 = vperm.xlu0 %264, %v243
      %v266 = vpop.permute.xlu0 %265
      %269 = vset.pattern.permute.xlu0 0
      %270 = vperm.xlu0 %269, %v244
      %v271 = vpop.permute.xlu0 %270
      %274 = vset.pattern.permute.xlu0 0
      %275 = vperm.xlu0 %274, %v245
      %v276 = vpop.permute.xlu0 %275
      %279 = vset.pattern.permute.xlu0 0
      %280 = vperm.xlu0 %279, %v246
      %v281 = vpop.permute.xlu0 %280
      %284 = vset.pattern.permute.xlu0 0
      %285 = vperm.xlu0 %284, %v247
      %v286 = vpop.permute.xlu0 %285
      %v288 = vmul.f32 %v212, %v251
      %v289 = vmul.f32 %v214, %v256
      %v290 = vmul.f32 %v239, %v261
      %v291 = vmul.f32 %v225, %v266
      %v292 = vmul.f32 %v227, %v271
      %v293 = vmul.f32 %v229, %v276
      %v294 = vmul.f32 %v231, %v281
      %v295 = vmul.f32 %v232, %v286
      %v296 = vld [vmem:[%s2] sm:$0xff]
      %v297 = vld [vmem:[%s2 + $0x8] sm:$0xff]
      %vm298 = vcmask 1043456
      %v299 = vrot.slane %v203, 4
      %v300 = vrot.slane %v204, 4
      %v301 = vsel %vm298, %v299, %v300
      %v302 = vrot.slane %v205, 4
      %v303 = vsel %vm298, %v300, %v302
      %v307 = vrot.slane %v198, 4
      %v308 = vrot.slane %v199, 4
      %v309 = vsel %vm298, %v307, %v308
      %v310 = vrot.slane %v200, 4
      %v311 = vsel %vm298, %v308, %v310
      %v312 = vrot.slane %v201, 4
      %v313 = vsel %vm298, %v310, %v312
      %v314 = vrot.slane %v202, 4
      %v315 = vsel %vm298, %v312, %v314
      %v316 = vsel %vm298, %v314, %v299
      %v323 = vsel %vm298, %v302, %v307
      %324 = vset.pattern.permute.xlu0 1
      %325 = vperm.xlu0 %324, %v240
      %v326 = vpop.permute.xlu0 %325
      %328 = vset.pattern.permute.xlu0 1
      %329 = vperm.xlu0 %328, %v241
      %v330 = vpop.permute.xlu0 %329
      %332 = vset.pattern.permute.xlu0 1
      %333 = vperm.xlu0 %332, %v242
      %v334 = vpop.permute.xlu0 %333
      %336 = vset.pattern.permute.xlu0 1
      %337 = vperm.xlu0 %336, %v243
      %v338 = vpop.permute.xlu0 %337
      %340 = vset.pattern.permute.xlu0 1
      %341 = vperm.xlu0 %340, %v244
      %v342 = vpop.permute.xlu0 %341
      %344 = vset.pattern.permute.xlu0 1
      %345 = vperm.xlu0 %344, %v245
      %v346 = vpop.permute.xlu0 %345
      %348 = vset.pattern.permute.xlu0 1
      %349 = vperm.xlu0 %348, %v246
      %v350 = vpop.permute.xlu0 %349
      %352 = vset.pattern.permute.xlu0 1
      %353 = vperm.xlu0 %352, %v247
      %v354 = vpop.permute.xlu0 %353
      %v356 = vmul.f32 %v301, %v326
      %v357 = vmul.f32 %v303, %v330
      %v358 = vmul.f32 %v323, %v334
      %v359 = vmul.f32 %v309, %v338
      %v360 = vmul.f32 %v311, %v342
      %v361 = vmul.f32 %v313, %v346
      %v362 = vmul.f32 %v315, %v350
      %v363 = vmul.f32 %v316, %v354
      %s364 = scalar_lea.vmem %s2, 16
      %v365 = vld [vmem:[%s364] sm:$0xff]
      %v366 = vld [vmem:[%s364 + $0x8] sm:$0xff]
      %vm367 = vcmask 130048
      %v369 = vsel %vm367, %v356, 0
      %v372 = vsel %vm367, %v357, 0
      %v375 = vsel %vm367, %v358, 0
      %v378 = vsel %vm367, %v359, 0
      %v381 = vsel %vm367, %v360, 0
      %v384 = vsel %vm367, %v361, 0
      %v387 = vsel %vm367, %v362, 0
      %v390 = vsel %vm367, %v363, 0
      %392 = vmatprep.subr.mxu0 0.0
      %393 = vmatpush1.msra.mxu0 0.0
      %394 = vmatprep.subr.mxu0 0.0
      %395 = vmatpush1.msra.mxu0 0.0
      %396 = vmatprep.subr.mxu0 0.0
      %397 = vmatpush1.msra.mxu0 0.0
      %398 = vmatprep.subr.mxu0 0.0
      %399 = vmatpush1.msra.mxu0 0.0
      %400 = vmatprep.subr.mxu0 0.0
      %401 = vmatpush1.msra.mxu0 0.0
      %402 = vmatprep.subr.mxu0 0.0
      %403 = vmatpush1.msra.mxu0 0.0
      %404 = vmatprep.subr.mxu0 0.0
      %405 = vmatpush1.msra.mxu0 0.0
      %406 = vmatprep.subr.mxu0 0.0
      %407 = vmatpush1.msra.mxu0 0.0
      %408 = vmatprep.subr.mxu0 0.0
      %409 = vmatpush1.msra.mxu0 0.0
      %410 = vmatprep.subr.mxu0 0.0
      %411 = vmatpush1.msra.mxu0 0.0
      %412 = vmatprep.subr.mxu0 0.0
      %413 = vmatpush1.msra.mxu0 0.0
      %414 = vmatprep.subr.mxu0 0.0
      %415 = vmatpush1.msra.mxu0 0.0
      %416 = vmatprep.subr.mxu0 0.0
      %417 = vmatpush1.msra.mxu0 0.0
      %418 = vmatprep.subr.mxu0 0.0
      %419 = vmatpush1.msra.mxu0 0.0
      %420 = vmatprep.subr.mxu0 0.0
      %421 = vmatpush1.msra.mxu0 %v366
      %422 = vmatprep.subr.mxu0 0.0
      %423 = vmatpush1.msra.mxu0 %v365
      %424 = vmatprep.subr.mxu0 0.0
      %425 = vmatpush2.msra.mxu0 0.0
      %426 = vmatprep.subr.mxu0 0.0
      %427 = vmatpush2.msra.mxu0 0.0
      %428 = vmatprep.subr.mxu0 0.0
      %429 = vmatpush2.msra.mxu0 0.0
      %430 = vmatprep.subr.mxu0 0.0
      %431 = vmatpush2.msra.mxu0 0.0
      %432 = vmatprep.subr.mxu0 0.0
      %433 = vmatpush2.msra.mxu0 0.0
      %434 = vmatprep.subr.mxu0 0.0
      %435 = vmatpush2.msra.mxu0 0.0
      %436 = vmatprep.subr.mxu0 0.0
      %437 = vmatpush2.msra.mxu0 0.0
      %438 = vmatprep.subr.mxu0 0.0
      %439 = vmatpush2.msra.mxu0 0.0
      %440 = vmatprep.subr.mxu0 0.0
      %441 = vmatpush2.msra.mxu0 0.0
      %442 = vmatprep.subr.mxu0 0.0
      %443 = vmatpush2.msra.mxu0 0.0
      %444 = vmatprep.subr.mxu0 0.0
      %445 = vmatpush2.msra.mxu0 0.0
      %446 = vmatprep.subr.mxu0 0.0
      %447 = vmatpush2.msra.mxu0 0.0
      %448 = vmatprep.subr.mxu0 0.0
      %449 = vmatpush2.msra.mxu0 0.0
      %450 = vmatprep.subr.mxu0 0.0
      %451 = vmatpush2.msra.mxu0 0.0
      %452 = vmatprep.subr.mxu0 0.0
      %453 = vmatpush2.msra.mxu0 0.0
      %454 = vmatprep.subr.mxu0 0.0
      %455 = vmatpush2.msra.mxu0 0.0
      %456 = vmatprep.mubr.f32.mxu0 0.0
      %457 = vmatmul.mubr.f32.gmra.mxu0 %v369
      %v458 = vpop.f32.mrf.mxu0
      %v459 = vadd.f32 0.0, %v458
      %v460 = vpop.f32.mrf.mxu0
      %461 = vmatprep.mubr.f32.mxu0 0.0
      %462 = vmatmul.mubr.f32.gmra.mxu0 %v372
      %v463 = vpop.f32.mrf.mxu0
      %v464 = vadd.f32 0.0, %v463
      %v465 = vpop.f32.mrf.mxu0
      %466 = vmatprep.mubr.f32.mxu0 0.0
      %467 = vmatmul.mubr.f32.gmra.mxu0 %v375
      %v468 = vpop.f32.mrf.mxu0
      %v469 = vadd.f32 0.0, %v468
      %v470 = vpop.f32.mrf.mxu0
      %471 = vmatprep.mubr.f32.mxu0 0.0
      %472 = vmatmul.mubr.f32.gmra.mxu0 %v378
      %v473 = vpop.f32.mrf.mxu0
      %v474 = vadd.f32 0.0, %v473
      %v475 = vpop.f32.mrf.mxu0
      %476 = vmatprep.mubr.f32.mxu0 0.0
      %477 = vmatmul.mubr.f32.gmra.mxu0 %v381
      %v478 = vpop.f32.mrf.mxu0
      %v479 = vadd.f32 0.0, %v478
      %v480 = vpop.f32.mrf.mxu0
      %481 = vmatprep.mubr.f32.mxu0 0.0
      %482 = vmatmul.mubr.f32.gmra.mxu0 %v384
      %v483 = vpop.f32.mrf.mxu0
      %v484 = vadd.f32 0.0, %v483
      %v485 = vpop.f32.mrf.mxu0
      %486 = vmatprep.mubr.f32.mxu0 0.0
      %487 = vmatmul.mubr.f32.gmra.mxu0 %v387
      %v488 = vpop.f32.mrf.mxu0
      %v489 = vadd.f32 0.0, %v488
      %v490 = vpop.f32.mrf.mxu0
      %491 = vmatprep.mubr.f32.mxu0 0.0
      %492 = vmatmul.mubr.f32.gmra.mxu0 %v390
      %v493 = vpop.f32.mrf.mxu0
      %v494 = vadd.f32 0.0, %v493
      %v495 = vpop.f32.mrf.mxu0
      %496 = vdwg.mxu0
      %v498 = vsel %vm367, %v288, 0
      %v501 = vsel %vm367, %v289, 0
      %v504 = vsel %vm367, %v290, 0
      %v507 = vsel %vm367, %v291, 0
      %v510 = vsel %vm367, %v292, 0
      %v513 = vsel %vm367, %v293, 0
      %v516 = vsel %vm367, %v294, 0
      %v519 = vsel %vm367, %v295, 0
      %521 = vmatprep.subr.mxu0 0.0
      %522 = vmatpush1.msra.mxu0 0.0
      %523 = vmatprep.subr.mxu0 0.0
      %524 = vmatpush1.msra.mxu0 0.0
      %525 = vmatprep.subr.mxu0 0.0
      %526 = vmatpush1.msra.mxu0 0.0
      %527 = vmatprep.subr.mxu0 0.0
      %528 = vmatpush1.msra.mxu0 0.0
      %529 = vmatprep.subr.mxu0 0.0
      %530 = vmatpush1.msra.mxu0 0.0
      %531 = vmatprep.subr.mxu0 0.0
      %532 = vmatpush1.msra.mxu0 0.0
      %533 = vmatprep.subr.mxu0 0.0
      %534 = vmatpush1.msra.mxu0 0.0
      %535 = vmatprep.subr.mxu0 0.0
      %536 = vmatpush1.msra.mxu0 0.0
      %537 = vmatprep.subr.mxu0 0.0
      %538 = vmatpush1.msra.mxu0 0.0
      %539 = vmatprep.subr.mxu0 0.0
      %540 = vmatpush1.msra.mxu0 0.0
      %541 = vmatprep.subr.mxu0 0.0
      %542 = vmatpush1.msra.mxu0 0.0
      %543 = vmatprep.subr.mxu0 0.0
      %544 = vmatpush1.msra.mxu0 0.0
      %545 = vmatprep.subr.mxu0 0.0
      %546 = vmatpush1.msra.mxu0 0.0
      %547 = vmatprep.subr.mxu0 0.0
      %548 = vmatpush1.msra.mxu0 0.0
      %549 = vmatprep.subr.mxu0 0.0
      %550 = vmatpush1.msra.mxu0 %v297
      %551 = vmatprep.subr.mxu0 0.0
      %552 = vmatpush1.msra.mxu0 %v296
      %553 = vmatprep.subr.mxu0 0.0
      %554 = vmatpush2.msra.mxu0 0.0
      %555 = vmatprep.subr.mxu0 0.0
      %556 = vmatpush2.msra.mxu0 0.0
      %557 = vmatprep.subr.mxu0 0.0
      %558 = vmatpush2.msra.mxu0 0.0
      %559 = vmatprep.subr.mxu0 0.0
      %560 = vmatpush2.msra.mxu0 0.0
      %561 = vmatprep.subr.mxu0 0.0
      %562 = vmatpush2.msra.mxu0 0.0
      %563 = vmatprep.subr.mxu0 0.0
      %564 = vmatpush2.msra.mxu0 0.0
      %565 = vmatprep.subr.mxu0 0.0
      %566 = vmatpush2.msra.mxu0 0.0
      %567 = vmatprep.subr.mxu0 0.0
      %568 = vmatpush2.msra.mxu0 0.0
      %569 = vmatprep.subr.mxu0 0.0
      %570 = vmatpush2.msra.mxu0 0.0
      %571 = vmatprep.subr.mxu0 0.0
      %572 = vmatpush2.msra.mxu0 0.0
      %573 = vmatprep.subr.mxu0 0.0
      %574 = vmatpush2.msra.mxu0 0.0
      %575 = vmatprep.subr.mxu0 0.0
      %576 = vmatpush2.msra.mxu0 0.0
      %577 = vmatprep.subr.mxu0 0.0
      %578 = vmatpush2.msra.mxu0 0.0
      %579 = vmatprep.subr.mxu0 0.0
      %580 = vmatpush2.msra.mxu0 0.0
      %581 = vmatprep.subr.mxu0 0.0
      %582 = vmatpush2.msra.mxu0 0.0
      %583 = vmatprep.subr.mxu0 0.0
      %584 = vmatpush2.msra.mxu0 0.0
      %585 = vmatprep.mubr.f32.mxu0 0.0
      %586 = vmatmul.mubr.f32.gmra.mxu0 %v498
      %v587 = vpop.f32.mrf.mxu0
      %v588 = vadd.f32 %v459, %v587
      %v589 = vpop.f32.mrf.mxu0
      %590 = vmatprep.mubr.f32.mxu0 0.0
      %591 = vmatmul.mubr.f32.gmra.mxu0 %v501
      %v592 = vpop.f32.mrf.mxu0
      %v593 = vadd.f32 %v464, %v592
      %v594 = vpop.f32.mrf.mxu0
      %595 = vmatprep.mubr.f32.mxu0 0.0
      %596 = vmatmul.mubr.f32.gmra.mxu0 %v504
      %v597 = vpop.f32.mrf.mxu0
      %v598 = vadd.f32 %v469, %v597
      %v599 = vpop.f32.mrf.mxu0
      %600 = vmatprep.mubr.f32.mxu0 0.0
      %601 = vmatmul.mubr.f32.gmra.mxu0 %v507
      %v602 = vpop.f32.mrf.mxu0
      %v603 = vadd.f32 %v474, %v602
      %v604 = vpop.f32.mrf.mxu0
      %605 = vmatprep.mubr.f32.mxu0 0.0
      %606 = vmatmul.mubr.f32.gmra.mxu0 %v510
      %v607 = vpop.f32.mrf.mxu0
      %v608 = vadd.f32 %v479, %v607
      %v609 = vpop.f32.mrf.mxu0
      %610 = vmatprep.mubr.f32.mxu0 0.0
      %611 = vmatmul.mubr.f32.gmra.mxu0 %v513
      %v612 = vpop.f32.mrf.mxu0
      %v613 = vadd.f32 %v484, %v612
      %v614 = vpop.f32.mrf.mxu0
      %615 = vmatprep.mubr.f32.mxu0 0.0
      %616 = vmatmul.mubr.f32.gmra.mxu0 %v516
      %v617 = vpop.f32.mrf.mxu0
      %v618 = vadd.f32 %v489, %v617
      %v619 = vpop.f32.mrf.mxu0
      %620 = vmatprep.mubr.f32.mxu0 0.0
      %621 = vmatmul.mubr.f32.gmra.mxu0 %v519
      %v622 = vpop.f32.mrf.mxu0
      %v623 = vadd.f32 %v494, %v622
      %v624 = vpop.f32.mrf.mxu0
      %625 = vdwg.mxu0
      %vm626 = vcmask 1042432
      %v627 = vrot.slane %v203, 5
      %v628 = vrot.slane %v204, 5
      %v629 = vsel %vm626, %v627, %v628
      %v630 = vrot.slane %v205, 5
      %v631 = vsel %vm626, %v628, %v630
      %v635 = vrot.slane %v198, 5
      %v636 = vrot.slane %v199, 5
      %v637 = vsel %vm626, %v635, %v636
      %v638 = vrot.slane %v200, 5
      %v639 = vsel %vm626, %v636, %v638
      %v640 = vrot.slane %v201, 5
      %v641 = vsel %vm626, %v638, %v640
      %v642 = vrot.slane %v202, 5
      %v643 = vsel %vm626, %v640, %v642
      %v644 = vsel %vm626, %v642, %v627
      %v651 = vsel %vm626, %v630, %v635
      %652 = vset.pattern.permute.xlu0 2
      %653 = vperm.xlu0 %652, %v240
      %v654 = vpop.permute.xlu0 %653
      %656 = vset.pattern.permute.xlu0 2
      %657 = vperm.xlu0 %656, %v241
      %v658 = vpop.permute.xlu0 %657
      %660 = vset.pattern.permute.xlu0 2
      %661 = vperm.xlu0 %660, %v242
      %v662 = vpop.permute.xlu0 %661
      %664 = vset.pattern.permute.xlu0 2
      %665 = vperm.xlu0 %664, %v243
      %v666 = vpop.permute.xlu0 %665
      %668 = vset.pattern.permute.xlu0 2
      %669 = vperm.xlu0 %668, %v244
      %v670 = vpop.permute.xlu0 %669
      %672 = vset.pattern.permute.xlu0 2
      %673 = vperm.xlu0 %672, %v245
      %v674 = vpop.permute.xlu0 %673
      %676 = vset.pattern.permute.xlu0 2
      %677 = vperm.xlu0 %676, %v246
      %v678 = vpop.permute.xlu0 %677
      %680 = vset.pattern.permute.xlu0 2
      %681 = vperm.xlu0 %680, %v247
      %v682 = vpop.permute.xlu0 %681
      %v684 = vmul.f32 %v629, %v654
      %v685 = vmul.f32 %v631, %v658
      %v686 = vmul.f32 %v651, %v662
      %v687 = vmul.f32 %v637, %v666
      %v688 = vmul.f32 %v639, %v670
      %v689 = vmul.f32 %v641, %v674
      %v690 = vmul.f32 %v643, %v678
      %v691 = vmul.f32 %v644, %v682
      %s692 = scalar_lea.vmem %s2, 32
      %v693 = vld [vmem:[%s692] sm:$0xff]
      %v694 = vld [vmem:[%s692 + $0x8] sm:$0xff]
      %v696 = vsel %vm367, %v684, 0
      %v699 = vsel %vm367, %v685, 0
      %v702 = vsel %vm367, %v686, 0
      %v705 = vsel %vm367, %v687, 0
      %v708 = vsel %vm367, %v688, 0
      %v711 = vsel %vm367, %v689, 0
      %v714 = vsel %vm367, %v690, 0
      %v717 = vsel %vm367, %v691, 0
      %719 = vmatprep.subr.mxu0 0.0
      %720 = vmatpush1.msra.mxu0 0.0
      %721 = vmatprep.subr.mxu0 0.0
      %722 = vmatpush1.msra.mxu0 0.0
      %723 = vmatprep.subr.mxu0 0.0
      %724 = vmatpush1.msra.mxu0 0.0
      %725 = vmatprep.subr.mxu0 0.0
      %726 = vmatpush1.msra.mxu0 0.0
      %727 = vmatprep.subr.mxu0 0.0
      %728 = vmatpush1.msra.mxu0 0.0
      %729 = vmatprep.subr.mxu0 0.0
      %730 = vmatpush1.msra.mxu0 0.0
      %731 = vmatprep.subr.mxu0 0.0
      %732 = vmatpush1.msra.mxu0 0.0
      %733 = vmatprep.subr.mxu0 0.0
      %734 = vmatpush1.msra.mxu0 0.0
      %735 = vmatprep.subr.mxu0 0.0
      %736 = vmatpush1.msra.mxu0 0.0
      %737 = vmatprep.subr.mxu0 0.0
      %738 = vmatpush1.msra.mxu0 0.0
      %739 = vmatprep.subr.mxu0 0.0
      %740 = vmatpush1.msra.mxu0 0.0
      %741 = vmatprep.subr.mxu0 0.0
      %742 = vmatpush1.msra.mxu0 0.0
      %743 = vmatprep.subr.mxu0 0.0
      %744 = vmatpush1.msra.mxu0 0.0
      %745 = vmatprep.subr.mxu0 0.0
      %746 = vmatpush1.msra.mxu0 0.0
      %747 = vmatprep.subr.mxu0 0.0
      %748 = vmatpush1.msra.mxu0 %v694
      %749 = vmatprep.subr.mxu0 0.0
      %750 = vmatpush1.msra.mxu0 %v693
      %751 = vmatprep.subr.mxu0 0.0
      %752 = vmatpush2.msra.mxu0 0.0
      %753 = vmatprep.subr.mxu0 0.0
      %754 = vmatpush2.msra.mxu0 0.0
      %755 = vmatprep.subr.mxu0 0.0
      %756 = vmatpush2.msra.mxu0 0.0
      %757 = vmatprep.subr.mxu0 0.0
      %758 = vmatpush2.msra.mxu0 0.0
      %759 = vmatprep.subr.mxu0 0.0
      %760 = vmatpush2.msra.mxu0 0.0
      %761 = vmatprep.subr.mxu0 0.0
      %762 = vmatpush2.msra.mxu0 0.0
      %763 = vmatprep.subr.mxu0 0.0
      %764 = vmatpush2.msra.mxu0 0.0
      %765 = vmatprep.subr.mxu0 0.0
      %766 = vmatpush2.msra.mxu0 0.0
      %767 = vmatprep.subr.mxu0 0.0
      %768 = vmatpush2.msra.mxu0 0.0
      %769 = vmatprep.subr.mxu0 0.0
      %770 = vmatpush2.msra.mxu0 0.0
      %771 = vmatprep.subr.mxu0 0.0
      %772 = vmatpush2.msra.mxu0 0.0
      %773 = vmatprep.subr.mxu0 0.0
      %774 = vmatpush2.msra.mxu0 0.0
      %775 = vmatprep.subr.mxu0 0.0
      %776 = vmatpush2.msra.mxu0 0.0
      %777 = vmatprep.subr.mxu0 0.0
      %778 = vmatpush2.msra.mxu0 0.0
      %779 = vmatprep.subr.mxu0 0.0
      %780 = vmatpush2.msra.mxu0 0.0
      %781 = vmatprep.subr.mxu0 0.0
      %782 = vmatpush2.msra.mxu0 0.0
      %783 = vmatprep.mubr.f32.mxu0 0.0
      %784 = vmatmul.mubr.f32.gmra.mxu0 %v696
      %v785 = vpop.f32.mrf.mxu0
      %v786 = vadd.f32 0.0, %v785
      %v787 = vpop.f32.mrf.mxu0
      %788 = vmatprep.mubr.f32.mxu0 0.0
      %789 = vmatmul.mubr.f32.gmra.mxu0 %v699
      %v790 = vpop.f32.mrf.mxu0
      %v791 = vadd.f32 0.0, %v790
      %v792 = vpop.f32.mrf.mxu0
      %793 = vmatprep.mubr.f32.mxu0 0.0
      %794 = vmatmul.mubr.f32.gmra.mxu0 %v702
      %v795 = vpop.f32.mrf.mxu0
      %v796 = vadd.f32 0.0, %v795
      %v797 = vpop.f32.mrf.mxu0
      %798 = vmatprep.mubr.f32.mxu0 0.0
      %799 = vmatmul.mubr.f32.gmra.mxu0 %v705
      %v800 = vpop.f32.mrf.mxu0
      %v801 = vadd.f32 0.0, %v800
      %v802 = vpop.f32.mrf.mxu0
      %803 = vmatprep.mubr.f32.mxu0 0.0
      %804 = vmatmul.mubr.f32.gmra.mxu0 %v708
      %v805 = vpop.f32.mrf.mxu0
      %v806 = vadd.f32 0.0, %v805
      %v807 = vpop.f32.mrf.mxu0
      %808 = vmatprep.mubr.f32.mxu0 0.0
      %809 = vmatmul.mubr.f32.gmra.mxu0 %v711
      %v810 = vpop.f32.mrf.mxu0
      %v811 = vadd.f32 0.0, %v810
      %v812 = vpop.f32.mrf.mxu0
      %813 = vmatprep.mubr.f32.mxu0 0.0
      %814 = vmatmul.mubr.f32.gmra.mxu0 %v714
      %v815 = vpop.f32.mrf.mxu0
      %v816 = vadd.f32 0.0, %v815
      %v817 = vpop.f32.mrf.mxu0
      %818 = vmatprep.mubr.f32.mxu0 0.0
      %819 = vmatmul.mubr.f32.gmra.mxu0 %v717
      %v820 = vpop.f32.mrf.mxu0
      %v821 = vadd.f32 0.0, %v820
      %v822 = vpop.f32.mrf.mxu0
      %823 = vdwg.mxu0
      %v824 = vadd.f32 %v588, %v786
      %v825 = vadd.f32 %v593, %v791
      %v826 = vadd.f32 %v598, %v796
      %v827 = vadd.f32 %v603, %v801
      %v828 = vadd.f32 %v608, %v806
      %v829 = vadd.f32 %v613, %v811
      %v830 = vadd.f32 %v618, %v816
      %v831 = vadd.f32 %v623, %v821
      %vm832 = vcmask 1040384
      %v833 = vrot.slane %v203, 7
      %v834 = vrot.slane %v204, 7
      %v835 = vsel %vm832, %v833, %v834
      %v836 = vrot.slane %v205, 7
      %v837 = vsel %vm832, %v834, %v836
      %v841 = vrot.slane %v198, 7
      %v842 = vrot.slane %v199, 7
      %v843 = vsel %vm832, %v841, %v842
      %v844 = vrot.slane %v200, 7
      %v845 = vsel %vm832, %v842, %v844
      %v846 = vrot.slane %v201, 7
      %v847 = vsel %vm832, %v844, %v846
      %v848 = vrot.slane %v202, 7
      %v849 = vsel %vm832, %v846, %v848
      %v850 = vsel %vm832, %v848, %v833
      %v857 = vsel %vm832, %v836, %v841
      %858 = vset.pattern.permute.xlu0 3
      %859 = vperm.xlu0 %858, %v240
      %v860 = vpop.permute.xlu0 %859
      %862 = vset.pattern.permute.xlu0 3
      %863 = vperm.xlu0 %862, %v241
      %v864 = vpop.permute.xlu0 %863
      %866 = vset.pattern.permute.xlu0 3
      %867 = vperm.xlu0 %866, %v242
      %v868 = vpop.permute.xlu0 %867
      %870 = vset.pattern.permute.xlu0 3
      %871 = vperm.xlu0 %870, %v243
      %v872 = vpop.permute.xlu0 %871
      %874 = vset.pattern.permute.xlu0 3
      %875 = vperm.xlu0 %874, %v244
      %v876 = vpop.permute.xlu0 %875
      %878 = vset.pattern.permute.xlu0 3
      %879 = vperm.xlu0 %878, %v245
      %v880 = vpop.permute.xlu0 %879
      %882 = vset.pattern.permute.xlu0 3
      %883 = vperm.xlu0 %882, %v246
      %v884 = vpop.permute.xlu0 %883
      %886 = vset.pattern.permute.xlu0 3
      %887 = vperm.xlu0 %886, %v247
      %v888 = vpop.permute.xlu0 %887
      %v890 = vmul.f32 %v835, %v860
      %v891 = vmul.f32 %v837, %v864
      %v892 = vmul.f32 %v857, %v868
      %v893 = vmul.f32 %v843, %v872
      %v894 = vmul.f32 %v845, %v876
      %v895 = vmul.f32 %v847, %v880
      %v896 = vmul.f32 %v849, %v884
      %v897 = vmul.f32 %v850, %v888
      %s898 = scalar_lea.vmem %s2, 48
      %v899 = vld [vmem:[%s898] sm:$0xff]
      %v900 = vld [vmem:[%s898 + $0x8] sm:$0xff]
      %v902 = vsel %vm367, %v890, 0
      %v905 = vsel %vm367, %v891, 0
      %v908 = vsel %vm367, %v892, 0
      %v911 = vsel %vm367, %v893, 0
      %v914 = vsel %vm367, %v894, 0
      %v917 = vsel %vm367, %v895, 0
      %v920 = vsel %vm367, %v896, 0
      %v923 = vsel %vm367, %v897, 0
      %925 = vmatprep.subr.mxu0 0.0
      %926 = vmatpush1.msra.mxu0 0.0
      %927 = vmatprep.subr.mxu0 0.0
      %928 = vmatpush1.msra.mxu0 0.0
      %929 = vmatprep.subr.mxu0 0.0
      %930 = vmatpush1.msra.mxu0 0.0
      %931 = vmatprep.subr.mxu0 0.0
      %932 = vmatpush1.msra.mxu0 0.0
      %933 = vmatprep.subr.mxu0 0.0
      %934 = vmatpush1.msra.mxu0 0.0
      %935 = vmatprep.subr.mxu0 0.0
      %936 = vmatpush1.msra.mxu0 0.0
      %937 = vmatprep.subr.mxu0 0.0
      %938 = vmatpush1.msra.mxu0 0.0
      %939 = vmatprep.subr.mxu0 0.0
      %940 = vmatpush1.msra.mxu0 0.0
      %941 = vmatprep.subr.mxu0 0.0
      %942 = vmatpush1.msra.mxu0 0.0
      %943 = vmatprep.subr.mxu0 0.0
      %944 = vmatpush1.msra.mxu0 0.0
      %945 = vmatprep.subr.mxu0 0.0
      %946 = vmatpush1.msra.mxu0 0.0
      %947 = vmatprep.subr.mxu0 0.0
      %948 = vmatpush1.msra.mxu0 0.0
      %949 = vmatprep.subr.mxu0 0.0
      %950 = vmatpush1.msra.mxu0 0.0
      %951 = vmatprep.subr.mxu0 0.0
      %952 = vmatpush1.msra.mxu0 0.0
      %953 = vmatprep.subr.mxu0 0.0
      %954 = vmatpush1.msra.mxu0 %v900
      %955 = vmatprep.subr.mxu0 0.0
      %956 = vmatpush1.msra.mxu0 %v899
      %957 = vmatprep.subr.mxu0 0.0
      %958 = vmatpush2.msra.mxu0 0.0
      %959 = vmatprep.subr.mxu0 0.0
      %960 = vmatpush2.msra.mxu0 0.0
      %961 = vmatprep.subr.mxu0 0.0
      %962 = vmatpush2.msra.mxu0 0.0
      %963 = vmatprep.subr.mxu0 0.0
      %964 = vmatpush2.msra.mxu0 0.0
      %965 = vmatprep.subr.mxu0 0.0
      %966 = vmatpush2.msra.mxu0 0.0
      %967 = vmatprep.subr.mxu0 0.0
      %968 = vmatpush2.msra.mxu0 0.0
      %969 = vmatprep.subr.mxu0 0.0
      %970 = vmatpush2.msra.mxu0 0.0
      %971 = vmatprep.subr.mxu0 0.0
      %972 = vmatpush2.msra.mxu0 0.0
      %973 = vmatprep.subr.mxu0 0.0
      %974 = vmatpush2.msra.mxu0 0.0
      %975 = vmatprep.subr.mxu0 0.0
      %976 = vmatpush2.msra.mxu0 0.0
      %977 = vmatprep.subr.mxu0 0.0
      %978 = vmatpush2.msra.mxu0 0.0
      %979 = vmatprep.subr.mxu0 0.0
      %980 = vmatpush2.msra.mxu0 0.0
      %981 = vmatprep.subr.mxu0 0.0
      %982 = vmatpush2.msra.mxu0 0.0
      %983 = vmatprep.subr.mxu0 0.0
      %984 = vmatpush2.msra.mxu0 0.0
      %985 = vmatprep.subr.mxu0 0.0
      %986 = vmatpush2.msra.mxu0 0.0
      %987 = vmatprep.subr.mxu0 0.0
      %988 = vmatpush2.msra.mxu0 0.0
      %989 = vmatprep.mubr.f32.mxu0 0.0
      %990 = vmatmul.mubr.f32.gmra.mxu0 %v902
      %v991 = vpop.f32.mrf.mxu0
      %v992 = vadd.f32 0.0, %v991
      %v993 = vpop.f32.mrf.mxu0
      %994 = vmatprep.mubr.f32.mxu0 0.0
      %995 = vmatmul.mubr.f32.gmra.mxu0 %v905
      %v996 = vpop.f32.mrf.mxu0
      %v997 = vadd.f32 0.0, %v996
      %v998 = vpop.f32.mrf.mxu0
      %999 = vmatprep.mubr.f32.mxu0 0.0
      %1000 = vmatmul.mubr.f32.gmra.mxu0 %v908
      %v1001 = vpop.f32.mrf.mxu0
      %v1002 = vadd.f32 0.0, %v1001
      %v1003 = vpop.f32.mrf.mxu0
      %1004 = vmatprep.mubr.f32.mxu0 0.0
      %1005 = vmatmul.mubr.f32.gmra.mxu0 %v911
      %v1006 = vpop.f32.mrf.mxu0
      %v1007 = vadd.f32 0.0, %v1006
      %v1008 = vpop.f32.mrf.mxu0
      %1009 = vmatprep.mubr.f32.mxu0 0.0
      %1010 = vmatmul.mubr.f32.gmra.mxu0 %v914
      %v1011 = vpop.f32.mrf.mxu0
      %v1012 = vadd.f32 0.0, %v1011
      %v1013 = vpop.f32.mrf.mxu0
      %1014 = vmatprep.mubr.f32.mxu0 0.0
      %1015 = vmatmul.mubr.f32.gmra.mxu0 %v917
      %v1016 = vpop.f32.mrf.mxu0
      %v1017 = vadd.f32 0.0, %v1016
      %v1018 = vpop.f32.mrf.mxu0
      %1019 = vmatprep.mubr.f32.mxu0 0.0
      %1020 = vmatmul.mubr.f32.gmra.mxu0 %v920
      %v1021 = vpop.f32.mrf.mxu0
      %v1022 = vadd.f32 0.0, %v1021
      %v1023 = vpop.f32.mrf.mxu0
      %1024 = vmatprep.mubr.f32.mxu0 0.0
      %1025 = vmatmul.mubr.f32.gmra.mxu0 %v923
      %v1026 = vpop.f32.mrf.mxu0
      %v1027 = vadd.f32 0.0, %v1026
      %v1028 = vpop.f32.mrf.mxu0
      %1029 = vdwg.mxu0
      %v1030 = vadd.f32 %v824, %v992
      %v1031 = vadd.f32 %v825, %v997
      %v1032 = vadd.f32 %v826, %v1002
      %v1033 = vadd.f32 %v827, %v1007
      %v1034 = vadd.f32 %v828, %v1012
      %v1035 = vadd.f32 %v829, %v1017
      %v1036 = vadd.f32 %v830, %v1022
      %v1037 = vadd.f32 %v831, %v1027
      %1038 = vset.pattern.permute.xlu0 4
      %1039 = vperm.xlu0 %1038, %v240
      %v1040 = vpop.permute.xlu0 %1039
      %1042 = vset.pattern.permute.xlu0 4
      %1043 = vperm.xlu0 %1042, %v241
      %v1044 = vpop.permute.xlu0 %1043
      %1046 = vset.pattern.permute.xlu0 4
      %1047 = vperm.xlu0 %1046, %v242
      %v1048 = vpop.permute.xlu0 %1047
      %1050 = vset.pattern.permute.xlu0 4
      %1051 = vperm.xlu0 %1050, %v243
      %v1052 = vpop.permute.xlu0 %1051
      %1054 = vset.pattern.permute.xlu0 4
      %1055 = vperm.xlu0 %1054, %v244
      %v1056 = vpop.permute.xlu0 %1055
      %1058 = vset.pattern.permute.xlu0 4
      %1059 = vperm.xlu0 %1058, %v245
      %v1060 = vpop.permute.xlu0 %1059
      %1062 = vset.pattern.permute.xlu0 4
      %1063 = vperm.xlu0 %1062, %v246
      %v1064 = vpop.permute.xlu0 %1063
      %1066 = vset.pattern.permute.xlu0 4
      %1067 = vperm.xlu0 %1066, %v247
      %v1068 = vpop.permute.xlu0 %1067
      %v1070 = vmul.f32 %v204, %v1040
      %v1071 = vmul.f32 %v205, %v1044
      %v1072 = vmul.f32 %v198, %v1048
      %v1073 = vmul.f32 %v199, %v1052
      %v1074 = vmul.f32 %v200, %v1056
      %v1075 = vmul.f32 %v201, %v1060
      %v1076 = vmul.f32 %v202, %v1064
      %v1077 = vmul.f32 %v203, %v1068
      %s1078 = scalar_lea.vmem %s2, 64
      %v1079 = vld [vmem:[%s1078] sm:$0xff]
      %v1080 = vld [vmem:[%s1078 + $0x8] sm:$0xff]
      %v1082 = vsel %vm367, %v1070, 0
      %v1085 = vsel %vm367, %v1071, 0
      %v1088 = vsel %vm367, %v1072, 0
      %v1091 = vsel %vm367, %v1073, 0
      %v1094 = vsel %vm367, %v1074, 0
      %v1097 = vsel %vm367, %v1075, 0
      %v1100 = vsel %vm367, %v1076, 0
      %v1103 = vsel %vm367, %v1077, 0
      %1105 = vmatprep.subr.mxu0 0.0
      %1106 = vmatpush1.msra.mxu0 0.0
      %1107 = vmatprep.subr.mxu0 0.0
      %1108 = vmatpush1.msra.mxu0 0.0
      %1109 = vmatprep.subr.mxu0 0.0
      %1110 = vmatpush1.msra.mxu0 0.0
      %1111 = vmatprep.subr.mxu0 0.0
      %1112 = vmatpush1.msra.mxu0 0.0
      %1113 = vmatprep.subr.mxu0 0.0
      %1114 = vmatpush1.msra.mxu0 0.0
      %1115 = vmatprep.subr.mxu0 0.0
      %1116 = vmatpush1.msra.mxu0 0.0
      %1117 = vmatprep.subr.mxu0 0.0
      %1118 = vmatpush1.msra.mxu0 0.0
      %1119 = vmatprep.subr.mxu0 0.0
      %1120 = vmatpush1.msra.mxu0 0.0
      %1121 = vmatprep.subr.mxu0 0.0
      %1122 = vmatpush1.msra.mxu0 0.0
      %1123 = vmatprep.subr.mxu0 0.0
      %1124 = vmatpush1.msra.mxu0 0.0
      %1125 = vmatprep.subr.mxu0 0.0
      %1126 = vmatpush1.msra.mxu0 0.0
      %1127 = vmatprep.subr.mxu0 0.0
      %1128 = vmatpush1.msra.mxu0 0.0
      %1129 = vmatprep.subr.mxu0 0.0
      %1130 = vmatpush1.msra.mxu0 0.0
      %1131 = vmatprep.subr.mxu0 0.0
      %1132 = vmatpush1.msra.mxu0 0.0
      %1133 = vmatprep.subr.mxu0 0.0
      %1134 = vmatpush1.msra.mxu0 %v1080
      %1135 = vmatprep.subr.mxu0 0.0
      %1136 = vmatpush1.msra.mxu0 %v1079
      %1137 = vmatprep.subr.mxu0 0.0
      %1138 = vmatpush2.msra.mxu0 0.0
      %1139 = vmatprep.subr.mxu0 0.0
      %1140 = vmatpush2.msra.mxu0 0.0
      %1141 = vmatprep.subr.mxu0 0.0
      %1142 = vmatpush2.msra.mxu0 0.0
      %1143 = vmatprep.subr.mxu0 0.0
      %1144 = vmatpush2.msra.mxu0 0.0
      %1145 = vmatprep.subr.mxu0 0.0
      %1146 = vmatpush2.msra.mxu0 0.0
      %1147 = vmatprep.subr.mxu0 0.0
      %1148 = vmatpush2.msra.mxu0 0.0
      %1149 = vmatprep.subr.mxu0 0.0
      %1150 = vmatpush2.msra.mxu0 0.0
      %1151 = vmatprep.subr.mxu0 0.0
      %1152 = vmatpush2.msra.mxu0 0.0
      %1153 = vmatprep.subr.mxu0 0.0
      %1154 = vmatpush2.msra.mxu0 0.0
      %1155 = vmatprep.subr.mxu0 0.0
      %1156 = vmatpush2.msra.mxu0 0.0
      %1157 = vmatprep.subr.mxu0 0.0
      %1158 = vmatpush2.msra.mxu0 0.0
      %1159 = vmatprep.subr.mxu0 0.0
      %1160 = vmatpush2.msra.mxu0 0.0
      %1161 = vmatprep.subr.mxu0 0.0
      %1162 = vmatpush2.msra.mxu0 0.0
      %1163 = vmatprep.subr.mxu0 0.0
      %1164 = vmatpush2.msra.mxu0 0.0
      %1165 = vmatprep.subr.mxu0 0.0
      %1166 = vmatpush2.msra.mxu0 0.0
      %1167 = vmatprep.subr.mxu0 0.0
      %1168 = vmatpush2.msra.mxu0 0.0
      %1169 = vmatprep.mubr.f32.mxu0 0.0
      %1170 = vmatmul.mubr.f32.gmra.mxu0 %v1082
      %v1171 = vpop.f32.mrf.mxu0
      %v1172 = vadd.f32 0.0, %v1171
      %v1173 = vpop.f32.mrf.mxu0
      %1174 = vmatprep.mubr.f32.mxu0 0.0
      %1175 = vmatmul.mubr.f32.gmra.mxu0 %v1085
      %v1176 = vpop.f32.mrf.mxu0
      %v1177 = vadd.f32 0.0, %v1176
      %v1178 = vpop.f32.mrf.mxu0
      %1179 = vmatprep.mubr.f32.mxu0 0.0
      %1180 = vmatmul.mubr.f32.gmra.mxu0 %v1088
      %v1181 = vpop.f32.mrf.mxu0
      %v1182 = vadd.f32 0.0, %v1181
      %v1183 = vpop.f32.mrf.mxu0
      %1184 = vmatprep.mubr.f32.mxu0 0.0
      %1185 = vmatmul.mubr.f32.gmra.mxu0 %v1091
      %v1186 = vpop.f32.mrf.mxu0
      %v1187 = vadd.f32 0.0, %v1186
      %v1188 = vpop.f32.mrf.mxu0
      %1189 = vmatprep.mubr.f32.mxu0 0.0
      %1190 = vmatmul.mubr.f32.gmra.mxu0 %v1094
      %v1191 = vpop.f32.mrf.mxu0
      %v1192 = vadd.f32 0.0, %v1191
      %v1193 = vpop.f32.mrf.mxu0
      %1194 = vmatprep.mubr.f32.mxu0 0.0
      %1195 = vmatmul.mubr.f32.gmra.mxu0 %v1097
      %v1196 = vpop.f32.mrf.mxu0
      %v1197 = vadd.f32 0.0, %v1196
      %v1198 = vpop.f32.mrf.mxu0
      %1199 = vmatprep.mubr.f32.mxu0 0.0
      %1200 = vmatmul.mubr.f32.gmra.mxu0 %v1100
      %v1201 = vpop.f32.mrf.mxu0
      %v1202 = vadd.f32 0.0, %v1201
      %v1203 = vpop.f32.mrf.mxu0
      %1204 = vmatprep.mubr.f32.mxu0 0.0
      %1205 = vmatmul.mubr.f32.gmra.mxu0 %v1103
      %v1206 = vpop.f32.mrf.mxu0
      %v1207 = vadd.f32 0.0, %v1206
      %v1208 = vpop.f32.mrf.mxu0
      %1209 = vdwg.mxu0
      %v1210 = vadd.f32 %v1030, %v1172
      %v1211 = vadd.f32 %v1031, %v1177
      %v1212 = vadd.f32 %v1032, %v1182
      %v1213 = vadd.f32 %v1033, %v1187
      %v1214 = vadd.f32 %v1034, %v1192
      %v1215 = vadd.f32 %v1035, %v1197
      %v1216 = vadd.f32 %v1036, %v1202
      %v1217 = vadd.f32 %v1037, %v1207
      %vm1218 = vcmask 1046528
      %v1219 = vrot.slane %v204, 1
      %v1220 = vrot.slane %v205, 1
      %v1221 = vsel %vm1218, %v1219, %v1220
      %v1224 = vrot.slane %v198, 1
      %v1225 = vrot.slane %v199, 1
      %v1226 = vsel %vm1218, %v1224, %v1225
      %v1227 = vrot.slane %v200, 1
      %v1228 = vsel %vm1218, %v1225, %v1227
      %v1229 = vrot.slane %v201, 1
      %v1230 = vsel %vm1218, %v1227, %v1229
      %v1231 = vrot.slane %v202, 1
      %v1232 = vsel %vm1218, %v1229, %v1231
      %v1233 = vrot.slane %v203, 1
      %v1234 = vsel %vm1218, %v1231, %v1233
      %v1235 = vsel %vm1218, %v1233, %v1219
      %v1243 = vsel %vm1218, %v1220, %v1224
      %1244 = vset.pattern.permute.xlu0 5
      %1245 = vperm.xlu0 %1244, %v240
      %v1246 = vpop.permute.xlu0 %1245
      %1248 = vset.pattern.permute.xlu0 5
      %1249 = vperm.xlu0 %1248, %v241
      %v1250 = vpop.permute.xlu0 %1249
      %1252 = vset.pattern.permute.xlu0 5
      %1253 = vperm.xlu0 %1252, %v242
      %v1254 = vpop.permute.xlu0 %1253
      %1256 = vset.pattern.permute.xlu0 5
      %1257 = vperm.xlu0 %1256, %v243
      %v1258 = vpop.permute.xlu0 %1257
      %1260 = vset.pattern.permute.xlu0 5
      %1261 = vperm.xlu0 %1260, %v244
      %v1262 = vpop.permute.xlu0 %1261
      %1264 = vset.pattern.permute.xlu0 5
      %1265 = vperm.xlu0 %1264, %v245
      %v1266 = vpop.permute.xlu0 %1265
      %1268 = vset.pattern.permute.xlu0 5
      %1269 = vperm.xlu0 %1268, %v246
      %v1270 = vpop.permute.xlu0 %1269
      %1272 = vset.pattern.permute.xlu0 5
      %1273 = vperm.xlu0 %1272, %v247
      %v1274 = vpop.permute.xlu0 %1273
      %v1276 = vmul.f32 %v1221, %v1246
      %v1277 = vmul.f32 %v1243, %v1250
      %v1278 = vmul.f32 %v1226, %v1254
      %v1279 = vmul.f32 %v1228, %v1258
      %v1280 = vmul.f32 %v1230, %v1262
      %v1281 = vmul.f32 %v1232, %v1266
      %v1282 = vmul.f32 %v1234, %v1270
      %v1283 = vmul.f32 %v1235, %v1274
      %s1284 = scalar_lea.vmem %s2, 80
      %v1285 = vld [vmem:[%s1284] sm:$0xff]
      %v1286 = vld [vmem:[%s1284 + $0x8] sm:$0xff]
      %v1288 = vsel %vm367, %v1276, 0
      %v1291 = vsel %vm367, %v1277, 0
      %v1294 = vsel %vm367, %v1278, 0
      %v1297 = vsel %vm367, %v1279, 0
      %v1300 = vsel %vm367, %v1280, 0
      %v1303 = vsel %vm367, %v1281, 0
      %v1306 = vsel %vm367, %v1282, 0
      %v1309 = vsel %vm367, %v1283, 0
      %1311 = vmatprep.subr.mxu0 0.0
      %1312 = vmatpush1.msra.mxu0 0.0
      %1313 = vmatprep.subr.mxu0 0.0
      %1314 = vmatpush1.msra.mxu0 0.0
      %1315 = vmatprep.subr.mxu0 0.0
      %1316 = vmatpush1.msra.mxu0 0.0
      %1317 = vmatprep.subr.mxu0 0.0
      %1318 = vmatpush1.msra.mxu0 0.0
      %1319 = vmatprep.subr.mxu0 0.0
      %1320 = vmatpush1.msra.mxu0 0.0
      %1321 = vmatprep.subr.mxu0 0.0
      %1322 = vmatpush1.msra.mxu0 0.0
      %1323 = vmatprep.subr.mxu0 0.0
      %1324 = vmatpush1.msra.mxu0 0.0
      %1325 = vmatprep.subr.mxu0 0.0
      %1326 = vmatpush1.msra.mxu0 0.0
      %1327 = vmatprep.subr.mxu0 0.0
      %1328 = vmatpush1.msra.mxu0 0.0
      %1329 = vmatprep.subr.mxu0 0.0
      %1330 = vmatpush1.msra.mxu0 0.0
      %1331 = vmatprep.subr.mxu0 0.0
      %1332 = vmatpush1.msra.mxu0 0.0
      %1333 = vmatprep.subr.mxu0 0.0
      %1334 = vmatpush1.msra.mxu0 0.0
      %1335 = vmatprep.subr.mxu0 0.0
      %1336 = vmatpush1.msra.mxu0 0.0
      %1337 = vmatprep.subr.mxu0 0.0
      %1338 = vmatpush1.msra.mxu0 0.0
      %1339 = vmatprep.subr.mxu0 0.0
      %1340 = vmatpush1.msra.mxu0 %v1286
      %1341 = vmatprep.subr.mxu0 0.0
      %1342 = vmatpush1.msra.mxu0 %v1285
      %1343 = vmatprep.subr.mxu0 0.0
      %1344 = vmatpush2.msra.mxu0 0.0
      %1345 = vmatprep.subr.mxu0 0.0
      %1346 = vmatpush2.msra.mxu0 0.0
      %1347 = vmatprep.subr.mxu0 0.0
      %1348 = vmatpush2.msra.mxu0 0.0
      %1349 = vmatprep.subr.mxu0 0.0
      %1350 = vmatpush2.msra.mxu0 0.0
      %1351 = vmatprep.subr.mxu0 0.0
      %1352 = vmatpush2.msra.mxu0 0.0
      %1353 = vmatprep.subr.mxu0 0.0
      %1354 = vmatpush2.msra.mxu0 0.0
      %1355 = vmatprep.subr.mxu0 0.0
      %1356 = vmatpush2.msra.mxu0 0.0
      %1357 = vmatprep.subr.mxu0 0.0
      %1358 = vmatpush2.msra.mxu0 0.0
      %1359 = vmatprep.subr.mxu0 0.0
      %1360 = vmatpush2.msra.mxu0 0.0
      %1361 = vmatprep.subr.mxu0 0.0
      %1362 = vmatpush2.msra.mxu0 0.0
      %1363 = vmatprep.subr.mxu0 0.0
      %1364 = vmatpush2.msra.mxu0 0.0
      %1365 = vmatprep.subr.mxu0 0.0
      %1366 = vmatpush2.msra.mxu0 0.0
      %1367 = vmatprep.subr.mxu0 0.0
      %1368 = vmatpush2.msra.mxu0 0.0
      %1369 = vmatprep.subr.mxu0 0.0
      %1370 = vmatpush2.msra.mxu0 0.0
      %1371 = vmatprep.subr.mxu0 0.0
      %1372 = vmatpush2.msra.mxu0 0.0
      %1373 = vmatprep.subr.mxu0 0.0
      %1374 = vmatpush2.msra.mxu0 0.0
      %1375 = vmatprep.mubr.f32.mxu0 0.0
      %1376 = vmatmul.mubr.f32.gmra.mxu0 %v1288
      %v1377 = vpop.f32.mrf.mxu0
      %v1378 = vadd.f32 0.0, %v1377
      %v1379 = vpop.f32.mrf.mxu0
      %1380 = vmatprep.mubr.f32.mxu0 0.0
      %1381 = vmatmul.mubr.f32.gmra.mxu0 %v1291
      %v1382 = vpop.f32.mrf.mxu0
      %v1383 = vadd.f32 0.0, %v1382
      %v1384 = vpop.f32.mrf.mxu0
      %1385 = vmatprep.mubr.f32.mxu0 0.0
      %1386 = vmatmul.mubr.f32.gmra.mxu0 %v1294
      %v1387 = vpop.f32.mrf.mxu0
      %v1388 = vadd.f32 0.0, %v1387
      %v1389 = vpop.f32.mrf.mxu0
      %1390 = vmatprep.mubr.f32.mxu0 0.0
      %1391 = vmatmul.mubr.f32.gmra.mxu0 %v1297
      %v1392 = vpop.f32.mrf.mxu0
      %v1393 = vadd.f32 0.0, %v1392
      %v1394 = vpop.f32.mrf.mxu0
      %1395 = vmatprep.mubr.f32.mxu0 0.0
      %1396 = vmatmul.mubr.f32.gmra.mxu0 %v1300
      %v1397 = vpop.f32.mrf.mxu0
      %v1398 = vadd.f32 0.0, %v1397
      %v1399 = vpop.f32.mrf.mxu0
      %1400 = vmatprep.mubr.f32.mxu0 0.0
      %1401 = vmatmul.mubr.f32.gmra.mxu0 %v1303
      %v1402 = vpop.f32.mrf.mxu0
      %v1403 = vadd.f32 0.0, %v1402
      %v1404 = vpop.f32.mrf.mxu0
      %1405 = vmatprep.mubr.f32.mxu0 0.0
      %1406 = vmatmul.mubr.f32.gmra.mxu0 %v1306
      %v1407 = vpop.f32.mrf.mxu0
      %v1408 = vadd.f32 0.0, %v1407
      %v1409 = vpop.f32.mrf.mxu0
      %1410 = vmatprep.mubr.f32.mxu0 0.0
      %1411 = vmatmul.mubr.f32.gmra.mxu0 %v1309
      %v1412 = vpop.f32.mrf.mxu0
      %v1413 = vadd.f32 0.0, %v1412
      %v1414 = vpop.f32.mrf.mxu0
      %1415 = vdwg.mxu0
      %v1416 = vadd.f32 %v1210, %v1378
      %v1417 = vadd.f32 %v1211, %v1383
      %v1418 = vadd.f32 %v1212, %v1388
      %v1419 = vadd.f32 %v1213, %v1393
      %v1420 = vadd.f32 %v1214, %v1398
      %v1421 = vadd.f32 %v1215, %v1403
      %v1422 = vadd.f32 %v1216, %v1408
      %v1423 = vadd.f32 %v1217, %v1413
      %1424 = vset.pattern.permute.xlu0 6
      %1425 = vperm.xlu0 %1424, %v240
      %v1426 = vpop.permute.xlu0 %1425
      %1428 = vset.pattern.permute.xlu0 6
      %1429 = vperm.xlu0 %1428, %v241
      %v1430 = vpop.permute.xlu0 %1429
      %1432 = vset.pattern.permute.xlu0 6
      %1433 = vperm.xlu0 %1432, %v242
      %v1434 = vpop.permute.xlu0 %1433
      %1436 = vset.pattern.permute.xlu0 6
      %1437 = vperm.xlu0 %1436, %v243
      %v1438 = vpop.permute.xlu0 %1437
      %1440 = vset.pattern.permute.xlu0 6
      %1441 = vperm.xlu0 %1440, %v244
      %v1442 = vpop.permute.xlu0 %1441
      %1444 = vset.pattern.permute.xlu0 6
      %1445 = vperm.xlu0 %1444, %v245
      %v1446 = vpop.permute.xlu0 %1445
      %1448 = vset.pattern.permute.xlu0 6
      %1449 = vperm.xlu0 %1448, %v246
      %v1450 = vpop.permute.xlu0 %1449
      %1452 = vset.pattern.permute.xlu0 6
      %1453 = vperm.xlu0 %1452, %v247
      %v1454 = vpop.permute.xlu0 %1453
      %v1456 = vmul.f32 %v214, %v1426
      %v1457 = vmul.f32 %v239, %v1430
      %v1458 = vmul.f32 %v225, %v1434
      %v1459 = vmul.f32 %v227, %v1438
      %v1460 = vmul.f32 %v229, %v1442
      %v1461 = vmul.f32 %v231, %v1446
      %v1462 = vmul.f32 %v232, %v1450
      %v1463 = vmul.f32 %v212, %v1454
      %s1464 = scalar_lea.vmem %s2, 96
      %v1465 = vld [vmem:[%s1464] sm:$0xff]
      %v1466 = vld [vmem:[%s1464 + $0x8] sm:$0xff]
      %v1468 = vsel %vm367, %v1456, 0
      %v1471 = vsel %vm367, %v1457, 0
      %v1474 = vsel %vm367, %v1458, 0
      %v1477 = vsel %vm367, %v1459, 0
      %v1480 = vsel %vm367, %v1460, 0
      %v1483 = vsel %vm367, %v1461, 0
      %v1486 = vsel %vm367, %v1462, 0
      %v1489 = vsel %vm367, %v1463, 0
      %1491 = vmatprep.subr.mxu0 0.0
      %1492 = vmatpush1.msra.mxu0 0.0
      %1493 = vmatprep.subr.mxu0 0.0
      %1494 = vmatpush1.msra.mxu0 0.0
      %1495 = vmatprep.subr.mxu0 0.0
      %1496 = vmatpush1.msra.mxu0 0.0
      %1497 = vmatprep.subr.mxu0 0.0
      %1498 = vmatpush1.msra.mxu0 0.0
      %1499 = vmatprep.subr.mxu0 0.0
      %1500 = vmatpush1.msra.mxu0 0.0
      %1501 = vmatprep.subr.mxu0 0.0
      %1502 = vmatpush1.msra.mxu0 0.0
      %1503 = vmatprep.subr.mxu0 0.0
      %1504 = vmatpush1.msra.mxu0 0.0
      %1505 = vmatprep.subr.mxu0 0.0
      %1506 = vmatpush1.msra.mxu0 0.0
      %1507 = vmatprep.subr.mxu0 0.0
      %1508 = vmatpush1.msra.mxu0 0.0
      %1509 = vmatprep.subr.mxu0 0.0
      %1510 = vmatpush1.msra.mxu0 0.0
      %1511 = vmatprep.subr.mxu0 0.0
      %1512 = vmatpush1.msra.mxu0 0.0
      %1513 = vmatprep.subr.mxu0 0.0
      %1514 = vmatpush1.msra.mxu0 0.0
      %1515 = vmatprep.subr.mxu0 0.0
      %1516 = vmatpush1.msra.mxu0 0.0
      %1517 = vmatprep.subr.mxu0 0.0
      %1518 = vmatpush1.msra.mxu0 0.0
      %1519 = vmatprep.subr.mxu0 0.0
      %1520 = vmatpush1.msra.mxu0 %v1466
      %1521 = vmatprep.subr.mxu0 0.0
      %1522 = vmatpush1.msra.mxu0 %v1465
      %1523 = vmatprep.subr.mxu0 0.0
      %1524 = vmatpush2.msra.mxu0 0.0
      %1525 = vmatprep.subr.mxu0 0.0
      %1526 = vmatpush2.msra.mxu0 0.0
      %1527 = vmatprep.subr.mxu0 0.0
      %1528 = vmatpush2.msra.mxu0 0.0
      %1529 = vmatprep.subr.mxu0 0.0
      %1530 = vmatpush2.msra.mxu0 0.0
      %1531 = vmatprep.subr.mxu0 0.0
      %1532 = vmatpush2.msra.mxu0 0.0
      %1533 = vmatprep.subr.mxu0 0.0
      %1534 = vmatpush2.msra.mxu0 0.0
      %1535 = vmatprep.subr.mxu0 0.0
      %1536 = vmatpush2.msra.mxu0 0.0
      %1537 = vmatprep.subr.mxu0 0.0
      %1538 = vmatpush2.msra.mxu0 0.0
      %1539 = vmatprep.subr.mxu0 0.0
      %1540 = vmatpush2.msra.mxu0 0.0
      %1541 = vmatprep.subr.mxu0 0.0
      %1542 = vmatpush2.msra.mxu0 0.0
      %1543 = vmatprep.subr.mxu0 0.0
      %1544 = vmatpush2.msra.mxu0 0.0
      %1545 = vmatprep.subr.mxu0 0.0
      %1546 = vmatpush2.msra.mxu0 0.0
      %1547 = vmatprep.subr.mxu0 0.0
      %1548 = vmatpush2.msra.mxu0 0.0
      %1549 = vmatprep.subr.mxu0 0.0
      %1550 = vmatpush2.msra.mxu0 0.0
      %1551 = vmatprep.subr.mxu0 0.0
      %1552 = vmatpush2.msra.mxu0 0.0
      %1553 = vmatprep.subr.mxu0 0.0
      %1554 = vmatpush2.msra.mxu0 0.0
      %1555 = vmatprep.mubr.f32.mxu0 0.0
      %1556 = vmatmul.mubr.f32.gmra.mxu0 %v1468
      %v1557 = vpop.f32.mrf.mxu0
      %v1558 = vadd.f32 0.0, %v1557
      %v1559 = vpop.f32.mrf.mxu0
      %1560 = vmatprep.mubr.f32.mxu0 0.0
      %1561 = vmatmul.mubr.f32.gmra.mxu0 %v1471
      %v1562 = vpop.f32.mrf.mxu0
      %v1563 = vadd.f32 0.0, %v1562
      %v1564 = vpop.f32.mrf.mxu0
      %1565 = vmatprep.mubr.f32.mxu0 0.0
      %1566 = vmatmul.mubr.f32.gmra.mxu0 %v1474
      %v1567 = vpop.f32.mrf.mxu0
      %v1568 = vadd.f32 0.0, %v1567
      %v1569 = vpop.f32.mrf.mxu0
      %1570 = vmatprep.mubr.f32.mxu0 0.0
      %1571 = vmatmul.mubr.f32.gmra.mxu0 %v1477
      %v1572 = vpop.f32.mrf.mxu0
      %v1573 = vadd.f32 0.0, %v1572
      %v1574 = vpop.f32.mrf.mxu0
      %1575 = vmatprep.mubr.f32.mxu0 0.0
      %1576 = vmatmul.mubr.f32.gmra.mxu0 %v1480
      %v1577 = vpop.f32.mrf.mxu0
      %v1578 = vadd.f32 0.0, %v1577
      %v1579 = vpop.f32.mrf.mxu0
      %1580 = vmatprep.mubr.f32.mxu0 0.0
      %1581 = vmatmul.mubr.f32.gmra.mxu0 %v1483
      %v1582 = vpop.f32.mrf.mxu0
      %v1583 = vadd.f32 0.0, %v1582
      %v1584 = vpop.f32.mrf.mxu0
      %1585 = vmatprep.mubr.f32.mxu0 0.0
      %1586 = vmatmul.mubr.f32.gmra.mxu0 %v1486
      %v1587 = vpop.f32.mrf.mxu0
      %v1588 = vadd.f32 0.0, %v1587
      %v1589 = vpop.f32.mrf.mxu0
      %1590 = vmatprep.mubr.f32.mxu0 0.0
      %1591 = vmatmul.mubr.f32.gmra.mxu0 %v1489
      %v1592 = vpop.f32.mrf.mxu0
      %v1593 = vadd.f32 0.0, %v1592
      %v1594 = vpop.f32.mrf.mxu0
      %1595 = vdwg.mxu0
      %v1596 = vadd.f32 %v1416, %v1558
      %v1597 = vadd.f32 %v1417, %v1563
      %v1598 = vadd.f32 %v1418, %v1568
      %v1599 = vadd.f32 %v1419, %v1573
      %v1600 = vadd.f32 %v1420, %v1578
      %v1601 = vadd.f32 %v1421, %v1583
      %v1602 = vadd.f32 %v1422, %v1588
      %v1603 = vadd.f32 %v1423, %v1593
      %1604 = vset.pattern.permute.xlu0 7
      %1605 = vperm.xlu0 %1604, %v240
      %v1606 = vpop.permute.xlu0 %1605
      %1608 = vset.pattern.permute.xlu0 7
      %1609 = vperm.xlu0 %1608, %v241
      %v1610 = vpop.permute.xlu0 %1609
      %1612 = vset.pattern.permute.xlu0 7
      %1613 = vperm.xlu0 %1612, %v242
      %v1614 = vpop.permute.xlu0 %1613
      %1616 = vset.pattern.permute.xlu0 7
      %1617 = vperm.xlu0 %1616, %v243
      %v1618 = vpop.permute.xlu0 %1617
      %1620 = vset.pattern.permute.xlu0 7
      %1621 = vperm.xlu0 %1620, %v244
      %v1622 = vpop.permute.xlu0 %1621
      %1624 = vset.pattern.permute.xlu0 7
      %1625 = vperm.xlu0 %1624, %v245
      %v1626 = vpop.permute.xlu0 %1625
      %1628 = vset.pattern.permute.xlu0 7
      %1629 = vperm.xlu0 %1628, %v246
      %v1630 = vpop.permute.xlu0 %1629
      %1632 = vset.pattern.permute.xlu0 7
      %1633 = vperm.xlu0 %1632, %v247
      %v1634 = vpop.permute.xlu0 %1633
      %v1636 = vmul.f32 %v303, %v1606
      %v1637 = vmul.f32 %v323, %v1610
      %v1638 = vmul.f32 %v309, %v1614
      %v1639 = vmul.f32 %v311, %v1618
      %v1640 = vmul.f32 %v313, %v1622
      %v1641 = vmul.f32 %v315, %v1626
      %v1642 = vmul.f32 %v316, %v1630
      %v1643 = vmul.f32 %v301, %v1634
      %s1644 = scalar_lea.vmem %s2, 112
      %v1645 = vld [vmem:[%s1644] sm:$0xff]
      %v1646 = vld [vmem:[%s1644 + $0x8] sm:$0xff]
      %v1648 = vsel %vm367, %v1636, 0
      %v1651 = vsel %vm367, %v1637, 0
      %v1654 = vsel %vm367, %v1638, 0
      %v1657 = vsel %vm367, %v1639, 0
      %v1660 = vsel %vm367, %v1640, 0
      %v1663 = vsel %vm367, %v1641, 0
      %v1666 = vsel %vm367, %v1642, 0
      %v1669 = vsel %vm367, %v1643, 0
      %1671 = vmatprep.subr.mxu0 0.0
      %1672 = vmatpush1.msra.mxu0 0.0
      %1673 = vmatprep.subr.mxu0 0.0
      %1674 = vmatpush1.msra.mxu0 0.0
      %1675 = vmatprep.subr.mxu0 0.0
      %1676 = vmatpush1.msra.mxu0 0.0
      %1677 = vmatprep.subr.mxu0 0.0
      %1678 = vmatpush1.msra.mxu0 0.0
      %1679 = vmatprep.subr.mxu0 0.0
      %1680 = vmatpush1.msra.mxu0 0.0
      %1681 = vmatprep.subr.mxu0 0.0
      %1682 = vmatpush1.msra.mxu0 0.0
      %1683 = vmatprep.subr.mxu0 0.0
      %1684 = vmatpush1.msra.mxu0 0.0
      %1685 = vmatprep.subr.mxu0 0.0
      %1686 = vmatpush1.msra.mxu0 0.0
      %1687 = vmatprep.subr.mxu0 0.0
      %1688 = vmatpush1.msra.mxu0 0.0
      %1689 = vmatprep.subr.mxu0 0.0
      %1690 = vmatpush1.msra.mxu0 0.0
      %1691 = vmatprep.subr.mxu0 0.0
      %1692 = vmatpush1.msra.mxu0 0.0
      %1693 = vmatprep.subr.mxu0 0.0
      %1694 = vmatpush1.msra.mxu0 0.0
      %1695 = vmatprep.subr.mxu0 0.0
      %1696 = vmatpush1.msra.mxu0 0.0
      %1697 = vmatprep.subr.mxu0 0.0
      %1698 = vmatpush1.msra.mxu0 0.0
      %1699 = vmatprep.subr.mxu0 0.0
      %1700 = vmatpush1.msra.mxu0 %v1646
      %1701 = vmatprep.subr.mxu0 0.0
      %1702 = vmatpush1.msra.mxu0 %v1645
      %1703 = vmatprep.subr.mxu0 0.0
      %1704 = vmatpush2.msra.mxu0 0.0
      %1705 = vmatprep.subr.mxu0 0.0
      %1706 = vmatpush2.msra.mxu0 0.0
      %1707 = vmatprep.subr.mxu0 0.0
      %1708 = vmatpush2.msra.mxu0 0.0
      %1709 = vmatprep.subr.mxu0 0.0
      %1710 = vmatpush2.msra.mxu0 0.0
      %1711 = vmatprep.subr.mxu0 0.0
      %1712 = vmatpush2.msra.mxu0 0.0
      %1713 = vmatprep.subr.mxu0 0.0
      %1714 = vmatpush2.msra.mxu0 0.0
      %1715 = vmatprep.subr.mxu0 0.0
      %1716 = vmatpush2.msra.mxu0 0.0
      %1717 = vmatprep.subr.mxu0 0.0
      %1718 = vmatpush2.msra.mxu0 0.0
      %1719 = vmatprep.subr.mxu0 0.0
      %1720 = vmatpush2.msra.mxu0 0.0
      %1721 = vmatprep.subr.mxu0 0.0
      %1722 = vmatpush2.msra.mxu0 0.0
      %1723 = vmatprep.subr.mxu0 0.0
      %1724 = vmatpush2.msra.mxu0 0.0
      %1725 = vmatprep.subr.mxu0 0.0
      %1726 = vmatpush2.msra.mxu0 0.0
      %1727 = vmatprep.subr.mxu0 0.0
      %1728 = vmatpush2.msra.mxu0 0.0
      %1729 = vmatprep.subr.mxu0 0.0
      %1730 = vmatpush2.msra.mxu0 0.0
      %1731 = vmatprep.subr.mxu0 0.0
      %1732 = vmatpush2.msra.mxu0 0.0
      %1733 = vmatprep.subr.mxu0 0.0
      %1734 = vmatpush2.msra.mxu0 0.0
      %1735 = vmatprep.mubr.f32.mxu0 0.0
      %1736 = vmatmul.mubr.f32.gmra.mxu0 %v1648
      %v1737 = vpop.f32.mrf.mxu0
      %v1738 = vadd.f32 0.0, %v1737
      %v1739 = vpop.f32.mrf.mxu0
      %1740 = vmatprep.mubr.f32.mxu0 0.0
      %1741 = vmatmul.mubr.f32.gmra.mxu0 %v1651
      %v1742 = vpop.f32.mrf.mxu0
      %v1743 = vadd.f32 0.0, %v1742
      %v1744 = vpop.f32.mrf.mxu0
      %1745 = vmatprep.mubr.f32.mxu0 0.0
      %1746 = vmatmul.mubr.f32.gmra.mxu0 %v1654
      %v1747 = vpop.f32.mrf.mxu0
      %v1748 = vadd.f32 0.0, %v1747
      %v1749 = vpop.f32.mrf.mxu0
      %1750 = vmatprep.mubr.f32.mxu0 0.0
      %1751 = vmatmul.mubr.f32.gmra.mxu0 %v1657
      %v1752 = vpop.f32.mrf.mxu0
      %v1753 = vadd.f32 0.0, %v1752
      %v1754 = vpop.f32.mrf.mxu0
      %1755 = vmatprep.mubr.f32.mxu0 0.0
      %1756 = vmatmul.mubr.f32.gmra.mxu0 %v1660
      %v1757 = vpop.f32.mrf.mxu0
      %v1758 = vadd.f32 0.0, %v1757
      %v1759 = vpop.f32.mrf.mxu0
      %1760 = vmatprep.mubr.f32.mxu0 0.0
      %1761 = vmatmul.mubr.f32.gmra.mxu0 %v1663
      %v1762 = vpop.f32.mrf.mxu0
      %v1763 = vadd.f32 0.0, %v1762
      %v1764 = vpop.f32.mrf.mxu0
      %1765 = vmatprep.mubr.f32.mxu0 0.0
      %1766 = vmatmul.mubr.f32.gmra.mxu0 %v1666
      %v1767 = vpop.f32.mrf.mxu0
      %v1768 = vadd.f32 0.0, %v1767
      %v1769 = vpop.f32.mrf.mxu0
      %1770 = vmatprep.mubr.f32.mxu0 0.0
      %1771 = vmatmul.mubr.f32.gmra.mxu0 %v1669
      %v1772 = vpop.f32.mrf.mxu0
      %v1773 = vadd.f32 0.0, %v1772
      %v1774 = vpop.f32.mrf.mxu0
      %1775 = vdwg.mxu0
      %v1776 = vadd.f32 %v1596, %v1738
      %v1777 = vadd.f32 %v1597, %v1743
      %v1778 = vadd.f32 %v1598, %v1748
      %v1779 = vadd.f32 %v1599, %v1753
      %v1780 = vadd.f32 %v1600, %v1758
      %v1781 = vadd.f32 %v1601, %v1763
      %v1782 = vadd.f32 %v1602, %v1768
      %v1783 = vadd.f32 %v1603, %v1773
      %1784 = vset.pattern.permute.xlu0 8
      %1785 = vperm.xlu0 %1784, %v240
      %v1786 = vpop.permute.xlu0 %1785
      %1788 = vset.pattern.permute.xlu0 8
      %1789 = vperm.xlu0 %1788, %v241
      %v1790 = vpop.permute.xlu0 %1789
      %1792 = vset.pattern.permute.xlu0 8
      %1793 = vperm.xlu0 %1792, %v242
      %v1794 = vpop.permute.xlu0 %1793
      %1796 = vset.pattern.permute.xlu0 8
      %1797 = vperm.xlu0 %1796, %v243
      %v1798 = vpop.permute.xlu0 %1797
      %1800 = vset.pattern.permute.xlu0 8
      %1801 = vperm.xlu0 %1800, %v244
      %v1802 = vpop.permute.xlu0 %1801
      %1804 = vset.pattern.permute.xlu0 8
      %1805 = vperm.xlu0 %1804, %v245
      %v1806 = vpop.permute.xlu0 %1805
      %1808 = vset.pattern.permute.xlu0 8
      %1809 = vperm.xlu0 %1808, %v246
      %v1810 = vpop.permute.xlu0 %1809
      %1812 = vset.pattern.permute.xlu0 8
      %1813 = vperm.xlu0 %1812, %v247
      %v1814 = vpop.permute.xlu0 %1813
      %v1816 = vmul.f32 %v631, %v1786
      %v1817 = vmul.f32 %v651, %v1790
      %v1818 = vmul.f32 %v637, %v1794
      %v1819 = vmul.f32 %v639, %v1798
      %v1820 = vmul.f32 %v641, %v1802
      %v1821 = vmul.f32 %v643, %v1806
      %v1822 = vmul.f32 %v644, %v1810
      %v1823 = vmul.f32 %v629, %v1814
      %s1824 = scalar_lea.vmem %s2, 128
      %v1825 = vld [vmem:[%s1824] sm:$0xff]
      %v1826 = vld [vmem:[%s1824 + $0x8] sm:$0xff]
      %v1828 = vsel %vm367, %v1816, 0
      %v1831 = vsel %vm367, %v1817, 0
      %v1834 = vsel %vm367, %v1818, 0
      %v1837 = vsel %vm367, %v1819, 0
      %v1840 = vsel %vm367, %v1820, 0
      %v1843 = vsel %vm367, %v1821, 0
      %v1846 = vsel %vm367, %v1822, 0
      %v1849 = vsel %vm367, %v1823, 0
      %1851 = vmatprep.subr.mxu0 0.0
      %1852 = vmatpush1.msra.mxu0 0.0
      %1853 = vmatprep.subr.mxu0 0.0
      %1854 = vmatpush1.msra.mxu0 0.0
      %1855 = vmatprep.subr.mxu0 0.0
      %1856 = vmatpush1.msra.mxu0 0.0
      %1857 = vmatprep.subr.mxu0 0.0
      %1858 = vmatpush1.msra.mxu0 0.0
      %1859 = vmatprep.subr.mxu0 0.0
      %1860 = vmatpush1.msra.mxu0 0.0
      %1861 = vmatprep.subr.mxu0 0.0
      %1862 = vmatpush1.msra.mxu0 0.0
      %1863 = vmatprep.subr.mxu0 0.0
      %1864 = vmatpush1.msra.mxu0 0.0
      %1865 = vmatprep.subr.mxu0 0.0
      %1866 = vmatpush1.msra.mxu0 0.0
      %1867 = vmatprep.subr.mxu0 0.0
      %1868 = vmatpush1.msra.mxu0 0.0
      %1869 = vmatprep.subr.mxu0 0.0
      %1870 = vmatpush1.msra.mxu0 0.0
      %1871 = vmatprep.subr.mxu0 0.0
      %1872 = vmatpush1.msra.mxu0 0.0
      %1873 = vmatprep.subr.mxu0 0.0
      %1874 = vmatpush1.msra.mxu0 0.0
      %1875 = vmatprep.subr.mxu0 0.0
      %1876 = vmatpush1.msra.mxu0 0.0
      %1877 = vmatprep.subr.mxu0 0.0
      %1878 = vmatpush1.msra.mxu0 0.0
      %1879 = vmatprep.subr.mxu0 0.0
      %1880 = vmatpush1.msra.mxu0 %v1826
      %1881 = vmatprep.subr.mxu0 0.0
      %1882 = vmatpush1.msra.mxu0 %v1825
      %1883 = vmatprep.subr.mxu0 0.0
      %1884 = vmatpush2.msra.mxu0 0.0
      %1885 = vmatprep.subr.mxu0 0.0
      %1886 = vmatpush2.msra.mxu0 0.0
      %1887 = vmatprep.subr.mxu0 0.0
      %1888 = vmatpush2.msra.mxu0 0.0
      %1889 = vmatprep.subr.mxu0 0.0
      %1890 = vmatpush2.msra.mxu0 0.0
      %1891 = vmatprep.subr.mxu0 0.0
      %1892 = vmatpush2.msra.mxu0 0.0
      %1893 = vmatprep.subr.mxu0 0.0
      %1894 = vmatpush2.msra.mxu0 0.0
      %1895 = vmatprep.subr.mxu0 0.0
      %1896 = vmatpush2.msra.mxu0 0.0
      %1897 = vmatprep.subr.mxu0 0.0
      %1898 = vmatpush2.msra.mxu0 0.0
      %1899 = vmatprep.subr.mxu0 0.0
      %1900 = vmatpush2.msra.mxu0 0.0
      %1901 = vmatprep.subr.mxu0 0.0
      %1902 = vmatpush2.msra.mxu0 0.0
      %1903 = vmatprep.subr.mxu0 0.0
      %1904 = vmatpush2.msra.mxu0 0.0
      %1905 = vmatprep.subr.mxu0 0.0
      %1906 = vmatpush2.msra.mxu0 0.0
      %1907 = vmatprep.subr.mxu0 0.0
      %1908 = vmatpush2.msra.mxu0 0.0
      %1909 = vmatprep.subr.mxu0 0.0
      %1910 = vmatpush2.msra.mxu0 0.0
      %1911 = vmatprep.subr.mxu0 0.0
      %1912 = vmatpush2.msra.mxu0 0.0
      %1913 = vmatprep.subr.mxu0 0.0
      %1914 = vmatpush2.msra.mxu0 0.0
      %1915 = vmatprep.mubr.f32.mxu0 0.0
      %1916 = vmatmul.mubr.f32.gmra.mxu0 %v1828
      %v1917 = vpop.f32.mrf.mxu0
      %v1918 = vadd.f32 0.0, %v1917
      %v1919 = vpop.f32.mrf.mxu0
      %1920 = vmatprep.mubr.f32.mxu0 0.0
      %1921 = vmatmul.mubr.f32.gmra.mxu0 %v1831
      %v1922 = vpop.f32.mrf.mxu0
      %v1923 = vadd.f32 0.0, %v1922
      %v1924 = vpop.f32.mrf.mxu0
      %1925 = vmatprep.mubr.f32.mxu0 0.0
      %1926 = vmatmul.mubr.f32.gmra.mxu0 %v1834
      %v1927 = vpop.f32.mrf.mxu0
      %v1928 = vadd.f32 0.0, %v1927
      %v1929 = vpop.f32.mrf.mxu0
      %1930 = vmatprep.mubr.f32.mxu0 0.0
      %1931 = vmatmul.mubr.f32.gmra.mxu0 %v1837
      %v1932 = vpop.f32.mrf.mxu0
      %v1933 = vadd.f32 0.0, %v1932
      %v1934 = vpop.f32.mrf.mxu0
      %1935 = vmatprep.mubr.f32.mxu0 0.0
      %1936 = vmatmul.mubr.f32.gmra.mxu0 %v1840
      %v1937 = vpop.f32.mrf.mxu0
      %v1938 = vadd.f32 0.0, %v1937
      %v1939 = vpop.f32.mrf.mxu0
      %1940 = vmatprep.mubr.f32.mxu0 0.0
      %1941 = vmatmul.mubr.f32.gmra.mxu0 %v1843
      %v1942 = vpop.f32.mrf.mxu0
      %v1943 = vadd.f32 0.0, %v1942
      %v1944 = vpop.f32.mrf.mxu0
      %1945 = vmatprep.mubr.f32.mxu0 0.0
      %1946 = vmatmul.mubr.f32.gmra.mxu0 %v1846
      %v1947 = vpop.f32.mrf.mxu0
      %v1948 = vadd.f32 0.0, %v1947
      %v1949 = vpop.f32.mrf.mxu0
      %1950 = vmatprep.mubr.f32.mxu0 0.0
      %1951 = vmatmul.mubr.f32.gmra.mxu0 %v1849
      %v1952 = vpop.f32.mrf.mxu0
      %v1953 = vadd.f32 0.0, %v1952
      %v1954 = vpop.f32.mrf.mxu0
      %1955 = vdwg.mxu0
      %v1956 = vadd.f32 %v1776, %v1918
      %v1957 = vadd.f32 %v1777, %v1923
      %v1958 = vadd.f32 %v1778, %v1928
      %v1959 = vadd.f32 %v1779, %v1933
      %v1960 = vadd.f32 %v1780, %v1938
      %v1961 = vadd.f32 %v1781, %v1943
      %v1962 = vadd.f32 %v1782, %v1948
      %v1963 = vadd.f32 %v1783, %v1953
      %1964 = vset.pattern.permute.xlu0 9
      %1965 = vperm.xlu0 %1964, %v240
      %v1966 = vpop.permute.xlu0 %1965
      %1968 = vset.pattern.permute.xlu0 9
      %1969 = vperm.xlu0 %1968, %v241
      %v1970 = vpop.permute.xlu0 %1969
      %1972 = vset.pattern.permute.xlu0 9
      %1973 = vperm.xlu0 %1972, %v242
      %v1974 = vpop.permute.xlu0 %1973
      %1976 = vset.pattern.permute.xlu0 9
      %1977 = vperm.xlu0 %1976, %v243
      %v1978 = vpop.permute.xlu0 %1977
      %1980 = vset.pattern.permute.xlu0 9
      %1981 = vperm.xlu0 %1980, %v244
      %v1982 = vpop.permute.xlu0 %1981
      %1984 = vset.pattern.permute.xlu0 9
      %1985 = vperm.xlu0 %1984, %v245
      %v1986 = vpop.permute.xlu0 %1985
      %1988 = vset.pattern.permute.xlu0 9
      %1989 = vperm.xlu0 %1988, %v246
      %v1990 = vpop.permute.xlu0 %1989
      %1992 = vset.pattern.permute.xlu0 9
      %1993 = vperm.xlu0 %1992, %v247
      %v1994 = vpop.permute.xlu0 %1993
      %v1996 = vmul.f32 %v239, %v1966
      %v1997 = vmul.f32 %v225, %v1970
      %v1998 = vmul.f32 %v227, %v1974
      %v1999 = vmul.f32 %v229, %v1978
      %v2000 = vmul.f32 %v231, %v1982
      %v2001 = vmul.f32 %v232, %v1986
      %v2002 = vmul.f32 %v212, %v1990
      %v2003 = vmul.f32 %v214, %v1994
      %s2004 = scalar_lea.vmem %s2, 144
      %v2005 = vld [vmem:[%s2004] sm:$0xff]
      %v2006 = vld [vmem:[%s2004 + $0x8] sm:$0xff]
      %v2008 = vsel %vm367, %v1996, 0
      %v2011 = vsel %vm367, %v1997, 0
      %v2014 = vsel %vm367, %v1998, 0
      %v2017 = vsel %vm367, %v1999, 0
      %v2020 = vsel %vm367, %v2000, 0
      %v2023 = vsel %vm367, %v2001, 0
      %v2026 = vsel %vm367, %v2002, 0
      %v2029 = vsel %vm367, %v2003, 0
      %2031 = vmatprep.subr.mxu0 0.0
      %2032 = vmatpush1.msra.mxu0 0.0
      %2033 = vmatprep.subr.mxu0 0.0
      %2034 = vmatpush1.msra.mxu0 0.0
      %2035 = vmatprep.subr.mxu0 0.0
      %2036 = vmatpush1.msra.mxu0 0.0
      %2037 = vmatprep.subr.mxu0 0.0
      %2038 = vmatpush1.msra.mxu0 0.0
      %2039 = vmatprep.subr.mxu0 0.0
      %2040 = vmatpush1.msra.mxu0 0.0
      %2041 = vmatprep.subr.mxu0 0.0
      %2042 = vmatpush1.msra.mxu0 0.0
      %2043 = vmatprep.subr.mxu0 0.0
      %2044 = vmatpush1.msra.mxu0 0.0
      %2045 = vmatprep.subr.mxu0 0.0
      %2046 = vmatpush1.msra.mxu0 0.0
      %2047 = vmatprep.subr.mxu0 0.0
      %2048 = vmatpush1.msra.mxu0 0.0
      %2049 = vmatprep.subr.mxu0 0.0
      %2050 = vmatpush1.msra.mxu0 0.0
      %2051 = vmatprep.subr.mxu0 0.0
      %2052 = vmatpush1.msra.mxu0 0.0
      %2053 = vmatprep.subr.mxu0 0.0
      %2054 = vmatpush1.msra.mxu0 0.0
      %2055 = vmatprep.subr.mxu0 0.0
      %2056 = vmatpush1.msra.mxu0 0.0
      %2057 = vmatprep.subr.mxu0 0.0
      %2058 = vmatpush1.msra.mxu0 0.0
      %2059 = vmatprep.subr.mxu0 0.0
      %2060 = vmatpush1.msra.mxu0 %v2006
      %2061 = vmatprep.subr.mxu0 0.0
      %2062 = vmatpush1.msra.mxu0 %v2005
      %2063 = vmatprep.subr.mxu0 0.0
      %2064 = vmatpush2.msra.mxu0 0.0
      %2065 = vmatprep.subr.mxu0 0.0
      %2066 = vmatpush2.msra.mxu0 0.0
      %2067 = vmatprep.subr.mxu0 0.0
      %2068 = vmatpush2.msra.mxu0 0.0
      %2069 = vmatprep.subr.mxu0 0.0
      %2070 = vmatpush2.msra.mxu0 0.0
      %2071 = vmatprep.subr.mxu0 0.0
      %2072 = vmatpush2.msra.mxu0 0.0
      %2073 = vmatprep.subr.mxu0 0.0
      %2074 = vmatpush2.msra.mxu0 0.0
      %2075 = vmatprep.subr.mxu0 0.0
      %2076 = vmatpush2.msra.mxu0 0.0
      %2077 = vmatprep.subr.mxu0 0.0
      %2078 = vmatpush2.msra.mxu0 0.0
      %2079 = vmatprep.subr.mxu0 0.0
      %2080 = vmatpush2.msra.mxu0 0.0
      %2081 = vmatprep.subr.mxu0 0.0
      %2082 = vmatpush2.msra.mxu0 0.0
      %2083 = vmatprep.subr.mxu0 0.0
      %2084 = vmatpush2.msra.mxu0 0.0
      %2085 = vmatprep.subr.mxu0 0.0
      %2086 = vmatpush2.msra.mxu0 0.0
      %2087 = vmatprep.subr.mxu0 0.0
      %2088 = vmatpush2.msra.mxu0 0.0
      %2089 = vmatprep.subr.mxu0 0.0
      %2090 = vmatpush2.msra.mxu0 0.0
      %2091 = vmatprep.subr.mxu0 0.0
      %2092 = vmatpush2.msra.mxu0 0.0
      %2093 = vmatprep.subr.mxu0 0.0
      %2094 = vmatpush2.msra.mxu0 0.0
      %2095 = vmatprep.mubr.f32.mxu0 0.0
      %2096 = vmatmul.mubr.f32.gmra.mxu0 %v2008
      %v2097 = vpop.f32.mrf.mxu0
      %v2098 = vadd.f32 0.0, %v2097
      %v2099 = vpop.f32.mrf.mxu0
      %2100 = vmatprep.mubr.f32.mxu0 0.0
      %2101 = vmatmul.mubr.f32.gmra.mxu0 %v2011
      %v2102 = vpop.f32.mrf.mxu0
      %v2103 = vadd.f32 0.0, %v2102
      %v2104 = vpop.f32.mrf.mxu0
      %2105 = vmatprep.mubr.f32.mxu0 0.0
      %2106 = vmatmul.mubr.f32.gmra.mxu0 %v2014
      %v2107 = vpop.f32.mrf.mxu0
      %v2108 = vadd.f32 0.0, %v2107
      %v2109 = vpop.f32.mrf.mxu0
      %2110 = vmatprep.mubr.f32.mxu0 0.0
      %2111 = vmatmul.mubr.f32.gmra.mxu0 %v2017
      %v2112 = vpop.f32.mrf.mxu0
      %v2113 = vadd.f32 0.0, %v2112
      %v2114 = vpop.f32.mrf.mxu0
      %2115 = vmatprep.mubr.f32.mxu0 0.0
      %2116 = vmatmul.mubr.f32.gmra.mxu0 %v2020
      %v2117 = vpop.f32.mrf.mxu0
      %v2118 = vadd.f32 0.0, %v2117
      %v2119 = vpop.f32.mrf.mxu0
      %2120 = vmatprep.mubr.f32.mxu0 0.0
      %2121 = vmatmul.mubr.f32.gmra.mxu0 %v2023
      %v2122 = vpop.f32.mrf.mxu0
      %v2123 = vadd.f32 0.0, %v2122
      %v2124 = vpop.f32.mrf.mxu0
      %2125 = vmatprep.mubr.f32.mxu0 0.0
      %2126 = vmatmul.mubr.f32.gmra.mxu0 %v2026
      %v2127 = vpop.f32.mrf.mxu0
      %v2128 = vadd.f32 0.0, %v2127
      %v2129 = vpop.f32.mrf.mxu0
      %2130 = vmatprep.mubr.f32.mxu0 0.0
      %2131 = vmatmul.mubr.f32.gmra.mxu0 %v2029
      %v2132 = vpop.f32.mrf.mxu0
      %v2133 = vadd.f32 0.0, %v2132
      %v2134 = vpop.f32.mrf.mxu0
      %2135 = vdwg.mxu0
      %v2136 = vadd.f32 %v1956, %v2098
      %v2137 = vadd.f32 %v1957, %v2103
      %v2138 = vadd.f32 %v1958, %v2108
      %v2139 = vadd.f32 %v1959, %v2113
      %v2140 = vadd.f32 %v1960, %v2118
      %v2141 = vadd.f32 %v1961, %v2123
      %v2142 = vadd.f32 %v1962, %v2128
      %v2143 = vadd.f32 %v1963, %v2133
      %2144 = vset.pattern.permute.xlu0 10
      %2145 = vperm.xlu0 %2144, %v240
      %v2146 = vpop.permute.xlu0 %2145
      %2148 = vset.pattern.permute.xlu0 10
      %2149 = vperm.xlu0 %2148, %v241
      %v2150 = vpop.permute.xlu0 %2149
      %2152 = vset.pattern.permute.xlu0 10
      %2153 = vperm.xlu0 %2152, %v242
      %v2154 = vpop.permute.xlu0 %2153
      %2156 = vset.pattern.permute.xlu0 10
      %2157 = vperm.xlu0 %2156, %v243
      %v2158 = vpop.permute.xlu0 %2157
      %2160 = vset.pattern.permute.xlu0 10
      %2161 = vperm.xlu0 %2160, %v244
      %v2162 = vpop.permute.xlu0 %2161
      %2164 = vset.pattern.permute.xlu0 10
      %2165 = vperm.xlu0 %2164, %v245
      %v2166 = vpop.permute.xlu0 %2165
      %2168 = vset.pattern.permute.xlu0 10
      %2169 = vperm.xlu0 %2168, %v246
      %v2170 = vpop.permute.xlu0 %2169
      %2172 = vset.pattern.permute.xlu0 10
      %2173 = vperm.xlu0 %2172, %v247
      %v2174 = vpop.permute.xlu0 %2173
      %v2176 = vmul.f32 %v323, %v2146
      %v2177 = vmul.f32 %v309, %v2150
      %v2178 = vmul.f32 %v311, %v2154
      %v2179 = vmul.f32 %v313, %v2158
      %v2180 = vmul.f32 %v315, %v2162
      %v2181 = vmul.f32 %v316, %v2166
      %v2182 = vmul.f32 %v301, %v2170
      %v2183 = vmul.f32 %v303, %v2174
      %s2184 = scalar_lea.vmem %s2, 160
      %v2185 = vld [vmem:[%s2184] sm:$0xff]
      %v2186 = vld [vmem:[%s2184 + $0x8] sm:$0xff]
      %v2188 = vsel %vm367, %v2176, 0
      %v2191 = vsel %vm367, %v2177, 0
      %v2194 = vsel %vm367, %v2178, 0
      %v2197 = vsel %vm367, %v2179, 0
      %v2200 = vsel %vm367, %v2180, 0
      %v2203 = vsel %vm367, %v2181, 0
      %v2206 = vsel %vm367, %v2182, 0
      %v2209 = vsel %vm367, %v2183, 0
      %2211 = vmatprep.subr.mxu0 0.0
      %2212 = vmatpush1.msra.mxu0 0.0
      %2213 = vmatprep.subr.mxu0 0.0
      %2214 = vmatpush1.msra.mxu0 0.0
      %2215 = vmatprep.subr.mxu0 0.0
      %2216 = vmatpush1.msra.mxu0 0.0
      %2217 = vmatprep.subr.mxu0 0.0
      %2218 = vmatpush1.msra.mxu0 0.0
      %2219 = vmatprep.subr.mxu0 0.0
      %2220 = vmatpush1.msra.mxu0 0.0
      %2221 = vmatprep.subr.mxu0 0.0
      %2222 = vmatpush1.msra.mxu0 0.0
      %2223 = vmatprep.subr.mxu0 0.0
      %2224 = vmatpush1.msra.mxu0 0.0
      %2225 = vmatprep.subr.mxu0 0.0
      %2226 = vmatpush1.msra.mxu0 0.0
      %2227 = vmatprep.subr.mxu0 0.0
      %2228 = vmatpush1.msra.mxu0 0.0
      %2229 = vmatprep.subr.mxu0 0.0
      %2230 = vmatpush1.msra.mxu0 0.0
      %2231 = vmatprep.subr.mxu0 0.0
      %2232 = vmatpush1.msra.mxu0 0.0
      %2233 = vmatprep.subr.mxu0 0.0
      %2234 = vmatpush1.msra.mxu0 0.0
      %2235 = vmatprep.subr.mxu0 0.0
      %2236 = vmatpush1.msra.mxu0 0.0
      %2237 = vmatprep.subr.mxu0 0.0
      %2238 = vmatpush1.msra.mxu0 0.0
      %2239 = vmatprep.subr.mxu0 0.0
      %2240 = vmatpush1.msra.mxu0 %v2186
      %2241 = vmatprep.subr.mxu0 0.0
      %2242 = vmatpush1.msra.mxu0 %v2185
      %2243 = vmatprep.subr.mxu0 0.0
      %2244 = vmatpush2.msra.mxu0 0.0
      %2245 = vmatprep.subr.mxu0 0.0
      %2246 = vmatpush2.msra.mxu0 0.0
      %2247 = vmatprep.subr.mxu0 0.0
      %2248 = vmatpush2.msra.mxu0 0.0
      %2249 = vmatprep.subr.mxu0 0.0
      %2250 = vmatpush2.msra.mxu0 0.0
      %2251 = vmatprep.subr.mxu0 0.0
      %2252 = vmatpush2.msra.mxu0 0.0
      %2253 = vmatprep.subr.mxu0 0.0
      %2254 = vmatpush2.msra.mxu0 0.0
      %2255 = vmatprep.subr.mxu0 0.0
      %2256 = vmatpush2.msra.mxu0 0.0
      %2257 = vmatprep.subr.mxu0 0.0
      %2258 = vmatpush2.msra.mxu0 0.0
      %2259 = vmatprep.subr.mxu0 0.0
      %2260 = vmatpush2.msra.mxu0 0.0
      %2261 = vmatprep.subr.mxu0 0.0
      %2262 = vmatpush2.msra.mxu0 0.0
      %2263 = vmatprep.subr.mxu0 0.0
      %2264 = vmatpush2.msra.mxu0 0.0
      %2265 = vmatprep.subr.mxu0 0.0
      %2266 = vmatpush2.msra.mxu0 0.0
      %2267 = vmatprep.subr.mxu0 0.0
      %2268 = vmatpush2.msra.mxu0 0.0
      %2269 = vmatprep.subr.mxu0 0.0
      %2270 = vmatpush2.msra.mxu0 0.0
      %2271 = vmatprep.subr.mxu0 0.0
      %2272 = vmatpush2.msra.mxu0 0.0
      %2273 = vmatprep.subr.mxu0 0.0
      %2274 = vmatpush2.msra.mxu0 0.0
      %2275 = vmatprep.mubr.f32.mxu0 0.0
      %2276 = vmatmul.mubr.f32.gmra.mxu0 %v2188
      %v2277 = vpop.f32.mrf.mxu0
      %v2278 = vadd.f32 0.0, %v2277
      %v2279 = vpop.f32.mrf.mxu0
      %2280 = vmatprep.mubr.f32.mxu0 0.0
      %2281 = vmatmul.mubr.f32.gmra.mxu0 %v2191
      %v2282 = vpop.f32.mrf.mxu0
      %v2283 = vadd.f32 0.0, %v2282
      %v2284 = vpop.f32.mrf.mxu0
      %2285 = vmatprep.mubr.f32.mxu0 0.0
      %2286 = vmatmul.mubr.f32.gmra.mxu0 %v2194
      %v2287 = vpop.f32.mrf.mxu0
      %v2288 = vadd.f32 0.0, %v2287
      %v2289 = vpop.f32.mrf.mxu0
      %2290 = vmatprep.mubr.f32.mxu0 0.0
      %2291 = vmatmul.mubr.f32.gmra.mxu0 %v2197
      %v2292 = vpop.f32.mrf.mxu0
      %v2293 = vadd.f32 0.0, %v2292
      %v2294 = vpop.f32.mrf.mxu0
      %2295 = vmatprep.mubr.f32.mxu0 0.0
      %2296 = vmatmul.mubr.f32.gmra.mxu0 %v2200
      %v2297 = vpop.f32.mrf.mxu0
      %v2298 = vadd.f32 0.0, %v2297
      %v2299 = vpop.f32.mrf.mxu0
      %2300 = vmatprep.mubr.f32.mxu0 0.0
      %2301 = vmatmul.mubr.f32.gmra.mxu0 %v2203
      %v2302 = vpop.f32.mrf.mxu0
      %v2303 = vadd.f32 0.0, %v2302
      %v2304 = vpop.f32.mrf.mxu0
      %2305 = vmatprep.mubr.f32.mxu0 0.0
      %2306 = vmatmul.mubr.f32.gmra.mxu0 %v2206
      %v2307 = vpop.f32.mrf.mxu0
      %v2308 = vadd.f32 0.0, %v2307
      %v2309 = vpop.f32.mrf.mxu0
      %2310 = vmatprep.mubr.f32.mxu0 0.0
      %2311 = vmatmul.mubr.f32.gmra.mxu0 %v2209
      %v2312 = vpop.f32.mrf.mxu0
      %v2313 = vadd.f32 0.0, %v2312
      %v2314 = vpop.f32.mrf.mxu0
      %2315 = vdwg.mxu0
      %v2316 = vadd.f32 %v2136, %v2278
      %v2317 = vadd.f32 %v2137, %v2283
      %v2318 = vadd.f32 %v2138, %v2288
      %v2319 = vadd.f32 %v2139, %v2293
      %v2320 = vadd.f32 %v2140, %v2298
      %v2321 = vadd.f32 %v2141, %v2303
      %v2322 = vadd.f32 %v2142, %v2308
      %v2323 = vadd.f32 %v2143, %v2313
      %2324 = vset.pattern.permute.xlu0 11
      %2325 = vperm.xlu0 %2324, %v240
      %v2326 = vpop.permute.xlu0 %2325
      %2328 = vset.pattern.permute.xlu0 11
      %2329 = vperm.xlu0 %2328, %v241
      %v2330 = vpop.permute.xlu0 %2329
      %2332 = vset.pattern.permute.xlu0 11
      %2333 = vperm.xlu0 %2332, %v242
      %v2334 = vpop.permute.xlu0 %2333
      %2336 = vset.pattern.permute.xlu0 11
      %2337 = vperm.xlu0 %2336, %v243
      %v2338 = vpop.permute.xlu0 %2337
      %2340 = vset.pattern.permute.xlu0 11
      %2341 = vperm.xlu0 %2340, %v244
      %v2342 = vpop.permute.xlu0 %2341
      %2344 = vset.pattern.permute.xlu0 11
      %2345 = vperm.xlu0 %2344, %v245
      %v2346 = vpop.permute.xlu0 %2345
      %2348 = vset.pattern.permute.xlu0 11
      %2349 = vperm.xlu0 %2348, %v246
      %v2350 = vpop.permute.xlu0 %2349
      %2352 = vset.pattern.permute.xlu0 11
      %2353 = vperm.xlu0 %2352, %v247
      %v2354 = vpop.permute.xlu0 %2353
      %v2356 = vmul.f32 %v651, %v2326
      %v2357 = vmul.f32 %v637, %v2330
      %v2358 = vmul.f32 %v639, %v2334
      %v2359 = vmul.f32 %v641, %v2338
      %v2360 = vmul.f32 %v643, %v2342
      %v2361 = vmul.f32 %v644, %v2346
      %v2362 = vmul.f32 %v629, %v2350
      %v2363 = vmul.f32 %v631, %v2354
      %s2364 = scalar_lea.vmem %s2, 176
      %v2365 = vld [vmem:[%s2364] sm:$0xff]
      %v2366 = vld [vmem:[%s2364 + $0x8] sm:$0xff]
      %v2368 = vsel %vm367, %v2356, 0
      %v2371 = vsel %vm367, %v2357, 0
      %v2374 = vsel %vm367, %v2358, 0
      %v2377 = vsel %vm367, %v2359, 0
      %v2380 = vsel %vm367, %v2360, 0
      %v2383 = vsel %vm367, %v2361, 0
      %v2386 = vsel %vm367, %v2362, 0
      %v2389 = vsel %vm367, %v2363, 0
      %2391 = vmatprep.subr.mxu0 0.0
      %2392 = vmatpush1.msra.mxu0 0.0
      %2393 = vmatprep.subr.mxu0 0.0
      %2394 = vmatpush1.msra.mxu0 0.0
      %2395 = vmatprep.subr.mxu0 0.0
      %2396 = vmatpush1.msra.mxu0 0.0
      %2397 = vmatprep.subr.mxu0 0.0
      %2398 = vmatpush1.msra.mxu0 0.0
      %2399 = vmatprep.subr.mxu0 0.0
      %2400 = vmatpush1.msra.mxu0 0.0
      %2401 = vmatprep.subr.mxu0 0.0
      %2402 = vmatpush1.msra.mxu0 0.0
      %2403 = vmatprep.subr.mxu0 0.0
      %2404 = vmatpush1.msra.mxu0 0.0
      %2405 = vmatprep.subr.mxu0 0.0
      %2406 = vmatpush1.msra.mxu0 0.0
      %2407 = vmatprep.subr.mxu0 0.0
      %2408 = vmatpush1.msra.mxu0 0.0
      %2409 = vmatprep.subr.mxu0 0.0
      %2410 = vmatpush1.msra.mxu0 0.0
      %2411 = vmatprep.subr.mxu0 0.0
      %2412 = vmatpush1.msra.mxu0 0.0
      %2413 = vmatprep.subr.mxu0 0.0
      %2414 = vmatpush1.msra.mxu0 0.0
      %2415 = vmatprep.subr.mxu0 0.0
      %2416 = vmatpush1.msra.mxu0 0.0
      %2417 = vmatprep.subr.mxu0 0.0
      %2418 = vmatpush1.msra.mxu0 0.0
      %2419 = vmatprep.subr.mxu0 0.0
      %2420 = vmatpush1.msra.mxu0 %v2366
      %2421 = vmatprep.subr.mxu0 0.0
      %2422 = vmatpush1.msra.mxu0 %v2365
      %2423 = vmatprep.subr.mxu0 0.0
      %2424 = vmatpush2.msra.mxu0 0.0
      %2425 = vmatprep.subr.mxu0 0.0
      %2426 = vmatpush2.msra.mxu0 0.0
      %2427 = vmatprep.subr.mxu0 0.0
      %2428 = vmatpush2.msra.mxu0 0.0
      %2429 = vmatprep.subr.mxu0 0.0
      %2430 = vmatpush2.msra.mxu0 0.0
      %2431 = vmatprep.subr.mxu0 0.0
      %2432 = vmatpush2.msra.mxu0 0.0
      %2433 = vmatprep.subr.mxu0 0.0
      %2434 = vmatpush2.msra.mxu0 0.0
      %2435 = vmatprep.subr.mxu0 0.0
      %2436 = vmatpush2.msra.mxu0 0.0
      %2437 = vmatprep.subr.mxu0 0.0
      %2438 = vmatpush2.msra.mxu0 0.0
      %2439 = vmatprep.subr.mxu0 0.0
      %2440 = vmatpush2.msra.mxu0 0.0
      %2441 = vmatprep.subr.mxu0 0.0
      %2442 = vmatpush2.msra.mxu0 0.0
      %2443 = vmatprep.subr.mxu0 0.0
      %2444 = vmatpush2.msra.mxu0 0.0
      %2445 = vmatprep.subr.mxu0 0.0
      %2446 = vmatpush2.msra.mxu0 0.0
      %2447 = vmatprep.subr.mxu0 0.0
      %2448 = vmatpush2.msra.mxu0 0.0
      %2449 = vmatprep.subr.mxu0 0.0
      %2450 = vmatpush2.msra.mxu0 0.0
      %2451 = vmatprep.subr.mxu0 0.0
      %2452 = vmatpush2.msra.mxu0 0.0
      %2453 = vmatprep.subr.mxu0 0.0
      %2454 = vmatpush2.msra.mxu0 0.0
      %2455 = vmatprep.mubr.f32.mxu0 0.0
      %2456 = vmatmul.mubr.f32.gmra.mxu0 %v2368
      %v2457 = vpop.f32.mrf.mxu0
      %v2458 = vadd.f32 0.0, %v2457
      %v2459 = vpop.f32.mrf.mxu0
      %2460 = vmatprep.mubr.f32.mxu0 0.0
      %2461 = vmatmul.mubr.f32.gmra.mxu0 %v2371
      %v2462 = vpop.f32.mrf.mxu0
      %v2463 = vadd.f32 0.0, %v2462
      %v2464 = vpop.f32.mrf.mxu0
      %2465 = vmatprep.mubr.f32.mxu0 0.0
      %2466 = vmatmul.mubr.f32.gmra.mxu0 %v2374
      %v2467 = vpop.f32.mrf.mxu0
      %v2468 = vadd.f32 0.0, %v2467
      %v2469 = vpop.f32.mrf.mxu0
      %2470 = vmatprep.mubr.f32.mxu0 0.0
      %2471 = vmatmul.mubr.f32.gmra.mxu0 %v2377
      %v2472 = vpop.f32.mrf.mxu0
      %v2473 = vadd.f32 0.0, %v2472
      %v2474 = vpop.f32.mrf.mxu0
      %2475 = vmatprep.mubr.f32.mxu0 0.0
      %2476 = vmatmul.mubr.f32.gmra.mxu0 %v2380
      %v2477 = vpop.f32.mrf.mxu0
      %v2478 = vadd.f32 0.0, %v2477
      %v2479 = vpop.f32.mrf.mxu0
      %2480 = vmatprep.mubr.f32.mxu0 0.0
      %2481 = vmatmul.mubr.f32.gmra.mxu0 %v2383
      %v2482 = vpop.f32.mrf.mxu0
      %v2483 = vadd.f32 0.0, %v2482
      %v2484 = vpop.f32.mrf.mxu0
      %2485 = vmatprep.mubr.f32.mxu0 0.0
      %2486 = vmatmul.mubr.f32.gmra.mxu0 %v2386
      %v2487 = vpop.f32.mrf.mxu0
      %v2488 = vadd.f32 0.0, %v2487
      %v2489 = vpop.f32.mrf.mxu0
      %2490 = vmatprep.mubr.f32.mxu0 0.0
      %2491 = vmatmul.mubr.f32.gmra.mxu0 %v2389
      %v2492 = vpop.f32.mrf.mxu0
      %v2493 = vadd.f32 0.0, %v2492
      %v2494 = vpop.f32.mrf.mxu0
      %2495 = vdwg.mxu0
      %v2496 = vadd.f32 %v2316, %v2458
      %v2497 = vadd.f32 %v2317, %v2463
      %v2498 = vadd.f32 %v2318, %v2468
      %v2499 = vadd.f32 %v2319, %v2473
      %v2500 = vadd.f32 %v2320, %v2478
      %v2501 = vadd.f32 %v2321, %v2483
      %v2502 = vadd.f32 %v2322, %v2488
      %v2503 = vadd.f32 %v2323, %v2493
      %2504 = vset.pattern.permute.xlu0 12
      %2505 = vperm.xlu0 %2504, %v240
      %v2506 = vpop.permute.xlu0 %2505
      %2508 = vset.pattern.permute.xlu0 12
      %2509 = vperm.xlu0 %2508, %v241
      %v2510 = vpop.permute.xlu0 %2509
      %2512 = vset.pattern.permute.xlu0 12
      %2513 = vperm.xlu0 %2512, %v242
      %v2514 = vpop.permute.xlu0 %2513
      %2516 = vset.pattern.permute.xlu0 12
      %2517 = vperm.xlu0 %2516, %v243
      %v2518 = vpop.permute.xlu0 %2517
      %2520 = vset.pattern.permute.xlu0 12
      %2521 = vperm.xlu0 %2520, %v244
      %v2522 = vpop.permute.xlu0 %2521
      %2524 = vset.pattern.permute.xlu0 12
      %2525 = vperm.xlu0 %2524, %v245
      %v2526 = vpop.permute.xlu0 %2525
      %2528 = vset.pattern.permute.xlu0 12
      %2529 = vperm.xlu0 %2528, %v246
      %v2530 = vpop.permute.xlu0 %2529
      %2532 = vset.pattern.permute.xlu0 12
      %2533 = vperm.xlu0 %2532, %v247
      %v2534 = vpop.permute.xlu0 %2533
      %v2536 = vmul.f32 %v857, %v2506
      %v2537 = vmul.f32 %v843, %v2510
      %v2538 = vmul.f32 %v845, %v2514
      %v2539 = vmul.f32 %v847, %v2518
      %v2540 = vmul.f32 %v849, %v2522
      %v2541 = vmul.f32 %v850, %v2526
      %v2542 = vmul.f32 %v835, %v2530
      %v2543 = vmul.f32 %v837, %v2534
      %s2544 = scalar_lea.vmem %s2, 192
      %v2545 = vld [vmem:[%s2544] sm:$0xff]
      %v2546 = vld [vmem:[%s2544 + $0x8] sm:$0xff]
      %v2548 = vsel %vm367, %v2536, 0
      %v2551 = vsel %vm367, %v2537, 0
      %v2554 = vsel %vm367, %v2538, 0
      %v2557 = vsel %vm367, %v2539, 0
      %v2560 = vsel %vm367, %v2540, 0
      %v2563 = vsel %vm367, %v2541, 0
      %v2566 = vsel %vm367, %v2542, 0
      %v2569 = vsel %vm367, %v2543, 0
      %2571 = vmatprep.subr.mxu0 0.0
      %2572 = vmatpush1.msra.mxu0 0.0
      %2573 = vmatprep.subr.mxu0 0.0
      %2574 = vmatpush1.msra.mxu0 0.0
      %2575 = vmatprep.subr.mxu0 0.0
      %2576 = vmatpush1.msra.mxu0 0.0
      %2577 = vmatprep.subr.mxu0 0.0
      %2578 = vmatpush1.msra.mxu0 0.0
      %2579 = vmatprep.subr.mxu0 0.0
      %2580 = vmatpush1.msra.mxu0 0.0
      %2581 = vmatprep.subr.mxu0 0.0
      %2582 = vmatpush1.msra.mxu0 0.0
      %2583 = vmatprep.subr.mxu0 0.0
      %2584 = vmatpush1.msra.mxu0 0.0
      %2585 = vmatprep.subr.mxu0 0.0
      %2586 = vmatpush1.msra.mxu0 0.0
      %2587 = vmatprep.subr.mxu0 0.0
      %2588 = vmatpush1.msra.mxu0 0.0
      %2589 = vmatprep.subr.mxu0 0.0
      %2590 = vmatpush1.msra.mxu0 0.0
      %2591 = vmatprep.subr.mxu0 0.0
      %2592 = vmatpush1.msra.mxu0 0.0
      %2593 = vmatprep.subr.mxu0 0.0
      %2594 = vmatpush1.msra.mxu0 0.0
      %2595 = vmatprep.subr.mxu0 0.0
      %2596 = vmatpush1.msra.mxu0 0.0
      %2597 = vmatprep.subr.mxu0 0.0
      %2598 = vmatpush1.msra.mxu0 0.0
      %2599 = vmatprep.subr.mxu0 0.0
      %2600 = vmatpush1.msra.mxu0 %v2546
      %2601 = vmatprep.subr.mxu0 0.0
      %2602 = vmatpush1.msra.mxu0 %v2545
      %2603 = vmatprep.subr.mxu0 0.0
      %2604 = vmatpush2.msra.mxu0 0.0
      %2605 = vmatprep.subr.mxu0 0.0
      %2606 = vmatpush2.msra.mxu0 0.0
      %2607 = vmatprep.subr.mxu0 0.0
      %2608 = vmatpush2.msra.mxu0 0.0
      %2609 = vmatprep.subr.mxu0 0.0
      %2610 = vmatpush2.msra.mxu0 0.0
      %2611 = vmatprep.subr.mxu0 0.0
      %2612 = vmatpush2.msra.mxu0 0.0
      %2613 = vmatprep.subr.mxu0 0.0
      %2614 = vmatpush2.msra.mxu0 0.0
      %2615 = vmatprep.subr.mxu0 0.0
      %2616 = vmatpush2.msra.mxu0 0.0
      %2617 = vmatprep.subr.mxu0 0.0
      %2618 = vmatpush2.msra.mxu0 0.0
      %2619 = vmatprep.subr.mxu0 0.0
      %2620 = vmatpush2.msra.mxu0 0.0
      %2621 = vmatprep.subr.mxu0 0.0
      %2622 = vmatpush2.msra.mxu0 0.0
      %2623 = vmatprep.subr.mxu0 0.0
      %2624 = vmatpush2.msra.mxu0 0.0
      %2625 = vmatprep.subr.mxu0 0.0
      %2626 = vmatpush2.msra.mxu0 0.0
      %2627 = vmatprep.subr.mxu0 0.0
      %2628 = vmatpush2.msra.mxu0 0.0
      %2629 = vmatprep.subr.mxu0 0.0
      %2630 = vmatpush2.msra.mxu0 0.0
      %2631 = vmatprep.subr.mxu0 0.0
      %2632 = vmatpush2.msra.mxu0 0.0
      %2633 = vmatprep.subr.mxu0 0.0
      %2634 = vmatpush2.msra.mxu0 0.0
      %2635 = vmatprep.mubr.f32.mxu0 0.0
      %2636 = vmatmul.mubr.f32.gmra.mxu0 %v2548
      %v2637 = vpop.f32.mrf.mxu0
      %v2638 = vadd.f32 0.0, %v2637
      %v2639 = vpop.f32.mrf.mxu0
      %2640 = vmatprep.mubr.f32.mxu0 0.0
      %2641 = vmatmul.mubr.f32.gmra.mxu0 %v2551
      %v2642 = vpop.f32.mrf.mxu0
      %v2643 = vadd.f32 0.0, %v2642
      %v2644 = vpop.f32.mrf.mxu0
      %2645 = vmatprep.mubr.f32.mxu0 0.0
      %2646 = vmatmul.mubr.f32.gmra.mxu0 %v2554
      %v2647 = vpop.f32.mrf.mxu0
      %v2648 = vadd.f32 0.0, %v2647
      %v2649 = vpop.f32.mrf.mxu0
      %2650 = vmatprep.mubr.f32.mxu0 0.0
      %2651 = vmatmul.mubr.f32.gmra.mxu0 %v2557
      %v2652 = vpop.f32.mrf.mxu0
      %v2653 = vadd.f32 0.0, %v2652
      %v2654 = vpop.f32.mrf.mxu0
      %2655 = vmatprep.mubr.f32.mxu0 0.0
      %2656 = vmatmul.mubr.f32.gmra.mxu0 %v2560
      %v2657 = vpop.f32.mrf.mxu0
      %v2658 = vadd.f32 0.0, %v2657
      %v2659 = vpop.f32.mrf.mxu0
      %2660 = vmatprep.mubr.f32.mxu0 0.0
      %2661 = vmatmul.mubr.f32.gmra.mxu0 %v2563
      %v2662 = vpop.f32.mrf.mxu0
      %v2663 = vadd.f32 0.0, %v2662
      %v2664 = vpop.f32.mrf.mxu0
      %2665 = vmatprep.mubr.f32.mxu0 0.0
      %2666 = vmatmul.mubr.f32.gmra.mxu0 %v2566
      %v2667 = vpop.f32.mrf.mxu0
      %v2668 = vadd.f32 0.0, %v2667
      %v2669 = vpop.f32.mrf.mxu0
      %2670 = vmatprep.mubr.f32.mxu0 0.0
      %2671 = vmatmul.mubr.f32.gmra.mxu0 %v2569
      %v2672 = vpop.f32.mrf.mxu0
      %v2673 = vadd.f32 0.0, %v2672
      %v2674 = vpop.f32.mrf.mxu0
      %2675 = vdwg.mxu0
      %v2676 = vadd.f32 %v2496, %v2638
      %v2677 = vadd.f32 %v2497, %v2643
      %v2678 = vadd.f32 %v2498, %v2648
      %v2679 = vadd.f32 %v2499, %v2653
      %v2680 = vadd.f32 %v2500, %v2658
      %v2681 = vadd.f32 %v2501, %v2663
      %v2682 = vadd.f32 %v2502, %v2668
      %v2683 = vadd.f32 %v2503, %v2673
      %2684 = vset.pattern.permute.xlu0 13
      %2685 = vperm.xlu0 %2684, %v240
      %v2686 = vpop.permute.xlu0 %2685
      %2688 = vset.pattern.permute.xlu0 13
      %2689 = vperm.xlu0 %2688, %v241
      %v2690 = vpop.permute.xlu0 %2689
      %2692 = vset.pattern.permute.xlu0 13
      %2693 = vperm.xlu0 %2692, %v242
      %v2694 = vpop.permute.xlu0 %2693
      %2696 = vset.pattern.permute.xlu0 13
      %2697 = vperm.xlu0 %2696, %v243
      %v2698 = vpop.permute.xlu0 %2697
      %2700 = vset.pattern.permute.xlu0 13
      %2701 = vperm.xlu0 %2700, %v244
      %v2702 = vpop.permute.xlu0 %2701
      %2704 = vset.pattern.permute.xlu0 13
      %2705 = vperm.xlu0 %2704, %v245
      %v2706 = vpop.permute.xlu0 %2705
      %2708 = vset.pattern.permute.xlu0 13
      %2709 = vperm.xlu0 %2708, %v246
      %v2710 = vpop.permute.xlu0 %2709
      %2712 = vset.pattern.permute.xlu0 13
      %2713 = vperm.xlu0 %2712, %v247
      %v2714 = vpop.permute.xlu0 %2713
      %v2716 = vmul.f32 %v198, %v2686
      %v2717 = vmul.f32 %v199, %v2690
      %v2718 = vmul.f32 %v200, %v2694
      %v2719 = vmul.f32 %v201, %v2698
      %v2720 = vmul.f32 %v202, %v2702
      %v2721 = vmul.f32 %v203, %v2706
      %v2722 = vmul.f32 %v204, %v2710
      %v2723 = vmul.f32 %v205, %v2714
      %s2724 = scalar_lea.vmem %s2, 208
      %v2725 = vld [vmem:[%s2724] sm:$0xff]
      %v2726 = vld [vmem:[%s2724 + $0x8] sm:$0xff]
      %v2728 = vsel %vm367, %v2716, 0
      %v2731 = vsel %vm367, %v2717, 0
      %v2734 = vsel %vm367, %v2718, 0
      %v2737 = vsel %vm367, %v2719, 0
      %v2740 = vsel %vm367, %v2720, 0
      %v2743 = vsel %vm367, %v2721, 0
      %v2746 = vsel %vm367, %v2722, 0
      %v2749 = vsel %vm367, %v2723, 0
      %2751 = vmatprep.subr.mxu0 0.0
      %2752 = vmatpush1.msra.mxu0 0.0
      %2753 = vmatprep.subr.mxu0 0.0
      %2754 = vmatpush1.msra.mxu0 0.0
      %2755 = vmatprep.subr.mxu0 0.0
      %2756 = vmatpush1.msra.mxu0 0.0
      %2757 = vmatprep.subr.mxu0 0.0
      %2758 = vmatpush1.msra.mxu0 0.0
      %2759 = vmatprep.subr.mxu0 0.0
      %2760 = vmatpush1.msra.mxu0 0.0
      %2761 = vmatprep.subr.mxu0 0.0
      %2762 = vmatpush1.msra.mxu0 0.0
      %2763 = vmatprep.subr.mxu0 0.0
      %2764 = vmatpush1.msra.mxu0 0.0
      %2765 = vmatprep.subr.mxu0 0.0
      %2766 = vmatpush1.msra.mxu0 0.0
      %2767 = vmatprep.subr.mxu0 0.0
      %2768 = vmatpush1.msra.mxu0 0.0
      %2769 = vmatprep.subr.mxu0 0.0
      %2770 = vmatpush1.msra.mxu0 0.0
      %2771 = vmatprep.subr.mxu0 0.0
      %2772 = vmatpush1.msra.mxu0 0.0
      %2773 = vmatprep.subr.mxu0 0.0
      %2774 = vmatpush1.msra.mxu0 0.0
      %2775 = vmatprep.subr.mxu0 0.0
      %2776 = vmatpush1.msra.mxu0 0.0
      %2777 = vmatprep.subr.mxu0 0.0
      %2778 = vmatpush1.msra.mxu0 0.0
      %2779 = vmatprep.subr.mxu0 0.0
      %2780 = vmatpush1.msra.mxu0 %v2726
      %2781 = vmatprep.subr.mxu0 0.0
      %2782 = vmatpush1.msra.mxu0 %v2725
      %2783 = vmatprep.subr.mxu0 0.0
      %2784 = vmatpush2.msra.mxu0 0.0
      %2785 = vmatprep.subr.mxu0 0.0
      %2786 = vmatpush2.msra.mxu0 0.0
      %2787 = vmatprep.subr.mxu0 0.0
      %2788 = vmatpush2.msra.mxu0 0.0
      %2789 = vmatprep.subr.mxu0 0.0
      %2790 = vmatpush2.msra.mxu0 0.0
      %2791 = vmatprep.subr.mxu0 0.0
      %2792 = vmatpush2.msra.mxu0 0.0
      %2793 = vmatprep.subr.mxu0 0.0
      %2794 = vmatpush2.msra.mxu0 0.0
      %2795 = vmatprep.subr.mxu0 0.0
      %2796 = vmatpush2.msra.mxu0 0.0
      %2797 = vmatprep.subr.mxu0 0.0
      %2798 = vmatpush2.msra.mxu0 0.0
      %2799 = vmatprep.subr.mxu0 0.0
      %2800 = vmatpush2.msra.mxu0 0.0
      %2801 = vmatprep.subr.mxu0 0.0
      %2802 = vmatpush2.msra.mxu0 0.0
      %2803 = vmatprep.subr.mxu0 0.0
      %2804 = vmatpush2.msra.mxu0 0.0
      %2805 = vmatprep.subr.mxu0 0.0
      %2806 = vmatpush2.msra.mxu0 0.0
      %2807 = vmatprep.subr.mxu0 0.0
      %2808 = vmatpush2.msra.mxu0 0.0
      %2809 = vmatprep.subr.mxu0 0.0
      %2810 = vmatpush2.msra.mxu0 0.0
      %2811 = vmatprep.subr.mxu0 0.0
      %2812 = vmatpush2.msra.mxu0 0.0
      %2813 = vmatprep.subr.mxu0 0.0
      %2814 = vmatpush2.msra.mxu0 0.0
      %2815 = vmatprep.mubr.f32.mxu0 0.0
      %2816 = vmatmul.mubr.f32.gmra.mxu0 %v2728
      %v2817 = vpop.f32.mrf.mxu0
      %v2818 = vadd.f32 0.0, %v2817
      %v2819 = vpop.f32.mrf.mxu0
      %2820 = vmatprep.mubr.f32.mxu0 0.0
      %2821 = vmatmul.mubr.f32.gmra.mxu0 %v2731
      %v2822 = vpop.f32.mrf.mxu0
      %v2823 = vadd.f32 0.0, %v2822
      %v2824 = vpop.f32.mrf.mxu0
      %2825 = vmatprep.mubr.f32.mxu0 0.0
      %2826 = vmatmul.mubr.f32.gmra.mxu0 %v2734
      %v2827 = vpop.f32.mrf.mxu0
      %v2828 = vadd.f32 0.0, %v2827
      %v2829 = vpop.f32.mrf.mxu0
      %2830 = vmatprep.mubr.f32.mxu0 0.0
      %2831 = vmatmul.mubr.f32.gmra.mxu0 %v2737
      %v2832 = vpop.f32.mrf.mxu0
      %v2833 = vadd.f32 0.0, %v2832
      %v2834 = vpop.f32.mrf.mxu0
      %2835 = vmatprep.mubr.f32.mxu0 0.0
      %2836 = vmatmul.mubr.f32.gmra.mxu0 %v2740
      %v2837 = vpop.f32.mrf.mxu0
      %v2838 = vadd.f32 0.0, %v2837
      %v2839 = vpop.f32.mrf.mxu0
      %2840 = vmatprep.mubr.f32.mxu0 0.0
      %2841 = vmatmul.mubr.f32.gmra.mxu0 %v2743
      %v2842 = vpop.f32.mrf.mxu0
      %v2843 = vadd.f32 0.0, %v2842
      %v2844 = vpop.f32.mrf.mxu0
      %2845 = vmatprep.mubr.f32.mxu0 0.0
      %2846 = vmatmul.mubr.f32.gmra.mxu0 %v2746
      %v2847 = vpop.f32.mrf.mxu0
      %v2848 = vadd.f32 0.0, %v2847
      %v2849 = vpop.f32.mrf.mxu0
      %2850 = vmatprep.mubr.f32.mxu0 0.0
      %2851 = vmatmul.mubr.f32.gmra.mxu0 %v2749
      %v2852 = vpop.f32.mrf.mxu0
      %v2853 = vadd.f32 0.0, %v2852
      %v2854 = vpop.f32.mrf.mxu0
      %2855 = vdwg.mxu0
      %v2856 = vadd.f32 %v2676, %v2818
      %v2857 = vadd.f32 %v2677, %v2823
      %v2858 = vadd.f32 %v2678, %v2828
      %v2859 = vadd.f32 %v2679, %v2833
      %v2860 = vadd.f32 %v2680, %v2838
      %v2861 = vadd.f32 %v2681, %v2843
      %v2862 = vadd.f32 %v2682, %v2848
      %v2863 = vadd.f32 %v2683, %v2853
      %2864 = vset.pattern.permute.xlu0 14
      %2865 = vperm.xlu0 %2864, %v240
      %v2866 = vpop.permute.xlu0 %2865
      %2868 = vset.pattern.permute.xlu0 14
      %2869 = vperm.xlu0 %2868, %v241
      %v2870 = vpop.permute.xlu0 %2869
      %2872 = vset.pattern.permute.xlu0 14
      %2873 = vperm.xlu0 %2872, %v242
      %v2874 = vpop.permute.xlu0 %2873
      %2876 = vset.pattern.permute.xlu0 14
      %2877 = vperm.xlu0 %2876, %v243
      %v2878 = vpop.permute.xlu0 %2877
      %2880 = vset.pattern.permute.xlu0 14
      %2881 = vperm.xlu0 %2880, %v244
      %v2882 = vpop.permute.xlu0 %2881
      %2884 = vset.pattern.permute.xlu0 14
      %2885 = vperm.xlu0 %2884, %v245
      %v2886 = vpop.permute.xlu0 %2885
      %2888 = vset.pattern.permute.xlu0 14
      %2889 = vperm.xlu0 %2888, %v246
      %v2890 = vpop.permute.xlu0 %2889
      %2892 = vset.pattern.permute.xlu0 14
      %2893 = vperm.xlu0 %2892, %v247
      %v2894 = vpop.permute.xlu0 %2893
      %v2896 = vmul.f32 %v1226, %v2866
      %v2897 = vmul.f32 %v1228, %v2870
      %v2898 = vmul.f32 %v1230, %v2874
      %v2899 = vmul.f32 %v1232, %v2878
      %v2900 = vmul.f32 %v1234, %v2882
      %v2901 = vmul.f32 %v1235, %v2886
      %v2902 = vmul.f32 %v1221, %v2890
      %v2903 = vmul.f32 %v1243, %v2894
      %s2904 = scalar_lea.vmem %s2, 224
      %v2905 = vld [vmem:[%s2904] sm:$0xff]
      %v2906 = vld [vmem:[%s2904 + $0x8] sm:$0xff]
      %v2908 = vsel %vm367, %v2896, 0
      %v2911 = vsel %vm367, %v2897, 0
      %v2914 = vsel %vm367, %v2898, 0
      %v2917 = vsel %vm367, %v2899, 0
      %v2920 = vsel %vm367, %v2900, 0
      %v2923 = vsel %vm367, %v2901, 0
      %v2926 = vsel %vm367, %v2902, 0
      %v2929 = vsel %vm367, %v2903, 0
      %2931 = vmatprep.subr.mxu0 0.0
      %2932 = vmatpush1.msra.mxu0 0.0
      %2933 = vmatprep.subr.mxu0 0.0
      %2934 = vmatpush1.msra.mxu0 0.0
      %2935 = vmatprep.subr.mxu0 0.0
      %2936 = vmatpush1.msra.mxu0 0.0
      %2937 = vmatprep.subr.mxu0 0.0
      %2938 = vmatpush1.msra.mxu0 0.0
      %2939 = vmatprep.subr.mxu0 0.0
      %2940 = vmatpush1.msra.mxu0 0.0
      %2941 = vmatprep.subr.mxu0 0.0
      %2942 = vmatpush1.msra.mxu0 0.0
      %2943 = vmatprep.subr.mxu0 0.0
      %2944 = vmatpush1.msra.mxu0 0.0
      %2945 = vmatprep.subr.mxu0 0.0
      %2946 = vmatpush1.msra.mxu0 0.0
      %2947 = vmatprep.subr.mxu0 0.0
      %2948 = vmatpush1.msra.mxu0 0.0
      %2949 = vmatprep.subr.mxu0 0.0
      %2950 = vmatpush1.msra.mxu0 0.0
      %2951 = vmatprep.subr.mxu0 0.0
      %2952 = vmatpush1.msra.mxu0 0.0
      %2953 = vmatprep.subr.mxu0 0.0
      %2954 = vmatpush1.msra.mxu0 0.0
      %2955 = vmatprep.subr.mxu0 0.0
      %2956 = vmatpush1.msra.mxu0 0.0
      %2957 = vmatprep.subr.mxu0 0.0
      %2958 = vmatpush1.msra.mxu0 0.0
      %2959 = vmatprep.subr.mxu0 0.0
      %2960 = vmatpush1.msra.mxu0 %v2906
      %2961 = vmatprep.subr.mxu0 0.0
      %2962 = vmatpush1.msra.mxu0 %v2905
      %2963 = vmatprep.subr.mxu0 0.0
      %2964 = vmatpush2.msra.mxu0 0.0
      %2965 = vmatprep.subr.mxu0 0.0
      %2966 = vmatpush2.msra.mxu0 0.0
      %2967 = vmatprep.subr.mxu0 0.0
      %2968 = vmatpush2.msra.mxu0 0.0
      %2969 = vmatprep.subr.mxu0 0.0
      %2970 = vmatpush2.msra.mxu0 0.0
      %2971 = vmatprep.subr.mxu0 0.0
      %2972 = vmatpush2.msra.mxu0 0.0
      %2973 = vmatprep.subr.mxu0 0.0
      %2974 = vmatpush2.msra.mxu0 0.0
      %2975 = vmatprep.subr.mxu0 0.0
      %2976 = vmatpush2.msra.mxu0 0.0
      %2977 = vmatprep.subr.mxu0 0.0
      %2978 = vmatpush2.msra.mxu0 0.0
      %2979 = vmatprep.subr.mxu0 0.0
      %2980 = vmatpush2.msra.mxu0 0.0
      %2981 = vmatprep.subr.mxu0 0.0
      %2982 = vmatpush2.msra.mxu0 0.0
      %2983 = vmatprep.subr.mxu0 0.0
      %2984 = vmatpush2.msra.mxu0 0.0
      %2985 = vmatprep.subr.mxu0 0.0
      %2986 = vmatpush2.msra.mxu0 0.0
      %2987 = vmatprep.subr.mxu0 0.0
      %2988 = vmatpush2.msra.mxu0 0.0
      %2989 = vmatprep.subr.mxu0 0.0
      %2990 = vmatpush2.msra.mxu0 0.0
      %2991 = vmatprep.subr.mxu0 0.0
      %2992 = vmatpush2.msra.mxu0 0.0
      %2993 = vmatprep.subr.mxu0 0.0
      %2994 = vmatpush2.msra.mxu0 0.0
      %2995 = vmatprep.mubr.f32.mxu0 0.0
      %2996 = vmatmul.mubr.f32.gmra.mxu0 %v2908
      %v2997 = vpop.f32.mrf.mxu0
      %v2998 = vadd.f32 0.0, %v2997
      %v2999 = vpop.f32.mrf.mxu0
      %3000 = vmatprep.mubr.f32.mxu0 0.0
      %3001 = vmatmul.mubr.f32.gmra.mxu0 %v2911
      %v3002 = vpop.f32.mrf.mxu0
      %v3003 = vadd.f32 0.0, %v3002
      %v3004 = vpop.f32.mrf.mxu0
      %3005 = vmatprep.mubr.f32.mxu0 0.0
      %3006 = vmatmul.mubr.f32.gmra.mxu0 %v2914
      %v3007 = vpop.f32.mrf.mxu0
      %v3008 = vadd.f32 0.0, %v3007
      %v3009 = vpop.f32.mrf.mxu0
      %3010 = vmatprep.mubr.f32.mxu0 0.0
      %3011 = vmatmul.mubr.f32.gmra.mxu0 %v2917
      %v3012 = vpop.f32.mrf.mxu0
      %v3013 = vadd.f32 0.0, %v3012
      %v3014 = vpop.f32.mrf.mxu0
      %3015 = vmatprep.mubr.f32.mxu0 0.0
      %3016 = vmatmul.mubr.f32.gmra.mxu0 %v2920
      %v3017 = vpop.f32.mrf.mxu0
      %v3018 = vadd.f32 0.0, %v3017
      %v3019 = vpop.f32.mrf.mxu0
      %3020 = vmatprep.mubr.f32.mxu0 0.0
      %3021 = vmatmul.mubr.f32.gmra.mxu0 %v2923
      %v3022 = vpop.f32.mrf.mxu0
      %v3023 = vadd.f32 0.0, %v3022
      %v3024 = vpop.f32.mrf.mxu0
      %3025 = vmatprep.mubr.f32.mxu0 0.0
      %3026 = vmatmul.mubr.f32.gmra.mxu0 %v2926
      %v3027 = vpop.f32.mrf.mxu0
      %v3028 = vadd.f32 0.0, %v3027
      %v3029 = vpop.f32.mrf.mxu0
      %3030 = vmatprep.mubr.f32.mxu0 0.0
      %3031 = vmatmul.mubr.f32.gmra.mxu0 %v2929
      %v3032 = vpop.f32.mrf.mxu0
      %v3033 = vadd.f32 0.0, %v3032
      %v3034 = vpop.f32.mrf.mxu0
      %3035 = vdwg.mxu0
      %v3036 = vadd.f32 %v2856, %v2998
      %v3037 = vadd.f32 %v2857, %v3003
      %v3038 = vadd.f32 %v2858, %v3008
      %v3039 = vadd.f32 %v2859, %v3013
      %v3040 = vadd.f32 %v2860, %v3018
      %v3041 = vadd.f32 %v2861, %v3023
      %v3042 = vadd.f32 %v2862, %v3028
      %v3043 = vadd.f32 %v2863, %v3033
      %3044 = vset.pattern.permute.xlu0 15
      %3045 = vperm.xlu0 %3044, %v240
      %v3046 = vpop.permute.xlu0 %3045
      %3048 = vset.pattern.permute.xlu0 15
      %3049 = vperm.xlu0 %3048, %v241
      %v3050 = vpop.permute.xlu0 %3049
      %3052 = vset.pattern.permute.xlu0 15
      %3053 = vperm.xlu0 %3052, %v242
      %v3054 = vpop.permute.xlu0 %3053
      %3056 = vset.pattern.permute.xlu0 15
      %3057 = vperm.xlu0 %3056, %v243
      %v3058 = vpop.permute.xlu0 %3057
      %3060 = vset.pattern.permute.xlu0 15
      %3061 = vperm.xlu0 %3060, %v244
      %v3062 = vpop.permute.xlu0 %3061
      %3064 = vset.pattern.permute.xlu0 15
      %3065 = vperm.xlu0 %3064, %v245
      %v3066 = vpop.permute.xlu0 %3065
      %3068 = vset.pattern.permute.xlu0 15
      %3069 = vperm.xlu0 %3068, %v246
      %v3070 = vpop.permute.xlu0 %3069
      %3072 = vset.pattern.permute.xlu0 15
      %3073 = vperm.xlu0 %3072, %v247
      %v3074 = vpop.permute.xlu0 %3073
      %v3076 = vmul.f32 %v225, %v3046
      %v3077 = vmul.f32 %v227, %v3050
      %v3078 = vmul.f32 %v229, %v3054
      %v3079 = vmul.f32 %v231, %v3058
      %v3080 = vmul.f32 %v232, %v3062
      %v3081 = vmul.f32 %v212, %v3066
      %v3082 = vmul.f32 %v214, %v3070
      %v3083 = vmul.f32 %v239, %v3074
      %s3084 = scalar_lea.vmem %s2, 240
      %v3085 = vld [vmem:[%s3084] sm:$0xff]
      %v3086 = vld [vmem:[%s3084 + $0x8] sm:$0xff]
      %v3088 = vsel %vm367, %v3076, 0
      %v3091 = vsel %vm367, %v3077, 0
      %v3094 = vsel %vm367, %v3078, 0
      %v3097 = vsel %vm367, %v3079, 0
      %v3100 = vsel %vm367, %v3080, 0
      %v3103 = vsel %vm367, %v3081, 0
      %v3106 = vsel %vm367, %v3082, 0
      %v3109 = vsel %vm367, %v3083, 0
      %3111 = vmatprep.subr.mxu0 0.0
      %3112 = vmatpush1.msra.mxu0 0.0
      %3113 = vmatprep.subr.mxu0 0.0
      %3114 = vmatpush1.msra.mxu0 0.0
      %3115 = vmatprep.subr.mxu0 0.0
      %3116 = vmatpush1.msra.mxu0 0.0
      %3117 = vmatprep.subr.mxu0 0.0
      %3118 = vmatpush1.msra.mxu0 0.0
      %3119 = vmatprep.subr.mxu0 0.0
      %3120 = vmatpush1.msra.mxu0 0.0
      %3121 = vmatprep.subr.mxu0 0.0
      %3122 = vmatpush1.msra.mxu0 0.0
      %3123 = vmatprep.subr.mxu0 0.0
      %3124 = vmatpush1.msra.mxu0 0.0
      %3125 = vmatprep.subr.mxu0 0.0
      %3126 = vmatpush1.msra.mxu0 0.0
      %3127 = vmatprep.subr.mxu0 0.0
      %3128 = vmatpush1.msra.mxu0 0.0
      %3129 = vmatprep.subr.mxu0 0.0
      %3130 = vmatpush1.msra.mxu0 0.0
      %3131 = vmatprep.subr.mxu0 0.0
      %3132 = vmatpush1.msra.mxu0 0.0
      %3133 = vmatprep.subr.mxu0 0.0
      %3134 = vmatpush1.msra.mxu0 0.0
      %3135 = vmatprep.subr.mxu0 0.0
      %3136 = vmatpush1.msra.mxu0 0.0
      %3137 = vmatprep.subr.mxu0 0.0
      %3138 = vmatpush1.msra.mxu0 0.0
      %3139 = vmatprep.subr.mxu0 0.0
      %3140 = vmatpush1.msra.mxu0 %v3086
      %3141 = vmatprep.subr.mxu0 0.0
      %3142 = vmatpush1.msra.mxu0 %v3085
      %3143 = vmatprep.subr.mxu0 0.0
      %3144 = vmatpush2.msra.mxu0 0.0
      %3145 = vmatprep.subr.mxu0 0.0
      %3146 = vmatpush2.msra.mxu0 0.0
      %3147 = vmatprep.subr.mxu0 0.0
      %3148 = vmatpush2.msra.mxu0 0.0
      %3149 = vmatprep.subr.mxu0 0.0
      %3150 = vmatpush2.msra.mxu0 0.0
      %3151 = vmatprep.subr.mxu0 0.0
      %3152 = vmatpush2.msra.mxu0 0.0
      %3153 = vmatprep.subr.mxu0 0.0
      %3154 = vmatpush2.msra.mxu0 0.0
      %3155 = vmatprep.subr.mxu0 0.0
      %3156 = vmatpush2.msra.mxu0 0.0
      %3157 = vmatprep.subr.mxu0 0.0
      %3158 = vmatpush2.msra.mxu0 0.0
      %3159 = vmatprep.subr.mxu0 0.0
      %3160 = vmatpush2.msra.mxu0 0.0
      %3161 = vmatprep.subr.mxu0 0.0
      %3162 = vmatpush2.msra.mxu0 0.0
      %3163 = vmatprep.subr.mxu0 0.0
      %3164 = vmatpush2.msra.mxu0 0.0
      %3165 = vmatprep.subr.mxu0 0.0
      %3166 = vmatpush2.msra.mxu0 0.0
      %3167 = vmatprep.subr.mxu0 0.0
      %3168 = vmatpush2.msra.mxu0 0.0
      %3169 = vmatprep.subr.mxu0 0.0
      %3170 = vmatpush2.msra.mxu0 0.0
      %3171 = vmatprep.subr.mxu0 0.0
      %3172 = vmatpush2.msra.mxu0 0.0
      %3173 = vmatprep.subr.mxu0 0.0
      %3174 = vmatpush2.msra.mxu0 0.0
      %3175 = vmatprep.mubr.f32.mxu0 0.0
      %3176 = vmatmul.mubr.f32.gmra.mxu0 %v3088
      %v3177 = vpop.f32.mrf.mxu0
      %v3178 = vadd.f32 0.0, %v3177
      %v3179 = vpop.f32.mrf.mxu0
      %3180 = vmatprep.mubr.f32.mxu0 0.0
      %3181 = vmatmul.mubr.f32.gmra.mxu0 %v3091
      %v3182 = vpop.f32.mrf.mxu0
      %v3183 = vadd.f32 0.0, %v3182
      %v3184 = vpop.f32.mrf.mxu0
      %3185 = vmatprep.mubr.f32.mxu0 0.0
      %3186 = vmatmul.mubr.f32.gmra.mxu0 %v3094
      %v3187 = vpop.f32.mrf.mxu0
      %v3188 = vadd.f32 0.0, %v3187
      %v3189 = vpop.f32.mrf.mxu0
      %3190 = vmatprep.mubr.f32.mxu0 0.0
      %3191 = vmatmul.mubr.f32.gmra.mxu0 %v3097
      %v3192 = vpop.f32.mrf.mxu0
      %v3193 = vadd.f32 0.0, %v3192
      %v3194 = vpop.f32.mrf.mxu0
      %3195 = vmatprep.mubr.f32.mxu0 0.0
      %3196 = vmatmul.mubr.f32.gmra.mxu0 %v3100
      %v3197 = vpop.f32.mrf.mxu0
      %v3198 = vadd.f32 0.0, %v3197
      %v3199 = vpop.f32.mrf.mxu0
      %3200 = vmatprep.mubr.f32.mxu0 0.0
      %3201 = vmatmul.mubr.f32.gmra.mxu0 %v3103
      %v3202 = vpop.f32.mrf.mxu0
      %v3203 = vadd.f32 0.0, %v3202
      %v3204 = vpop.f32.mrf.mxu0
      %3205 = vmatprep.mubr.f32.mxu0 0.0
      %3206 = vmatmul.mubr.f32.gmra.mxu0 %v3106
      %v3207 = vpop.f32.mrf.mxu0
      %v3208 = vadd.f32 0.0, %v3207
      %v3209 = vpop.f32.mrf.mxu0
      %3210 = vmatprep.mubr.f32.mxu0 0.0
      %3211 = vmatmul.mubr.f32.gmra.mxu0 %v3109
      %v3212 = vpop.f32.mrf.mxu0
      %v3213 = vadd.f32 0.0, %v3212
      %v3214 = vpop.f32.mrf.mxu0
      %3215 = vdwg.mxu0
      %v3216 = vadd.f32 %v3036, %v3178
      %v3217 = vadd.f32 %v3037, %v3183
      %v3218 = vadd.f32 %v3038, %v3188
      %v3219 = vadd.f32 %v3039, %v3193
      %v3220 = vadd.f32 %v3040, %v3198
      %v3221 = vadd.f32 %v3041, %v3203
      %v3222 = vadd.f32 %v3042, %v3208
      %v3223 = vadd.f32 %v3043, %v3213
      %3224 = vset.pattern.permute.xlu0 16
      %3225 = vperm.xlu0 %3224, %v240
      %v3226 = vpop.permute.xlu0 %3225
      %3228 = vset.pattern.permute.xlu0 16
      %3229 = vperm.xlu0 %3228, %v241
      %v3230 = vpop.permute.xlu0 %3229
      %3232 = vset.pattern.permute.xlu0 16
      %3233 = vperm.xlu0 %3232, %v242
      %v3234 = vpop.permute.xlu0 %3233
      %3236 = vset.pattern.permute.xlu0 16
      %3237 = vperm.xlu0 %3236, %v243
      %v3238 = vpop.permute.xlu0 %3237
      %3240 = vset.pattern.permute.xlu0 16
      %3241 = vperm.xlu0 %3240, %v244
      %v3242 = vpop.permute.xlu0 %3241
      %3244 = vset.pattern.permute.xlu0 16
      %3245 = vperm.xlu0 %3244, %v245
      %v3246 = vpop.permute.xlu0 %3245
      %3248 = vset.pattern.permute.xlu0 16
      %3249 = vperm.xlu0 %3248, %v246
      %v3250 = vpop.permute.xlu0 %3249
      %3252 = vset.pattern.permute.xlu0 16
      %3253 = vperm.xlu0 %3252, %v247
      %v3254 = vpop.permute.xlu0 %3253
      %v3256 = vmul.f32 %v309, %v3226
      %v3257 = vmul.f32 %v311, %v3230
      %v3258 = vmul.f32 %v313, %v3234
      %v3259 = vmul.f32 %v315, %v3238
      %v3260 = vmul.f32 %v316, %v3242
      %v3261 = vmul.f32 %v301, %v3246
      %v3262 = vmul.f32 %v303, %v3250
      %v3263 = vmul.f32 %v323, %v3254
      %s3264 = scalar_lea.vmem %s2, 256
      %v3265 = vld [vmem:[%s3264] sm:$0xff]
      %v3266 = vld [vmem:[%s3264 + $0x8] sm:$0xff]
      %v3268 = vsel %vm367, %v3256, 0
      %v3271 = vsel %vm367, %v3257, 0
      %v3274 = vsel %vm367, %v3258, 0
      %v3277 = vsel %vm367, %v3259, 0
      %v3280 = vsel %vm367, %v3260, 0
      %v3283 = vsel %vm367, %v3261, 0
      %v3286 = vsel %vm367, %v3262, 0
      %v3289 = vsel %vm367, %v3263, 0
      %3291 = vmatprep.subr.mxu0 0.0
      %3292 = vmatpush1.msra.mxu0 0.0
      %3293 = vmatprep.subr.mxu0 0.0
      %3294 = vmatpush1.msra.mxu0 0.0
      %3295 = vmatprep.subr.mxu0 0.0
      %3296 = vmatpush1.msra.mxu0 0.0
      %3297 = vmatprep.subr.mxu0 0.0
      %3298 = vmatpush1.msra.mxu0 0.0
      %3299 = vmatprep.subr.mxu0 0.0
      %3300 = vmatpush1.msra.mxu0 0.0
      %3301 = vmatprep.subr.mxu0 0.0
      %3302 = vmatpush1.msra.mxu0 0.0
      %3303 = vmatprep.subr.mxu0 0.0
      %3304 = vmatpush1.msra.mxu0 0.0
      %3305 = vmatprep.subr.mxu0 0.0
      %3306 = vmatpush1.msra.mxu0 0.0
      %3307 = vmatprep.subr.mxu0 0.0
      %3308 = vmatpush1.msra.mxu0 0.0
      %3309 = vmatprep.subr.mxu0 0.0
      %3310 = vmatpush1.msra.mxu0 0.0
      %3311 = vmatprep.subr.mxu0 0.0
      %3312 = vmatpush1.msra.mxu0 0.0
      %3313 = vmatprep.subr.mxu0 0.0
      %3314 = vmatpush1.msra.mxu0 0.0
      %3315 = vmatprep.subr.mxu0 0.0
      %3316 = vmatpush1.msra.mxu0 0.0
      %3317 = vmatprep.subr.mxu0 0.0
      %3318 = vmatpush1.msra.mxu0 0.0
      %3319 = vmatprep.subr.mxu0 0.0
      %3320 = vmatpush1.msra.mxu0 %v3266
      %3321 = vmatprep.subr.mxu0 0.0
      %3322 = vmatpush1.msra.mxu0 %v3265
      %3323 = vmatprep.subr.mxu0 0.0
      %3324 = vmatpush2.msra.mxu0 0.0
      %3325 = vmatprep.subr.mxu0 0.0
      %3326 = vmatpush2.msra.mxu0 0.0
      %3327 = vmatprep.subr.mxu0 0.0
      %3328 = vmatpush2.msra.mxu0 0.0
      %3329 = vmatprep.subr.mxu0 0.0
      %3330 = vmatpush2.msra.mxu0 0.0
      %3331 = vmatprep.subr.mxu0 0.0
      %3332 = vmatpush2.msra.mxu0 0.0
      %3333 = vmatprep.subr.mxu0 0.0
      %3334 = vmatpush2.msra.mxu0 0.0
      %3335 = vmatprep.subr.mxu0 0.0
      %3336 = vmatpush2.msra.mxu0 0.0
      %3337 = vmatprep.subr.mxu0 0.0
      %3338 = vmatpush2.msra.mxu0 0.0
      %3339 = vmatprep.subr.mxu0 0.0
      %3340 = vmatpush2.msra.mxu0 0.0
      %3341 = vmatprep.subr.mxu0 0.0
      %3342 = vmatpush2.msra.mxu0 0.0
      %3343 = vmatprep.subr.mxu0 0.0
      %3344 = vmatpush2.msra.mxu0 0.0
      %3345 = vmatprep.subr.mxu0 0.0
      %3346 = vmatpush2.msra.mxu0 0.0
      %3347 = vmatprep.subr.mxu0 0.0
      %3348 = vmatpush2.msra.mxu0 0.0
      %3349 = vmatprep.subr.mxu0 0.0
      %3350 = vmatpush2.msra.mxu0 0.0
      %3351 = vmatprep.subr.mxu0 0.0
      %3352 = vmatpush2.msra.mxu0 0.0
      %3353 = vmatprep.subr.mxu0 0.0
      %3354 = vmatpush2.msra.mxu0 0.0
      %3355 = vmatprep.mubr.f32.mxu0 0.0
      %3356 = vmatmul.mubr.f32.gmra.mxu0 %v3268
      %v3357 = vpop.f32.mrf.mxu0
      %v3358 = vadd.f32 0.0, %v3357
      %v3359 = vpop.f32.mrf.mxu0
      %3360 = vmatprep.mubr.f32.mxu0 0.0
      %3361 = vmatmul.mubr.f32.gmra.mxu0 %v3271
      %v3362 = vpop.f32.mrf.mxu0
      %v3363 = vadd.f32 0.0, %v3362
      %v3364 = vpop.f32.mrf.mxu0
      %3365 = vmatprep.mubr.f32.mxu0 0.0
      %3366 = vmatmul.mubr.f32.gmra.mxu0 %v3274
      %v3367 = vpop.f32.mrf.mxu0
      %v3368 = vadd.f32 0.0, %v3367
      %v3369 = vpop.f32.mrf.mxu0
      %3370 = vmatprep.mubr.f32.mxu0 0.0
      %3371 = vmatmul.mubr.f32.gmra.mxu0 %v3277
      %v3372 = vpop.f32.mrf.mxu0
      %v3373 = vadd.f32 0.0, %v3372
      %v3374 = vpop.f32.mrf.mxu0
      %3375 = vmatprep.mubr.f32.mxu0 0.0
      %3376 = vmatmul.mubr.f32.gmra.mxu0 %v3280
      %v3377 = vpop.f32.mrf.mxu0
      %v3378 = vadd.f32 0.0, %v3377
      %v3379 = vpop.f32.mrf.mxu0
      %3380 = vmatprep.mubr.f32.mxu0 0.0
      %3381 = vmatmul.mubr.f32.gmra.mxu0 %v3283
      %v3382 = vpop.f32.mrf.mxu0
      %v3383 = vadd.f32 0.0, %v3382
      %v3384 = vpop.f32.mrf.mxu0
      %3385 = vmatprep.mubr.f32.mxu0 0.0
      %3386 = vmatmul.mubr.f32.gmra.mxu0 %v3286
      %v3387 = vpop.f32.mrf.mxu0
      %v3388 = vadd.f32 0.0, %v3387
      %v3389 = vpop.f32.mrf.mxu0
      %3390 = vmatprep.mubr.f32.mxu0 0.0
      %3391 = vmatmul.mubr.f32.gmra.mxu0 %v3289
      %v3392 = vpop.f32.mrf.mxu0
      %v3393 = vadd.f32 0.0, %v3392
      %v3394 = vpop.f32.mrf.mxu0
      %3395 = vdwg.mxu0
      %v3396 = vadd.f32 %v3216, %v3358
      %v3397 = vadd.f32 %v3217, %v3363
      %v3398 = vadd.f32 %v3218, %v3368
      %v3399 = vadd.f32 %v3219, %v3373
      %v3400 = vadd.f32 %v3220, %v3378
      %v3401 = vadd.f32 %v3221, %v3383
      %v3402 = vadd.f32 %v3222, %v3388
      %v3403 = vadd.f32 %v3223, %v3393
      %3404 = vset.pattern.permute.xlu0 17
      %3405 = vperm.xlu0 %3404, %v240
      %v3406 = vpop.permute.xlu0 %3405
      %3408 = vset.pattern.permute.xlu0 17
      %3409 = vperm.xlu0 %3408, %v241
      %v3410 = vpop.permute.xlu0 %3409
      %3412 = vset.pattern.permute.xlu0 17
      %3413 = vperm.xlu0 %3412, %v242
      %v3414 = vpop.permute.xlu0 %3413
      %3416 = vset.pattern.permute.xlu0 17
      %3417 = vperm.xlu0 %3416, %v243
      %v3418 = vpop.permute.xlu0 %3417
      %3420 = vset.pattern.permute.xlu0 17
      %3421 = vperm.xlu0 %3420, %v244
      %v3422 = vpop.permute.xlu0 %3421
      %3424 = vset.pattern.permute.xlu0 17
      %3425 = vperm.xlu0 %3424, %v245
      %v3426 = vpop.permute.xlu0 %3425
      %3428 = vset.pattern.permute.xlu0 17
      %3429 = vperm.xlu0 %3428, %v246
      %v3430 = vpop.permute.xlu0 %3429
      %3432 = vset.pattern.permute.xlu0 17
      %3433 = vperm.xlu0 %3432, %v247
      %v3434 = vpop.permute.xlu0 %3433
      %v3436 = vmul.f32 %v637, %v3406
      %v3437 = vmul.f32 %v639, %v3410
      %v3438 = vmul.f32 %v641, %v3414
      %v3439 = vmul.f32 %v643, %v3418
      %v3440 = vmul.f32 %v644, %v3422
      %v3441 = vmul.f32 %v629, %v3426
      %v3442 = vmul.f32 %v631, %v3430
      %v3443 = vmul.f32 %v651, %v3434
      %s3444 = scalar_lea.vmem %s2, 272
      %v3445 = vld [vmem:[%s3444] sm:$0xff]
      %v3446 = vld [vmem:[%s3444 + $0x8] sm:$0xff]
      %v3448 = vsel %vm367, %v3436, 0
      %v3451 = vsel %vm367, %v3437, 0
      %v3454 = vsel %vm367, %v3438, 0
      %v3457 = vsel %vm367, %v3439, 0
      %v3460 = vsel %vm367, %v3440, 0
      %v3463 = vsel %vm367, %v3441, 0
      %v3466 = vsel %vm367, %v3442, 0
      %v3469 = vsel %vm367, %v3443, 0
      %3471 = vmatprep.subr.mxu0 0.0
      %3472 = vmatpush1.msra.mxu0 0.0
      %3473 = vmatprep.subr.mxu0 0.0
      %3474 = vmatpush1.msra.mxu0 0.0
      %3475 = vmatprep.subr.mxu0 0.0
      %3476 = vmatpush1.msra.mxu0 0.0
      %3477 = vmatprep.subr.mxu0 0.0
      %3478 = vmatpush1.msra.mxu0 0.0
      %3479 = vmatprep.subr.mxu0 0.0
      %3480 = vmatpush1.msra.mxu0 0.0
      %3481 = vmatprep.subr.mxu0 0.0
      %3482 = vmatpush1.msra.mxu0 0.0
      %3483 = vmatprep.subr.mxu0 0.0
      %3484 = vmatpush1.msra.mxu0 0.0
      %3485 = vmatprep.subr.mxu0 0.0
      %3486 = vmatpush1.msra.mxu0 0.0
      %3487 = vmatprep.subr.mxu0 0.0
      %3488 = vmatpush1.msra.mxu0 0.0
      %3489 = vmatprep.subr.mxu0 0.0
      %3490 = vmatpush1.msra.mxu0 0.0
      %3491 = vmatprep.subr.mxu0 0.0
      %3492 = vmatpush1.msra.mxu0 0.0
      %3493 = vmatprep.subr.mxu0 0.0
      %3494 = vmatpush1.msra.mxu0 0.0
      %3495 = vmatprep.subr.mxu0 0.0
      %3496 = vmatpush1.msra.mxu0 0.0
      %3497 = vmatprep.subr.mxu0 0.0
      %3498 = vmatpush1.msra.mxu0 0.0
      %3499 = vmatprep.subr.mxu0 0.0
      %3500 = vmatpush1.msra.mxu0 %v3446
      %3501 = vmatprep.subr.mxu0 0.0
      %3502 = vmatpush1.msra.mxu0 %v3445
      %3503 = vmatprep.subr.mxu0 0.0
      %3504 = vmatpush2.msra.mxu0 0.0
      %3505 = vmatprep.subr.mxu0 0.0
      %3506 = vmatpush2.msra.mxu0 0.0
      %3507 = vmatprep.subr.mxu0 0.0
      %3508 = vmatpush2.msra.mxu0 0.0
      %3509 = vmatprep.subr.mxu0 0.0
      %3510 = vmatpush2.msra.mxu0 0.0
      %3511 = vmatprep.subr.mxu0 0.0
      %3512 = vmatpush2.msra.mxu0 0.0
      %3513 = vmatprep.subr.mxu0 0.0
      %3514 = vmatpush2.msra.mxu0 0.0
      %3515 = vmatprep.subr.mxu0 0.0
      %3516 = vmatpush2.msra.mxu0 0.0
      %3517 = vmatprep.subr.mxu0 0.0
      %3518 = vmatpush2.msra.mxu0 0.0
      %3519 = vmatprep.subr.mxu0 0.0
      %3520 = vmatpush2.msra.mxu0 0.0
      %3521 = vmatprep.subr.mxu0 0.0
      %3522 = vmatpush2.msra.mxu0 0.0
      %3523 = vmatprep.subr.mxu0 0.0
      %3524 = vmatpush2.msra.mxu0 0.0
      %3525 = vmatprep.subr.mxu0 0.0
      %3526 = vmatpush2.msra.mxu0 0.0
      %3527 = vmatprep.subr.mxu0 0.0
      %3528 = vmatpush2.msra.mxu0 0.0
      %3529 = vmatprep.subr.mxu0 0.0
      %3530 = vmatpush2.msra.mxu0 0.0
      %3531 = vmatprep.subr.mxu0 0.0
      %3532 = vmatpush2.msra.mxu0 0.0
      %3533 = vmatprep.subr.mxu0 0.0
      %3534 = vmatpush2.msra.mxu0 0.0
      %3535 = vmatprep.mubr.f32.mxu0 0.0
      %3536 = vmatmul.mubr.f32.gmra.mxu0 %v3448
      %v3537 = vpop.f32.mrf.mxu0
      %v3538 = vadd.f32 0.0, %v3537
      %v3539 = vpop.f32.mrf.mxu0
      %3540 = vmatprep.mubr.f32.mxu0 0.0
      %3541 = vmatmul.mubr.f32.gmra.mxu0 %v3451
      %v3542 = vpop.f32.mrf.mxu0
      %v3543 = vadd.f32 0.0, %v3542
      %v3544 = vpop.f32.mrf.mxu0
      %3545 = vmatprep.mubr.f32.mxu0 0.0
      %3546 = vmatmul.mubr.f32.gmra.mxu0 %v3454
      %v3547 = vpop.f32.mrf.mxu0
      %v3548 = vadd.f32 0.0, %v3547
      %v3549 = vpop.f32.mrf.mxu0
      %3550 = vmatprep.mubr.f32.mxu0 0.0
      %3551 = vmatmul.mubr.f32.gmra.mxu0 %v3457
      %v3552 = vpop.f32.mrf.mxu0
      %v3553 = vadd.f32 0.0, %v3552
      %v3554 = vpop.f32.mrf.mxu0
      %3555 = vmatprep.mubr.f32.mxu0 0.0
      %3556 = vmatmul.mubr.f32.gmra.mxu0 %v3460
      %v3557 = vpop.f32.mrf.mxu0
      %v3558 = vadd.f32 0.0, %v3557
      %v3559 = vpop.f32.mrf.mxu0
      %3560 = vmatprep.mubr.f32.mxu0 0.0
      %3561 = vmatmul.mubr.f32.gmra.mxu0 %v3463
      %v3562 = vpop.f32.mrf.mxu0
      %v3563 = vadd.f32 0.0, %v3562
      %v3564 = vpop.f32.mrf.mxu0
      %3565 = vmatprep.mubr.f32.mxu0 0.0
      %3566 = vmatmul.mubr.f32.gmra.mxu0 %v3466
      %v3567 = vpop.f32.mrf.mxu0
      %v3568 = vadd.f32 0.0, %v3567
      %v3569 = vpop.f32.mrf.mxu0
      %3570 = vmatprep.mubr.f32.mxu0 0.0
      %3571 = vmatmul.mubr.f32.gmra.mxu0 %v3469
      %v3572 = vpop.f32.mrf.mxu0
      %v3573 = vadd.f32 0.0, %v3572
      %v3574 = vpop.f32.mrf.mxu0
      %3575 = vdwg.mxu0
      %v3576 = vadd.f32 %v3396, %v3538
      %v3577 = vadd.f32 %v3397, %v3543
      %v3578 = vadd.f32 %v3398, %v3548
      %v3579 = vadd.f32 %v3399, %v3553
      %v3580 = vadd.f32 %v3400, %v3558
      %v3581 = vadd.f32 %v3401, %v3563
      %v3582 = vadd.f32 %v3402, %v3568
      %v3583 = vadd.f32 %v3403, %v3573
      %3584 = vset.pattern.permute.xlu0 18
      %3585 = vperm.xlu0 %3584, %v240
      %v3586 = vpop.permute.xlu0 %3585
      %3588 = vset.pattern.permute.xlu0 18
      %3589 = vperm.xlu0 %3588, %v241
      %v3590 = vpop.permute.xlu0 %3589
      %3592 = vset.pattern.permute.xlu0 18
      %3593 = vperm.xlu0 %3592, %v242
      %v3594 = vpop.permute.xlu0 %3593
      %3596 = vset.pattern.permute.xlu0 18
      %3597 = vperm.xlu0 %3596, %v243
      %v3598 = vpop.permute.xlu0 %3597
      %3600 = vset.pattern.permute.xlu0 18
      %3601 = vperm.xlu0 %3600, %v244
      %v3602 = vpop.permute.xlu0 %3601
      %3604 = vset.pattern.permute.xlu0 18
      %3605 = vperm.xlu0 %3604, %v245
      %v3606 = vpop.permute.xlu0 %3605
      %3608 = vset.pattern.permute.xlu0 18
      %3609 = vperm.xlu0 %3608, %v246
      %v3610 = vpop.permute.xlu0 %3609
      %3612 = vset.pattern.permute.xlu0 18
      %3613 = vperm.xlu0 %3612, %v247
      %v3614 = vpop.permute.xlu0 %3613
      %v3616 = vmul.f32 %v227, %v3586
      %v3617 = vmul.f32 %v229, %v3590
      %v3618 = vmul.f32 %v231, %v3594
      %v3619 = vmul.f32 %v232, %v3598
      %v3620 = vmul.f32 %v212, %v3602
      %v3621 = vmul.f32 %v214, %v3606
      %v3622 = vmul.f32 %v239, %v3610
      %v3623 = vmul.f32 %v225, %v3614
      %s3624 = scalar_lea.vmem %s2, 288
      %v3625 = vld [vmem:[%s3624] sm:$0xff]
      %v3626 = vld [vmem:[%s3624 + $0x8] sm:$0xff]
      %v3628 = vsel %vm367, %v3616, 0
      %v3631 = vsel %vm367, %v3617, 0
      %v3634 = vsel %vm367, %v3618, 0
      %v3637 = vsel %vm367, %v3619, 0
      %v3640 = vsel %vm367, %v3620, 0
      %v3643 = vsel %vm367, %v3621, 0
      %v3646 = vsel %vm367, %v3622, 0
      %v3649 = vsel %vm367, %v3623, 0
      %3651 = vmatprep.subr.mxu0 0.0
      %3652 = vmatpush1.msra.mxu0 0.0
      %3653 = vmatprep.subr.mxu0 0.0
      %3654 = vmatpush1.msra.mxu0 0.0
      %3655 = vmatprep.subr.mxu0 0.0
      %3656 = vmatpush1.msra.mxu0 0.0
      %3657 = vmatprep.subr.mxu0 0.0
      %3658 = vmatpush1.msra.mxu0 0.0
      %3659 = vmatprep.subr.mxu0 0.0
      %3660 = vmatpush1.msra.mxu0 0.0
      %3661 = vmatprep.subr.mxu0 0.0
      %3662 = vmatpush1.msra.mxu0 0.0
      %3663 = vmatprep.subr.mxu0 0.0
      %3664 = vmatpush1.msra.mxu0 0.0
      %3665 = vmatprep.subr.mxu0 0.0
      %3666 = vmatpush1.msra.mxu0 0.0
      %3667 = vmatprep.subr.mxu0 0.0
      %3668 = vmatpush1.msra.mxu0 0.0
      %3669 = vmatprep.subr.mxu0 0.0
      %3670 = vmatpush1.msra.mxu0 0.0
      %3671 = vmatprep.subr.mxu0 0.0
      %3672 = vmatpush1.msra.mxu0 0.0
      %3673 = vmatprep.subr.mxu0 0.0
      %3674 = vmatpush1.msra.mxu0 0.0
      %3675 = vmatprep.subr.mxu0 0.0
      %3676 = vmatpush1.msra.mxu0 0.0
      %3677 = vmatprep.subr.mxu0 0.0
      %3678 = vmatpush1.msra.mxu0 0.0
      %3679 = vmatprep.subr.mxu0 0.0
      %3680 = vmatpush1.msra.mxu0 %v3626
      %3681 = vmatprep.subr.mxu0 0.0
      %3682 = vmatpush1.msra.mxu0 %v3625
      %3683 = vmatprep.subr.mxu0 0.0
      %3684 = vmatpush2.msra.mxu0 0.0
      %3685 = vmatprep.subr.mxu0 0.0
      %3686 = vmatpush2.msra.mxu0 0.0
      %3687 = vmatprep.subr.mxu0 0.0
      %3688 = vmatpush2.msra.mxu0 0.0
      %3689 = vmatprep.subr.mxu0 0.0
      %3690 = vmatpush2.msra.mxu0 0.0
      %3691 = vmatprep.subr.mxu0 0.0
      %3692 = vmatpush2.msra.mxu0 0.0
      %3693 = vmatprep.subr.mxu0 0.0
      %3694 = vmatpush2.msra.mxu0 0.0
      %3695 = vmatprep.subr.mxu0 0.0
      %3696 = vmatpush2.msra.mxu0 0.0
      %3697 = vmatprep.subr.mxu0 0.0
      %3698 = vmatpush2.msra.mxu0 0.0
      %3699 = vmatprep.subr.mxu0 0.0
      %3700 = vmatpush2.msra.mxu0 0.0
      %3701 = vmatprep.subr.mxu0 0.0
      %3702 = vmatpush2.msra.mxu0 0.0
      %3703 = vmatprep.subr.mxu0 0.0
      %3704 = vmatpush2.msra.mxu0 0.0
      %3705 = vmatprep.subr.mxu0 0.0
      %3706 = vmatpush2.msra.mxu0 0.0
      %3707 = vmatprep.subr.mxu0 0.0
      %3708 = vmatpush2.msra.mxu0 0.0
      %3709 = vmatprep.subr.mxu0 0.0
      %3710 = vmatpush2.msra.mxu0 0.0
      %3711 = vmatprep.subr.mxu0 0.0
      %3712 = vmatpush2.msra.mxu0 0.0
      %3713 = vmatprep.subr.mxu0 0.0
      %3714 = vmatpush2.msra.mxu0 0.0
      %3715 = vmatprep.mubr.f32.mxu0 0.0
      %3716 = vmatmul.mubr.f32.gmra.mxu0 %v3628
      %v3717 = vpop.f32.mrf.mxu0
      %v3718 = vadd.f32 0.0, %v3717
      %v3719 = vpop.f32.mrf.mxu0
      %3720 = vmatprep.mubr.f32.mxu0 0.0
      %3721 = vmatmul.mubr.f32.gmra.mxu0 %v3631
      %v3722 = vpop.f32.mrf.mxu0
      %v3723 = vadd.f32 0.0, %v3722
      %v3724 = vpop.f32.mrf.mxu0
      %3725 = vmatprep.mubr.f32.mxu0 0.0
      %3726 = vmatmul.mubr.f32.gmra.mxu0 %v3634
      %v3727 = vpop.f32.mrf.mxu0
      %v3728 = vadd.f32 0.0, %v3727
      %v3729 = vpop.f32.mrf.mxu0
      %3730 = vmatprep.mubr.f32.mxu0 0.0
      %3731 = vmatmul.mubr.f32.gmra.mxu0 %v3637
      %v3732 = vpop.f32.mrf.mxu0
      %v3733 = vadd.f32 0.0, %v3732
      %v3734 = vpop.f32.mrf.mxu0
      %3735 = vmatprep.mubr.f32.mxu0 0.0
      %3736 = vmatmul.mubr.f32.gmra.mxu0 %v3640
      %v3737 = vpop.f32.mrf.mxu0
      %v3738 = vadd.f32 0.0, %v3737
      %v3739 = vpop.f32.mrf.mxu0
      %3740 = vmatprep.mubr.f32.mxu0 0.0
      %3741 = vmatmul.mubr.f32.gmra.mxu0 %v3643
      %v3742 = vpop.f32.mrf.mxu0
      %v3743 = vadd.f32 0.0, %v3742
      %v3744 = vpop.f32.mrf.mxu0
      %3745 = vmatprep.mubr.f32.mxu0 0.0
      %3746 = vmatmul.mubr.f32.gmra.mxu0 %v3646
      %v3747 = vpop.f32.mrf.mxu0
      %v3748 = vadd.f32 0.0, %v3747
      %v3749 = vpop.f32.mrf.mxu0
      %3750 = vmatprep.mubr.f32.mxu0 0.0
      %3751 = vmatmul.mubr.f32.gmra.mxu0 %v3649
      %v3752 = vpop.f32.mrf.mxu0
      %v3753 = vadd.f32 0.0, %v3752
      %v3754 = vpop.f32.mrf.mxu0
      %3755 = vdwg.mxu0
      %v3756 = vadd.f32 %v3576, %v3718
      %v3757 = vadd.f32 %v3577, %v3723
      %v3758 = vadd.f32 %v3578, %v3728
      %v3759 = vadd.f32 %v3579, %v3733
      %v3760 = vadd.f32 %v3580, %v3738
      %v3761 = vadd.f32 %v3581, %v3743
      %v3762 = vadd.f32 %v3582, %v3748
      %v3763 = vadd.f32 %v3583, %v3753
      %3764 = vset.pattern.permute.xlu0 19
      %3765 = vperm.xlu0 %3764, %v240
      %v3766 = vpop.permute.xlu0 %3765
      %3768 = vset.pattern.permute.xlu0 19
      %3769 = vperm.xlu0 %3768, %v241
      %v3770 = vpop.permute.xlu0 %3769
      %3772 = vset.pattern.permute.xlu0 19
      %3773 = vperm.xlu0 %3772, %v242
      %v3774 = vpop.permute.xlu0 %3773
      %3776 = vset.pattern.permute.xlu0 19
      %3777 = vperm.xlu0 %3776, %v243
      %v3778 = vpop.permute.xlu0 %3777
      %3780 = vset.pattern.permute.xlu0 19
      %3781 = vperm.xlu0 %3780, %v244
      %v3782 = vpop.permute.xlu0 %3781
      %3784 = vset.pattern.permute.xlu0 19
      %3785 = vperm.xlu0 %3784, %v245
      %v3786 = vpop.permute.xlu0 %3785
      %3788 = vset.pattern.permute.xlu0 19
      %3789 = vperm.xlu0 %3788, %v246
      %v3790 = vpop.permute.xlu0 %3789
      %3792 = vset.pattern.permute.xlu0 19
      %3793 = vperm.xlu0 %3792, %v247
      %v3794 = vpop.permute.xlu0 %3793
      %v3796 = vmul.f32 %v311, %v3766
      %v3797 = vmul.f32 %v313, %v3770
      %v3798 = vmul.f32 %v315, %v3774
      %v3799 = vmul.f32 %v316, %v3778
      %v3800 = vmul.f32 %v301, %v3782
      %v3801 = vmul.f32 %v303, %v3786
      %v3802 = vmul.f32 %v323, %v3790
      %v3803 = vmul.f32 %v309, %v3794
      %s3804 = scalar_lea.vmem %s2, 304
      %v3805 = vld [vmem:[%s3804] sm:$0xff]
      %v3806 = vld [vmem:[%s3804 + $0x8] sm:$0xff]
      %v3808 = vsel %vm367, %v3796, 0
      %v3811 = vsel %vm367, %v3797, 0
      %v3814 = vsel %vm367, %v3798, 0
      %v3817 = vsel %vm367, %v3799, 0
      %v3820 = vsel %vm367, %v3800, 0
      %v3823 = vsel %vm367, %v3801, 0
      %v3826 = vsel %vm367, %v3802, 0
      %v3829 = vsel %vm367, %v3803, 0
      %3831 = vmatprep.subr.mxu0 0.0
      %3832 = vmatpush1.msra.mxu0 0.0
      %3833 = vmatprep.subr.mxu0 0.0
      %3834 = vmatpush1.msra.mxu0 0.0
      %3835 = vmatprep.subr.mxu0 0.0
      %3836 = vmatpush1.msra.mxu0 0.0
      %3837 = vmatprep.subr.mxu0 0.0
      %3838 = vmatpush1.msra.mxu0 0.0
      %3839 = vmatprep.subr.mxu0 0.0
      %3840 = vmatpush1.msra.mxu0 0.0
      %3841 = vmatprep.subr.mxu0 0.0
      %3842 = vmatpush1.msra.mxu0 0.0
      %3843 = vmatprep.subr.mxu0 0.0
      %3844 = vmatpush1.msra.mxu0 0.0
      %3845 = vmatprep.subr.mxu0 0.0
      %3846 = vmatpush1.msra.mxu0 0.0
      %3847 = vmatprep.subr.mxu0 0.0
      %3848 = vmatpush1.msra.mxu0 0.0
      %3849 = vmatprep.subr.mxu0 0.0
      %3850 = vmatpush1.msra.mxu0 0.0
      %3851 = vmatprep.subr.mxu0 0.0
      %3852 = vmatpush1.msra.mxu0 0.0
      %3853 = vmatprep.subr.mxu0 0.0
      %3854 = vmatpush1.msra.mxu0 0.0
      %3855 = vmatprep.subr.mxu0 0.0
      %3856 = vmatpush1.msra.mxu0 0.0
      %3857 = vmatprep.subr.mxu0 0.0
      %3858 = vmatpush1.msra.mxu0 0.0
      %3859 = vmatprep.subr.mxu0 0.0
      %3860 = vmatpush1.msra.mxu0 %v3806
      %3861 = vmatprep.subr.mxu0 0.0
      %3862 = vmatpush1.msra.mxu0 %v3805
      %3863 = vmatprep.subr.mxu0 0.0
      %3864 = vmatpush2.msra.mxu0 0.0
      %3865 = vmatprep.subr.mxu0 0.0
      %3866 = vmatpush2.msra.mxu0 0.0
      %3867 = vmatprep.subr.mxu0 0.0
      %3868 = vmatpush2.msra.mxu0 0.0
      %3869 = vmatprep.subr.mxu0 0.0
      %3870 = vmatpush2.msra.mxu0 0.0
      %3871 = vmatprep.subr.mxu0 0.0
      %3872 = vmatpush2.msra.mxu0 0.0
      %3873 = vmatprep.subr.mxu0 0.0
      %3874 = vmatpush2.msra.mxu0 0.0
      %3875 = vmatprep.subr.mxu0 0.0
      %3876 = vmatpush2.msra.mxu0 0.0
      %3877 = vmatprep.subr.mxu0 0.0
      %3878 = vmatpush2.msra.mxu0 0.0
      %3879 = vmatprep.subr.mxu0 0.0
      %3880 = vmatpush2.msra.mxu0 0.0
      %3881 = vmatprep.subr.mxu0 0.0
      %3882 = vmatpush2.msra.mxu0 0.0
      %3883 = vmatprep.subr.mxu0 0.0
      %3884 = vmatpush2.msra.mxu0 0.0
      %3885 = vmatprep.subr.mxu0 0.0
      %3886 = vmatpush2.msra.mxu0 0.0
      %3887 = vmatprep.subr.mxu0 0.0
      %3888 = vmatpush2.msra.mxu0 0.0
      %3889 = vmatprep.subr.mxu0 0.0
      %3890 = vmatpush2.msra.mxu0 0.0
      %3891 = vmatprep.subr.mxu0 0.0
      %3892 = vmatpush2.msra.mxu0 0.0
      %3893 = vmatprep.subr.mxu0 0.0
      %3894 = vmatpush2.msra.mxu0 0.0
      %3895 = vmatprep.mubr.f32.mxu0 0.0
      %3896 = vmatmul.mubr.f32.gmra.mxu0 %v3808
      %v3897 = vpop.f32.mrf.mxu0
      %v3898 = vadd.f32 0.0, %v3897
      %v3899 = vpop.f32.mrf.mxu0
      %3900 = vmatprep.mubr.f32.mxu0 0.0
      %3901 = vmatmul.mubr.f32.gmra.mxu0 %v3811
      %v3902 = vpop.f32.mrf.mxu0
      %v3903 = vadd.f32 0.0, %v3902
      %v3904 = vpop.f32.mrf.mxu0
      %3905 = vmatprep.mubr.f32.mxu0 0.0
      %3906 = vmatmul.mubr.f32.gmra.mxu0 %v3814
      %v3907 = vpop.f32.mrf.mxu0
      %v3908 = vadd.f32 0.0, %v3907
      %v3909 = vpop.f32.mrf.mxu0
      %3910 = vmatprep.mubr.f32.mxu0 0.0
      %3911 = vmatmul.mubr.f32.gmra.mxu0 %v3817
      %v3912 = vpop.f32.mrf.mxu0
      %v3913 = vadd.f32 0.0, %v3912
      %v3914 = vpop.f32.mrf.mxu0
      %3915 = vmatprep.mubr.f32.mxu0 0.0
      %3916 = vmatmul.mubr.f32.gmra.mxu0 %v3820
      %v3917 = vpop.f32.mrf.mxu0
      %v3918 = vadd.f32 0.0, %v3917
      %v3919 = vpop.f32.mrf.mxu0
      %3920 = vmatprep.mubr.f32.mxu0 0.0
      %3921 = vmatmul.mubr.f32.gmra.mxu0 %v3823
      %v3922 = vpop.f32.mrf.mxu0
      %v3923 = vadd.f32 0.0, %v3922
      %v3924 = vpop.f32.mrf.mxu0
      %3925 = vmatprep.mubr.f32.mxu0 0.0
      %3926 = vmatmul.mubr.f32.gmra.mxu0 %v3826
      %v3927 = vpop.f32.mrf.mxu0
      %v3928 = vadd.f32 0.0, %v3927
      %v3929 = vpop.f32.mrf.mxu0
      %3930 = vmatprep.mubr.f32.mxu0 0.0
      %3931 = vmatmul.mubr.f32.gmra.mxu0 %v3829
      %v3932 = vpop.f32.mrf.mxu0
      %v3933 = vadd.f32 0.0, %v3932
      %v3934 = vpop.f32.mrf.mxu0
      %3935 = vdwg.mxu0
      %v3936 = vadd.f32 %v3756, %v3898
      %v3937 = vadd.f32 %v3757, %v3903
      %v3938 = vadd.f32 %v3758, %v3908
      %v3939 = vadd.f32 %v3759, %v3913
      %v3940 = vadd.f32 %v3760, %v3918
      %v3941 = vadd.f32 %v3761, %v3923
      %v3942 = vadd.f32 %v3762, %v3928
      %v3943 = vadd.f32 %v3763, %v3933
      %3944 = vset.pattern.permute.xlu0 20
      %3945 = vperm.xlu0 %3944, %v240
      %v3946 = vpop.permute.xlu0 %3945
      %3948 = vset.pattern.permute.xlu0 20
      %3949 = vperm.xlu0 %3948, %v241
      %v3950 = vpop.permute.xlu0 %3949
      %3952 = vset.pattern.permute.xlu0 20
      %3953 = vperm.xlu0 %3952, %v242
      %v3954 = vpop.permute.xlu0 %3953
      %3956 = vset.pattern.permute.xlu0 20
      %3957 = vperm.xlu0 %3956, %v243
      %v3958 = vpop.permute.xlu0 %3957
      %3960 = vset.pattern.permute.xlu0 20
      %3961 = vperm.xlu0 %3960, %v244
      %v3962 = vpop.permute.xlu0 %3961
      %3964 = vset.pattern.permute.xlu0 20
      %3965 = vperm.xlu0 %3964, %v245
      %v3966 = vpop.permute.xlu0 %3965
      %3968 = vset.pattern.permute.xlu0 20
      %3969 = vperm.xlu0 %3968, %v246
      %v3970 = vpop.permute.xlu0 %3969
      %3972 = vset.pattern.permute.xlu0 20
      %3973 = vperm.xlu0 %3972, %v247
      %v3974 = vpop.permute.xlu0 %3973
      %v3976 = vmul.f32 %v639, %v3946
      %v3977 = vmul.f32 %v641, %v3950
      %v3978 = vmul.f32 %v643, %v3954
      %v3979 = vmul.f32 %v644, %v3958
      %v3980 = vmul.f32 %v629, %v3962
      %v3981 = vmul.f32 %v631, %v3966
      %v3982 = vmul.f32 %v651, %v3970
      %v3983 = vmul.f32 %v637, %v3974
      %s3984 = scalar_lea.vmem %s2, 320
      %v3985 = vld [vmem:[%s3984] sm:$0xff]
      %v3986 = vld [vmem:[%s3984 + $0x8] sm:$0xff]
      %v3988 = vsel %vm367, %v3976, 0
      %v3991 = vsel %vm367, %v3977, 0
      %v3994 = vsel %vm367, %v3978, 0
      %v3997 = vsel %vm367, %v3979, 0
      %v4000 = vsel %vm367, %v3980, 0
      %v4003 = vsel %vm367, %v3981, 0
      %v4006 = vsel %vm367, %v3982, 0
      %v4009 = vsel %vm367, %v3983, 0
      %4011 = vmatprep.subr.mxu0 0.0
      %4012 = vmatpush1.msra.mxu0 0.0
      %4013 = vmatprep.subr.mxu0 0.0
      %4014 = vmatpush1.msra.mxu0 0.0
      %4015 = vmatprep.subr.mxu0 0.0
      %4016 = vmatpush1.msra.mxu0 0.0
      %4017 = vmatprep.subr.mxu0 0.0
      %4018 = vmatpush1.msra.mxu0 0.0
      %4019 = vmatprep.subr.mxu0 0.0
      %4020 = vmatpush1.msra.mxu0 0.0
      %4021 = vmatprep.subr.mxu0 0.0
      %4022 = vmatpush1.msra.mxu0 0.0
      %4023 = vmatprep.subr.mxu0 0.0
      %4024 = vmatpush1.msra.mxu0 0.0
      %4025 = vmatprep.subr.mxu0 0.0
      %4026 = vmatpush1.msra.mxu0 0.0
      %4027 = vmatprep.subr.mxu0 0.0
      %4028 = vmatpush1.msra.mxu0 0.0
      %4029 = vmatprep.subr.mxu0 0.0
      %4030 = vmatpush1.msra.mxu0 0.0
      %4031 = vmatprep.subr.mxu0 0.0
      %4032 = vmatpush1.msra.mxu0 0.0
      %4033 = vmatprep.subr.mxu0 0.0
      %4034 = vmatpush1.msra.mxu0 0.0
      %4035 = vmatprep.subr.mxu0 0.0
      %4036 = vmatpush1.msra.mxu0 0.0
      %4037 = vmatprep.subr.mxu0 0.0
      %4038 = vmatpush1.msra.mxu0 0.0
      %4039 = vmatprep.subr.mxu0 0.0
      %4040 = vmatpush1.msra.mxu0 %v3986
      %4041 = vmatprep.subr.mxu0 0.0
      %4042 = vmatpush1.msra.mxu0 %v3985
      %4043 = vmatprep.subr.mxu0 0.0
      %4044 = vmatpush2.msra.mxu0 0.0
      %4045 = vmatprep.subr.mxu0 0.0
      %4046 = vmatpush2.msra.mxu0 0.0
      %4047 = vmatprep.subr.mxu0 0.0
      %4048 = vmatpush2.msra.mxu0 0.0
      %4049 = vmatprep.subr.mxu0 0.0
      %4050 = vmatpush2.msra.mxu0 0.0
      %4051 = vmatprep.subr.mxu0 0.0
      %4052 = vmatpush2.msra.mxu0 0.0
      %4053 = vmatprep.subr.mxu0 0.0
      %4054 = vmatpush2.msra.mxu0 0.0
      %4055 = vmatprep.subr.mxu0 0.0
      %4056 = vmatpush2.msra.mxu0 0.0
      %4057 = vmatprep.subr.mxu0 0.0
      %4058 = vmatpush2.msra.mxu0 0.0
      %4059 = vmatprep.subr.mxu0 0.0
      %4060 = vmatpush2.msra.mxu0 0.0
      %4061 = vmatprep.subr.mxu0 0.0
      %4062 = vmatpush2.msra.mxu0 0.0
      %4063 = vmatprep.subr.mxu0 0.0
      %4064 = vmatpush2.msra.mxu0 0.0
      %4065 = vmatprep.subr.mxu0 0.0
      %4066 = vmatpush2.msra.mxu0 0.0
      %4067 = vmatprep.subr.mxu0 0.0
      %4068 = vmatpush2.msra.mxu0 0.0
      %4069 = vmatprep.subr.mxu0 0.0
      %4070 = vmatpush2.msra.mxu0 0.0
      %4071 = vmatprep.subr.mxu0 0.0
      %4072 = vmatpush2.msra.mxu0 0.0
      %4073 = vmatprep.subr.mxu0 0.0
      %4074 = vmatpush2.msra.mxu0 0.0
      %4075 = vmatprep.mubr.f32.mxu0 0.0
      %4076 = vmatmul.mubr.f32.gmra.mxu0 %v3988
      %v4077 = vpop.f32.mrf.mxu0
      %v4078 = vadd.f32 0.0, %v4077
      %v4079 = vpop.f32.mrf.mxu0
      %4080 = vmatprep.mubr.f32.mxu0 0.0
      %4081 = vmatmul.mubr.f32.gmra.mxu0 %v3991
      %v4082 = vpop.f32.mrf.mxu0
      %v4083 = vadd.f32 0.0, %v4082
      %v4084 = vpop.f32.mrf.mxu0
      %4085 = vmatprep.mubr.f32.mxu0 0.0
      %4086 = vmatmul.mubr.f32.gmra.mxu0 %v3994
      %v4087 = vpop.f32.mrf.mxu0
      %v4088 = vadd.f32 0.0, %v4087
      %v4089 = vpop.f32.mrf.mxu0
      %4090 = vmatprep.mubr.f32.mxu0 0.0
      %4091 = vmatmul.mubr.f32.gmra.mxu0 %v3997
      %v4092 = vpop.f32.mrf.mxu0
      %v4093 = vadd.f32 0.0, %v4092
      %v4094 = vpop.f32.mrf.mxu0
      %4095 = vmatprep.mubr.f32.mxu0 0.0
      %4096 = vmatmul.mubr.f32.gmra.mxu0 %v4000
      %v4097 = vpop.f32.mrf.mxu0
      %v4098 = vadd.f32 0.0, %v4097
      %v4099 = vpop.f32.mrf.mxu0
      %4100 = vmatprep.mubr.f32.mxu0 0.0
      %4101 = vmatmul.mubr.f32.gmra.mxu0 %v4003
      %v4102 = vpop.f32.mrf.mxu0
      %v4103 = vadd.f32 0.0, %v4102
      %v4104 = vpop.f32.mrf.mxu0
      %4105 = vmatprep.mubr.f32.mxu0 0.0
      %4106 = vmatmul.mubr.f32.gmra.mxu0 %v4006
      %v4107 = vpop.f32.mrf.mxu0
      %v4108 = vadd.f32 0.0, %v4107
      %v4109 = vpop.f32.mrf.mxu0
      %4110 = vmatprep.mubr.f32.mxu0 0.0
      %4111 = vmatmul.mubr.f32.gmra.mxu0 %v4009
      %v4112 = vpop.f32.mrf.mxu0
      %v4113 = vadd.f32 0.0, %v4112
      %v4114 = vpop.f32.mrf.mxu0
      %4115 = vdwg.mxu0
      %v4116 = vadd.f32 %v3936, %v4078
      %v4117 = vadd.f32 %v3937, %v4083
      %v4118 = vadd.f32 %v3938, %v4088
      %v4119 = vadd.f32 %v3939, %v4093
      %v4120 = vadd.f32 %v3940, %v4098
      %v4121 = vadd.f32 %v3941, %v4103
      %v4122 = vadd.f32 %v3942, %v4108
      %v4123 = vadd.f32 %v3943, %v4113
      %4124 = vset.pattern.permute.xlu0 21
      %4125 = vperm.xlu0 %4124, %v240
      %v4126 = vpop.permute.xlu0 %4125
      %4128 = vset.pattern.permute.xlu0 21
      %4129 = vperm.xlu0 %4128, %v241
      %v4130 = vpop.permute.xlu0 %4129
      %4132 = vset.pattern.permute.xlu0 21
      %4133 = vperm.xlu0 %4132, %v242
      %v4134 = vpop.permute.xlu0 %4133
      %4136 = vset.pattern.permute.xlu0 21
      %4137 = vperm.xlu0 %4136, %v243
      %v4138 = vpop.permute.xlu0 %4137
      %4140 = vset.pattern.permute.xlu0 21
      %4141 = vperm.xlu0 %4140, %v244
      %v4142 = vpop.permute.xlu0 %4141
      %4144 = vset.pattern.permute.xlu0 21
      %4145 = vperm.xlu0 %4144, %v245
      %v4146 = vpop.permute.xlu0 %4145
      %4148 = vset.pattern.permute.xlu0 21
      %4149 = vperm.xlu0 %4148, %v246
      %v4150 = vpop.permute.xlu0 %4149
      %4152 = vset.pattern.permute.xlu0 21
      %4153 = vperm.xlu0 %4152, %v247
      %v4154 = vpop.permute.xlu0 %4153
      %v4156 = vmul.f32 %v845, %v4126
      %v4157 = vmul.f32 %v847, %v4130
      %v4158 = vmul.f32 %v849, %v4134
      %v4159 = vmul.f32 %v850, %v4138
      %v4160 = vmul.f32 %v835, %v4142
      %v4161 = vmul.f32 %v837, %v4146
      %v4162 = vmul.f32 %v857, %v4150
      %v4163 = vmul.f32 %v843, %v4154
      %s4164 = scalar_lea.vmem %s2, 336
      %v4165 = vld [vmem:[%s4164] sm:$0xff]
      %v4166 = vld [vmem:[%s4164 + $0x8] sm:$0xff]
      %v4168 = vsel %vm367, %v4156, 0
      %v4171 = vsel %vm367, %v4157, 0
      %v4174 = vsel %vm367, %v4158, 0
      %v4177 = vsel %vm367, %v4159, 0
      %v4180 = vsel %vm367, %v4160, 0
      %v4183 = vsel %vm367, %v4161, 0
      %v4186 = vsel %vm367, %v4162, 0
      %v4189 = vsel %vm367, %v4163, 0
      %4191 = vmatprep.subr.mxu0 0.0
      %4192 = vmatpush1.msra.mxu0 0.0
      %4193 = vmatprep.subr.mxu0 0.0
      %4194 = vmatpush1.msra.mxu0 0.0
      %4195 = vmatprep.subr.mxu0 0.0
      %4196 = vmatpush1.msra.mxu0 0.0
      %4197 = vmatprep.subr.mxu0 0.0
      %4198 = vmatpush1.msra.mxu0 0.0
      %4199 = vmatprep.subr.mxu0 0.0
      %4200 = vmatpush1.msra.mxu0 0.0
      %4201 = vmatprep.subr.mxu0 0.0
      %4202 = vmatpush1.msra.mxu0 0.0
      %4203 = vmatprep.subr.mxu0 0.0
      %4204 = vmatpush1.msra.mxu0 0.0
      %4205 = vmatprep.subr.mxu0 0.0
      %4206 = vmatpush1.msra.mxu0 0.0
      %4207 = vmatprep.subr.mxu0 0.0
      %4208 = vmatpush1.msra.mxu0 0.0
      %4209 = vmatprep.subr.mxu0 0.0
      %4210 = vmatpush1.msra.mxu0 0.0
      %4211 = vmatprep.subr.mxu0 0.0
      %4212 = vmatpush1.msra.mxu0 0.0
      %4213 = vmatprep.subr.mxu0 0.0
      %4214 = vmatpush1.msra.mxu0 0.0
      %4215 = vmatprep.subr.mxu0 0.0
      %4216 = vmatpush1.msra.mxu0 0.0
      %4217 = vmatprep.subr.mxu0 0.0
      %4218 = vmatpush1.msra.mxu0 0.0
      %4219 = vmatprep.subr.mxu0 0.0
      %4220 = vmatpush1.msra.mxu0 %v4166
      %4221 = vmatprep.subr.mxu0 0.0
      %4222 = vmatpush1.msra.mxu0 %v4165
      %4223 = vmatprep.subr.mxu0 0.0
      %4224 = vmatpush2.msra.mxu0 0.0
      %4225 = vmatprep.subr.mxu0 0.0
      %4226 = vmatpush2.msra.mxu0 0.0
      %4227 = vmatprep.subr.mxu0 0.0
      %4228 = vmatpush2.msra.mxu0 0.0
      %4229 = vmatprep.subr.mxu0 0.0
      %4230 = vmatpush2.msra.mxu0 0.0
      %4231 = vmatprep.subr.mxu0 0.0
      %4232 = vmatpush2.msra.mxu0 0.0
      %4233 = vmatprep.subr.mxu0 0.0
      %4234 = vmatpush2.msra.mxu0 0.0
      %4235 = vmatprep.subr.mxu0 0.0
      %4236 = vmatpush2.msra.mxu0 0.0
      %4237 = vmatprep.subr.mxu0 0.0
      %4238 = vmatpush2.msra.mxu0 0.0
      %4239 = vmatprep.subr.mxu0 0.0
      %4240 = vmatpush2.msra.mxu0 0.0
      %4241 = vmatprep.subr.mxu0 0.0
      %4242 = vmatpush2.msra.mxu0 0.0
      %4243 = vmatprep.subr.mxu0 0.0
      %4244 = vmatpush2.msra.mxu0 0.0
      %4245 = vmatprep.subr.mxu0 0.0
      %4246 = vmatpush2.msra.mxu0 0.0
      %4247 = vmatprep.subr.mxu0 0.0
      %4248 = vmatpush2.msra.mxu0 0.0
      %4249 = vmatprep.subr.mxu0 0.0
      %4250 = vmatpush2.msra.mxu0 0.0
      %4251 = vmatprep.subr.mxu0 0.0
      %4252 = vmatpush2.msra.mxu0 0.0
      %4253 = vmatprep.subr.mxu0 0.0
      %4254 = vmatpush2.msra.mxu0 0.0
      %4255 = vmatprep.mubr.f32.mxu0 0.0
      %4256 = vmatmul.mubr.f32.gmra.mxu0 %v4168
      %v4257 = vpop.f32.mrf.mxu0
      %v4258 = vadd.f32 0.0, %v4257
      %v4259 = vpop.f32.mrf.mxu0
      %4260 = vmatprep.mubr.f32.mxu0 0.0
      %4261 = vmatmul.mubr.f32.gmra.mxu0 %v4171
      %v4262 = vpop.f32.mrf.mxu0
      %v4263 = vadd.f32 0.0, %v4262
      %v4264 = vpop.f32.mrf.mxu0
      %4265 = vmatprep.mubr.f32.mxu0 0.0
      %4266 = vmatmul.mubr.f32.gmra.mxu0 %v4174
      %v4267 = vpop.f32.mrf.mxu0
      %v4268 = vadd.f32 0.0, %v4267
      %v4269 = vpop.f32.mrf.mxu0
      %4270 = vmatprep.mubr.f32.mxu0 0.0
      %4271 = vmatmul.mubr.f32.gmra.mxu0 %v4177
      %v4272 = vpop.f32.mrf.mxu0
      %v4273 = vadd.f32 0.0, %v4272
      %v4274 = vpop.f32.mrf.mxu0
      %4275 = vmatprep.mubr.f32.mxu0 0.0
      %4276 = vmatmul.mubr.f32.gmra.mxu0 %v4180
      %v4277 = vpop.f32.mrf.mxu0
      %v4278 = vadd.f32 0.0, %v4277
      %v4279 = vpop.f32.mrf.mxu0
      %4280 = vmatprep.mubr.f32.mxu0 0.0
      %4281 = vmatmul.mubr.f32.gmra.mxu0 %v4183
      %v4282 = vpop.f32.mrf.mxu0
      %v4283 = vadd.f32 0.0, %v4282
      %v4284 = vpop.f32.mrf.mxu0
      %4285 = vmatprep.mubr.f32.mxu0 0.0
      %4286 = vmatmul.mubr.f32.gmra.mxu0 %v4186
      %v4287 = vpop.f32.mrf.mxu0
      %v4288 = vadd.f32 0.0, %v4287
      %v4289 = vpop.f32.mrf.mxu0
      %4290 = vmatprep.mubr.f32.mxu0 0.0
      %4291 = vmatmul.mubr.f32.gmra.mxu0 %v4189
      %v4292 = vpop.f32.mrf.mxu0
      %v4293 = vadd.f32 0.0, %v4292
      %v4294 = vpop.f32.mrf.mxu0
      %4295 = vdwg.mxu0
      %v4296 = vadd.f32 %v4116, %v4258
      %v4297 = vadd.f32 %v4117, %v4263
      %v4298 = vadd.f32 %v4118, %v4268
      %v4299 = vadd.f32 %v4119, %v4273
      %v4300 = vadd.f32 %v4120, %v4278
      %v4301 = vadd.f32 %v4121, %v4283
      %v4302 = vadd.f32 %v4122, %v4288
      %v4303 = vadd.f32 %v4123, %v4293
      %4304 = vset.pattern.permute.xlu0 22
      %4305 = vperm.xlu0 %4304, %v240
      %v4306 = vpop.permute.xlu0 %4305
      %4308 = vset.pattern.permute.xlu0 22
      %4309 = vperm.xlu0 %4308, %v241
      %v4310 = vpop.permute.xlu0 %4309
      %4312 = vset.pattern.permute.xlu0 22
      %4313 = vperm.xlu0 %4312, %v242
      %v4314 = vpop.permute.xlu0 %4313
      %4316 = vset.pattern.permute.xlu0 22
      %4317 = vperm.xlu0 %4316, %v243
      %v4318 = vpop.permute.xlu0 %4317
      %4320 = vset.pattern.permute.xlu0 22
      %4321 = vperm.xlu0 %4320, %v244
      %v4322 = vpop.permute.xlu0 %4321
      %4324 = vset.pattern.permute.xlu0 22
      %4325 = vperm.xlu0 %4324, %v245
      %v4326 = vpop.permute.xlu0 %4325
      %4328 = vset.pattern.permute.xlu0 22
      %4329 = vperm.xlu0 %4328, %v246
      %v4330 = vpop.permute.xlu0 %4329
      %4332 = vset.pattern.permute.xlu0 22
      %4333 = vperm.xlu0 %4332, %v247
      %v4334 = vpop.permute.xlu0 %4333
      %v4336 = vmul.f32 %v200, %v4306
      %v4337 = vmul.f32 %v201, %v4310
      %v4338 = vmul.f32 %v202, %v4314
      %v4339 = vmul.f32 %v203, %v4318
      %v4340 = vmul.f32 %v204, %v4322
      %v4341 = vmul.f32 %v205, %v4326
      %v4342 = vmul.f32 %v198, %v4330
      %v4343 = vmul.f32 %v199, %v4334
      %s4344 = scalar_lea.vmem %s2, 352
      %v4345 = vld [vmem:[%s4344] sm:$0xff]
      %v4346 = vld [vmem:[%s4344 + $0x8] sm:$0xff]
      %v4348 = vsel %vm367, %v4336, 0
      %v4351 = vsel %vm367, %v4337, 0
      %v4354 = vsel %vm367, %v4338, 0
      %v4357 = vsel %vm367, %v4339, 0
      %v4360 = vsel %vm367, %v4340, 0
      %v4363 = vsel %vm367, %v4341, 0
      %v4366 = vsel %vm367, %v4342, 0
      %v4369 = vsel %vm367, %v4343, 0
      %4371 = vmatprep.subr.mxu0 0.0
      %4372 = vmatpush1.msra.mxu0 0.0
      %4373 = vmatprep.subr.mxu0 0.0
      %4374 = vmatpush1.msra.mxu0 0.0
      %4375 = vmatprep.subr.mxu0 0.0
      %4376 = vmatpush1.msra.mxu0 0.0
      %4377 = vmatprep.subr.mxu0 0.0
      %4378 = vmatpush1.msra.mxu0 0.0
      %4379 = vmatprep.subr.mxu0 0.0
      %4380 = vmatpush1.msra.mxu0 0.0
      %4381 = vmatprep.subr.mxu0 0.0
      %4382 = vmatpush1.msra.mxu0 0.0
      %4383 = vmatprep.subr.mxu0 0.0
      %4384 = vmatpush1.msra.mxu0 0.0
      %4385 = vmatprep.subr.mxu0 0.0
      %4386 = vmatpush1.msra.mxu0 0.0
      %4387 = vmatprep.subr.mxu0 0.0
      %4388 = vmatpush1.msra.mxu0 0.0
      %4389 = vmatprep.subr.mxu0 0.0
      %4390 = vmatpush1.msra.mxu0 0.0
      %4391 = vmatprep.subr.mxu0 0.0
      %4392 = vmatpush1.msra.mxu0 0.0
      %4393 = vmatprep.subr.mxu0 0.0
      %4394 = vmatpush1.msra.mxu0 0.0
      %4395 = vmatprep.subr.mxu0 0.0
      %4396 = vmatpush1.msra.mxu0 0.0
      %4397 = vmatprep.subr.mxu0 0.0
      %4398 = vmatpush1.msra.mxu0 0.0
      %4399 = vmatprep.subr.mxu0 0.0
      %4400 = vmatpush1.msra.mxu0 %v4346
      %4401 = vmatprep.subr.mxu0 0.0
      %4402 = vmatpush1.msra.mxu0 %v4345
      %4403 = vmatprep.subr.mxu0 0.0
      %4404 = vmatpush2.msra.mxu0 0.0
      %4405 = vmatprep.subr.mxu0 0.0
      %4406 = vmatpush2.msra.mxu0 0.0
      %4407 = vmatprep.subr.mxu0 0.0
      %4408 = vmatpush2.msra.mxu0 0.0
      %4409 = vmatprep.subr.mxu0 0.0
      %4410 = vmatpush2.msra.mxu0 0.0
      %4411 = vmatprep.subr.mxu0 0.0
      %4412 = vmatpush2.msra.mxu0 0.0
      %4413 = vmatprep.subr.mxu0 0.0
      %4414 = vmatpush2.msra.mxu0 0.0
      %4415 = vmatprep.subr.mxu0 0.0
      %4416 = vmatpush2.msra.mxu0 0.0
      %4417 = vmatprep.subr.mxu0 0.0
      %4418 = vmatpush2.msra.mxu0 0.0
      %4419 = vmatprep.subr.mxu0 0.0
      %4420 = vmatpush2.msra.mxu0 0.0
      %4421 = vmatprep.subr.mxu0 0.0
      %4422 = vmatpush2.msra.mxu0 0.0
      %4423 = vmatprep.subr.mxu0 0.0
      %4424 = vmatpush2.msra.mxu0 0.0
      %4425 = vmatprep.subr.mxu0 0.0
      %4426 = vmatpush2.msra.mxu0 0.0
      %4427 = vmatprep.subr.mxu0 0.0
      %4428 = vmatpush2.msra.mxu0 0.0
      %4429 = vmatprep.subr.mxu0 0.0
      %4430 = vmatpush2.msra.mxu0 0.0
      %4431 = vmatprep.subr.mxu0 0.0
      %4432 = vmatpush2.msra.mxu0 0.0
      %4433 = vmatprep.subr.mxu0 0.0
      %4434 = vmatpush2.msra.mxu0 0.0
      %4435 = vmatprep.mubr.f32.mxu0 0.0
      %4436 = vmatmul.mubr.f32.gmra.mxu0 %v4348
      %v4437 = vpop.f32.mrf.mxu0
      %v4438 = vadd.f32 0.0, %v4437
      %v4439 = vpop.f32.mrf.mxu0
      %4440 = vmatprep.mubr.f32.mxu0 0.0
      %4441 = vmatmul.mubr.f32.gmra.mxu0 %v4351
      %v4442 = vpop.f32.mrf.mxu0
      %v4443 = vadd.f32 0.0, %v4442
      %v4444 = vpop.f32.mrf.mxu0
      %4445 = vmatprep.mubr.f32.mxu0 0.0
      %4446 = vmatmul.mubr.f32.gmra.mxu0 %v4354
      %v4447 = vpop.f32.mrf.mxu0
      %v4448 = vadd.f32 0.0, %v4447
      %v4449 = vpop.f32.mrf.mxu0
      %4450 = vmatprep.mubr.f32.mxu0 0.0
      %4451 = vmatmul.mubr.f32.gmra.mxu0 %v4357
      %v4452 = vpop.f32.mrf.mxu0
      %v4453 = vadd.f32 0.0, %v4452
      %v4454 = vpop.f32.mrf.mxu0
      %4455 = vmatprep.mubr.f32.mxu0 0.0
      %4456 = vmatmul.mubr.f32.gmra.mxu0 %v4360
      %v4457 = vpop.f32.mrf.mxu0
      %v4458 = vadd.f32 0.0, %v4457
      %v4459 = vpop.f32.mrf.mxu0
      %4460 = vmatprep.mubr.f32.mxu0 0.0
      %4461 = vmatmul.mubr.f32.gmra.mxu0 %v4363
      %v4462 = vpop.f32.mrf.mxu0
      %v4463 = vadd.f32 0.0, %v4462
      %v4464 = vpop.f32.mrf.mxu0
      %4465 = vmatprep.mubr.f32.mxu0 0.0
      %4466 = vmatmul.mubr.f32.gmra.mxu0 %v4366
      %v4467 = vpop.f32.mrf.mxu0
      %v4468 = vadd.f32 0.0, %v4467
      %v4469 = vpop.f32.mrf.mxu0
      %4470 = vmatprep.mubr.f32.mxu0 0.0
      %4471 = vmatmul.mubr.f32.gmra.mxu0 %v4369
      %v4472 = vpop.f32.mrf.mxu0
      %v4473 = vadd.f32 0.0, %v4472
      %v4474 = vpop.f32.mrf.mxu0
      %4475 = vdwg.mxu0
      %v4476 = vadd.f32 %v4296, %v4438
      %v4477 = vadd.f32 %v4297, %v4443
      %v4478 = vadd.f32 %v4298, %v4448
      %v4479 = vadd.f32 %v4299, %v4453
      %v4480 = vadd.f32 %v4300, %v4458
      %v4481 = vadd.f32 %v4301, %v4463
      %v4482 = vadd.f32 %v4302, %v4468
      %v4483 = vadd.f32 %v4303, %v4473
      %4484 = vset.pattern.permute.xlu0 23
      %4485 = vperm.xlu0 %4484, %v240
      %v4486 = vpop.permute.xlu0 %4485
      %4488 = vset.pattern.permute.xlu0 23
      %4489 = vperm.xlu0 %4488, %v241
      %v4490 = vpop.permute.xlu0 %4489
      %4492 = vset.pattern.permute.xlu0 23
      %4493 = vperm.xlu0 %4492, %v242
      %v4494 = vpop.permute.xlu0 %4493
      %4496 = vset.pattern.permute.xlu0 23
      %4497 = vperm.xlu0 %4496, %v243
      %v4498 = vpop.permute.xlu0 %4497
      %4500 = vset.pattern.permute.xlu0 23
      %4501 = vperm.xlu0 %4500, %v244
      %v4502 = vpop.permute.xlu0 %4501
      %4504 = vset.pattern.permute.xlu0 23
      %4505 = vperm.xlu0 %4504, %v245
      %v4506 = vpop.permute.xlu0 %4505
      %4508 = vset.pattern.permute.xlu0 23
      %4509 = vperm.xlu0 %4508, %v246
      %v4510 = vpop.permute.xlu0 %4509
      %4512 = vset.pattern.permute.xlu0 23
      %4513 = vperm.xlu0 %4512, %v247
      %v4514 = vpop.permute.xlu0 %4513
      %v4516 = vmul.f32 %v1230, %v4486
      %v4517 = vmul.f32 %v1232, %v4490
      %v4518 = vmul.f32 %v1234, %v4494
      %v4519 = vmul.f32 %v1235, %v4498
      %v4520 = vmul.f32 %v1221, %v4502
      %v4521 = vmul.f32 %v1243, %v4506
      %v4522 = vmul.f32 %v1226, %v4510
      %v4523 = vmul.f32 %v1228, %v4514
      %s4524 = scalar_lea.vmem %s2, 368
      %v4525 = vld [vmem:[%s4524] sm:$0xff]
      %v4526 = vld [vmem:[%s4524 + $0x8] sm:$0xff]
      %v4528 = vsel %vm367, %v4516, 0
      %v4531 = vsel %vm367, %v4517, 0
      %v4534 = vsel %vm367, %v4518, 0
      %v4537 = vsel %vm367, %v4519, 0
      %v4540 = vsel %vm367, %v4520, 0
      %v4543 = vsel %vm367, %v4521, 0
      %v4546 = vsel %vm367, %v4522, 0
      %v4549 = vsel %vm367, %v4523, 0
      %4551 = vmatprep.subr.mxu0 0.0
      %4552 = vmatpush1.msra.mxu0 0.0
      %4553 = vmatprep.subr.mxu0 0.0
      %4554 = vmatpush1.msra.mxu0 0.0
      %4555 = vmatprep.subr.mxu0 0.0
      %4556 = vmatpush1.msra.mxu0 0.0
      %4557 = vmatprep.subr.mxu0 0.0
      %4558 = vmatpush1.msra.mxu0 0.0
      %4559 = vmatprep.subr.mxu0 0.0
      %4560 = vmatpush1.msra.mxu0 0.0
      %4561 = vmatprep.subr.mxu0 0.0
      %4562 = vmatpush1.msra.mxu0 0.0
      %4563 = vmatprep.subr.mxu0 0.0
      %4564 = vmatpush1.msra.mxu0 0.0
      %4565 = vmatprep.subr.mxu0 0.0
      %4566 = vmatpush1.msra.mxu0 0.0
      %4567 = vmatprep.subr.mxu0 0.0
      %4568 = vmatpush1.msra.mxu0 0.0
      %4569 = vmatprep.subr.mxu0 0.0
      %4570 = vmatpush1.msra.mxu0 0.0
      %4571 = vmatprep.subr.mxu0 0.0
      %4572 = vmatpush1.msra.mxu0 0.0
      %4573 = vmatprep.subr.mxu0 0.0
      %4574 = vmatpush1.msra.mxu0 0.0
      %4575 = vmatprep.subr.mxu0 0.0
      %4576 = vmatpush1.msra.mxu0 0.0
      %4577 = vmatprep.subr.mxu0 0.0
      %4578 = vmatpush1.msra.mxu0 0.0
      %4579 = vmatprep.subr.mxu0 0.0
      %4580 = vmatpush1.msra.mxu0 %v4526
      %4581 = vmatprep.subr.mxu0 0.0
      %4582 = vmatpush1.msra.mxu0 %v4525
      %4583 = vmatprep.subr.mxu0 0.0
      %4584 = vmatpush2.msra.mxu0 0.0
      %4585 = vmatprep.subr.mxu0 0.0
      %4586 = vmatpush2.msra.mxu0 0.0
      %4587 = vmatprep.subr.mxu0 0.0
      %4588 = vmatpush2.msra.mxu0 0.0
      %4589 = vmatprep.subr.mxu0 0.0
      %4590 = vmatpush2.msra.mxu0 0.0
      %4591 = vmatprep.subr.mxu0 0.0
      %4592 = vmatpush2.msra.mxu0 0.0
      %4593 = vmatprep.subr.mxu0 0.0
      %4594 = vmatpush2.msra.mxu0 0.0
      %4595 = vmatprep.subr.mxu0 0.0
      %4596 = vmatpush2.msra.mxu0 0.0
      %4597 = vmatprep.subr.mxu0 0.0
      %4598 = vmatpush2.msra.mxu0 0.0
      %4599 = vmatprep.subr.mxu0 0.0
      %4600 = vmatpush2.msra.mxu0 0.0
      %4601 = vmatprep.subr.mxu0 0.0
      %4602 = vmatpush2.msra.mxu0 0.0
      %4603 = vmatprep.subr.mxu0 0.0
      %4604 = vmatpush2.msra.mxu0 0.0
      %4605 = vmatprep.subr.mxu0 0.0
      %4606 = vmatpush2.msra.mxu0 0.0
      %4607 = vmatprep.subr.mxu0 0.0
      %4608 = vmatpush2.msra.mxu0 0.0
      %4609 = vmatprep.subr.mxu0 0.0
      %4610 = vmatpush2.msra.mxu0 0.0
      %4611 = vmatprep.subr.mxu0 0.0
      %4612 = vmatpush2.msra.mxu0 0.0
      %4613 = vmatprep.subr.mxu0 0.0
      %4614 = vmatpush2.msra.mxu0 0.0
      %4615 = vmatprep.mubr.f32.mxu0 0.0
      %4616 = vmatmul.mubr.f32.gmra.mxu0 %v4528
      %v4617 = vpop.f32.mrf.mxu0
      %v4618 = vadd.f32 0.0, %v4617
      %v4619 = vpop.f32.mrf.mxu0
      %4620 = vmatprep.mubr.f32.mxu0 0.0
      %4621 = vmatmul.mubr.f32.gmra.mxu0 %v4531
      %v4622 = vpop.f32.mrf.mxu0
      %v4623 = vadd.f32 0.0, %v4622
      %v4624 = vpop.f32.mrf.mxu0
      %4625 = vmatprep.mubr.f32.mxu0 0.0
      %4626 = vmatmul.mubr.f32.gmra.mxu0 %v4534
      %v4627 = vpop.f32.mrf.mxu0
      %v4628 = vadd.f32 0.0, %v4627
      %v4629 = vpop.f32.mrf.mxu0
      %4630 = vmatprep.mubr.f32.mxu0 0.0
      %4631 = vmatmul.mubr.f32.gmra.mxu0 %v4537
      %v4632 = vpop.f32.mrf.mxu0
      %v4633 = vadd.f32 0.0, %v4632
      %v4634 = vpop.f32.mrf.mxu0
      %4635 = vmatprep.mubr.f32.mxu0 0.0
      %4636 = vmatmul.mubr.f32.gmra.mxu0 %v4540
      %v4637 = vpop.f32.mrf.mxu0
      %v4638 = vadd.f32 0.0, %v4637
      %v4639 = vpop.f32.mrf.mxu0
      %4640 = vmatprep.mubr.f32.mxu0 0.0
      %4641 = vmatmul.mubr.f32.gmra.mxu0 %v4543
      %v4642 = vpop.f32.mrf.mxu0
      %v4643 = vadd.f32 0.0, %v4642
      %v4644 = vpop.f32.mrf.mxu0
      %4645 = vmatprep.mubr.f32.mxu0 0.0
      %4646 = vmatmul.mubr.f32.gmra.mxu0 %v4546
      %v4647 = vpop.f32.mrf.mxu0
      %v4648 = vadd.f32 0.0, %v4647
      %v4649 = vpop.f32.mrf.mxu0
      %4650 = vmatprep.mubr.f32.mxu0 0.0
      %4651 = vmatmul.mubr.f32.gmra.mxu0 %v4549
      %v4652 = vpop.f32.mrf.mxu0
      %v4653 = vadd.f32 0.0, %v4652
      %v4654 = vpop.f32.mrf.mxu0
      %4655 = vdwg.mxu0
      %v4656 = vadd.f32 %v4476, %v4618
      %v4657 = vadd.f32 %v4477, %v4623
      %v4658 = vadd.f32 %v4478, %v4628
      %v4659 = vadd.f32 %v4479, %v4633
      %v4660 = vadd.f32 %v4480, %v4638
      %v4661 = vadd.f32 %v4481, %v4643
      %v4662 = vadd.f32 %v4482, %v4648
      %v4663 = vadd.f32 %v4483, %v4653
      %4664 = vset.pattern.permute.xlu0 24
      %4665 = vperm.xlu0 %4664, %v240
      %v4666 = vpop.permute.xlu0 %4665
      %4668 = vset.pattern.permute.xlu0 24
      %4669 = vperm.xlu0 %4668, %v241
      %v4670 = vpop.permute.xlu0 %4669
      %4672 = vset.pattern.permute.xlu0 24
      %4673 = vperm.xlu0 %4672, %v242
      %v4674 = vpop.permute.xlu0 %4673
      %4676 = vset.pattern.permute.xlu0 24
      %4677 = vperm.xlu0 %4676, %v243
      %v4678 = vpop.permute.xlu0 %4677
      %4680 = vset.pattern.permute.xlu0 24
      %4681 = vperm.xlu0 %4680, %v244
      %v4682 = vpop.permute.xlu0 %4681
      %4684 = vset.pattern.permute.xlu0 24
      %4685 = vperm.xlu0 %4684, %v245
      %v4686 = vpop.permute.xlu0 %4685
      %4688 = vset.pattern.permute.xlu0 24
      %4689 = vperm.xlu0 %4688, %v246
      %v4690 = vpop.permute.xlu0 %4689
      %4692 = vset.pattern.permute.xlu0 24
      %4693 = vperm.xlu0 %4692, %v247
      %v4694 = vpop.permute.xlu0 %4693
      %v4696 = vmul.f32 %v229, %v4666
      %v4697 = vmul.f32 %v231, %v4670
      %v4698 = vmul.f32 %v232, %v4674
      %v4699 = vmul.f32 %v212, %v4678
      %v4700 = vmul.f32 %v214, %v4682
      %v4701 = vmul.f32 %v239, %v4686
      %v4702 = vmul.f32 %v225, %v4690
      %v4703 = vmul.f32 %v227, %v4694
      %s4704 = scalar_lea.vmem %s2, 384
      %v4705 = vld [vmem:[%s4704] sm:$0xff]
      %v4706 = vld [vmem:[%s4704 + $0x8] sm:$0xff]
      %v4708 = vsel %vm367, %v4696, 0
      %v4711 = vsel %vm367, %v4697, 0
      %v4714 = vsel %vm367, %v4698, 0
      %v4717 = vsel %vm367, %v4699, 0
      %v4720 = vsel %vm367, %v4700, 0
      %v4723 = vsel %vm367, %v4701, 0
      %v4726 = vsel %vm367, %v4702, 0
      %v4729 = vsel %vm367, %v4703, 0
      %4731 = vmatprep.subr.mxu0 0.0
      %4732 = vmatpush1.msra.mxu0 0.0
      %4733 = vmatprep.subr.mxu0 0.0
      %4734 = vmatpush1.msra.mxu0 0.0
      %4735 = vmatprep.subr.mxu0 0.0
      %4736 = vmatpush1.msra.mxu0 0.0
      %4737 = vmatprep.subr.mxu0 0.0
      %4738 = vmatpush1.msra.mxu0 0.0
      %4739 = vmatprep.subr.mxu0 0.0
      %4740 = vmatpush1.msra.mxu0 0.0
      %4741 = vmatprep.subr.mxu0 0.0
      %4742 = vmatpush1.msra.mxu0 0.0
      %4743 = vmatprep.subr.mxu0 0.0
      %4744 = vmatpush1.msra.mxu0 0.0
      %4745 = vmatprep.subr.mxu0 0.0
      %4746 = vmatpush1.msra.mxu0 0.0
      %4747 = vmatprep.subr.mxu0 0.0
      %4748 = vmatpush1.msra.mxu0 0.0
      %4749 = vmatprep.subr.mxu0 0.0
      %4750 = vmatpush1.msra.mxu0 0.0
      %4751 = vmatprep.subr.mxu0 0.0
      %4752 = vmatpush1.msra.mxu0 0.0
      %4753 = vmatprep.subr.mxu0 0.0
      %4754 = vmatpush1.msra.mxu0 0.0
      %4755 = vmatprep.subr.mxu0 0.0
      %4756 = vmatpush1.msra.mxu0 0.0
      %4757 = vmatprep.subr.mxu0 0.0
      %4758 = vmatpush1.msra.mxu0 0.0
      %4759 = vmatprep.subr.mxu0 0.0
      %4760 = vmatpush1.msra.mxu0 %v4706
      %4761 = vmatprep.subr.mxu0 0.0
      %4762 = vmatpush1.msra.mxu0 %v4705
      %4763 = vmatprep.subr.mxu0 0.0
      %4764 = vmatpush2.msra.mxu0 0.0
      %4765 = vmatprep.subr.mxu0 0.0
      %4766 = vmatpush2.msra.mxu0 0.0
      %4767 = vmatprep.subr.mxu0 0.0
      %4768 = vmatpush2.msra.mxu0 0.0
      %4769 = vmatprep.subr.mxu0 0.0
      %4770 = vmatpush2.msra.mxu0 0.0
      %4771 = vmatprep.subr.mxu0 0.0
      %4772 = vmatpush2.msra.mxu0 0.0
      %4773 = vmatprep.subr.mxu0 0.0
      %4774 = vmatpush2.msra.mxu0 0.0
      %4775 = vmatprep.subr.mxu0 0.0
      %4776 = vmatpush2.msra.mxu0 0.0
      %4777 = vmatprep.subr.mxu0 0.0
      %4778 = vmatpush2.msra.mxu0 0.0
      %4779 = vmatprep.subr.mxu0 0.0
      %4780 = vmatpush2.msra.mxu0 0.0
      %4781 = vmatprep.subr.mxu0 0.0
      %4782 = vmatpush2.msra.mxu0 0.0
      %4783 = vmatprep.subr.mxu0 0.0
      %4784 = vmatpush2.msra.mxu0 0.0
      %4785 = vmatprep.subr.mxu0 0.0
      %4786 = vmatpush2.msra.mxu0 0.0
      %4787 = vmatprep.subr.mxu0 0.0
      %4788 = vmatpush2.msra.mxu0 0.0
      %4789 = vmatprep.subr.mxu0 0.0
      %4790 = vmatpush2.msra.mxu0 0.0
      %4791 = vmatprep.subr.mxu0 0.0
      %4792 = vmatpush2.msra.mxu0 0.0
      %4793 = vmatprep.subr.mxu0 0.0
      %4794 = vmatpush2.msra.mxu0 0.0
      %4795 = vmatprep.mubr.f32.mxu0 0.0
      %4796 = vmatmul.mubr.f32.gmra.mxu0 %v4708
      %v4797 = vpop.f32.mrf.mxu0
      %v4798 = vadd.f32 0.0, %v4797
      %v4799 = vpop.f32.mrf.mxu0
      %4800 = vmatprep.mubr.f32.mxu0 0.0
      %4801 = vmatmul.mubr.f32.gmra.mxu0 %v4711
      %v4802 = vpop.f32.mrf.mxu0
      %v4803 = vadd.f32 0.0, %v4802
      %v4804 = vpop.f32.mrf.mxu0
      %4805 = vmatprep.mubr.f32.mxu0 0.0
      %4806 = vmatmul.mubr.f32.gmra.mxu0 %v4714
      %v4807 = vpop.f32.mrf.mxu0
      %v4808 = vadd.f32 0.0, %v4807
      %v4809 = vpop.f32.mrf.mxu0
      %4810 = vmatprep.mubr.f32.mxu0 0.0
      %4811 = vmatmul.mubr.f32.gmra.mxu0 %v4717
      %v4812 = vpop.f32.mrf.mxu0
      %v4813 = vadd.f32 0.0, %v4812
      %v4814 = vpop.f32.mrf.mxu0
      %4815 = vmatprep.mubr.f32.mxu0 0.0
      %4816 = vmatmul.mubr.f32.gmra.mxu0 %v4720
      %v4817 = vpop.f32.mrf.mxu0
      %v4818 = vadd.f32 0.0, %v4817
      %v4819 = vpop.f32.mrf.mxu0
      %4820 = vmatprep.mubr.f32.mxu0 0.0
      %4821 = vmatmul.mubr.f32.gmra.mxu0 %v4723
      %v4822 = vpop.f32.mrf.mxu0
      %v4823 = vadd.f32 0.0, %v4822
      %v4824 = vpop.f32.mrf.mxu0
      %4825 = vmatprep.mubr.f32.mxu0 0.0
      %4826 = vmatmul.mubr.f32.gmra.mxu0 %v4726
      %v4827 = vpop.f32.mrf.mxu0
      %v4828 = vadd.f32 0.0, %v4827
      %v4829 = vpop.f32.mrf.mxu0
      %4830 = vmatprep.mubr.f32.mxu0 0.0
      %4831 = vmatmul.mubr.f32.gmra.mxu0 %v4729
      %v4832 = vpop.f32.mrf.mxu0
      %v4833 = vadd.f32 0.0, %v4832
      %v4834 = vpop.f32.mrf.mxu0
      %4835 = vdwg.mxu0
      %v4836 = vadd.f32 %v4656, %v4798
      %v4837 = vadd.f32 %v4657, %v4803
      %v4838 = vadd.f32 %v4658, %v4808
      %v4839 = vadd.f32 %v4659, %v4813
      %v4840 = vadd.f32 %v4660, %v4818
      %v4841 = vadd.f32 %v4661, %v4823
      %v4842 = vadd.f32 %v4662, %v4828
      %v4843 = vadd.f32 %v4663, %v4833
      %4844 = vset.pattern.permute.xlu0 25
      %4845 = vperm.xlu0 %4844, %v240
      %v4846 = vpop.permute.xlu0 %4845
      %4848 = vset.pattern.permute.xlu0 25
      %4849 = vperm.xlu0 %4848, %v241
      %v4850 = vpop.permute.xlu0 %4849
      %4852 = vset.pattern.permute.xlu0 25
      %4853 = vperm.xlu0 %4852, %v242
      %v4854 = vpop.permute.xlu0 %4853
      %4856 = vset.pattern.permute.xlu0 25
      %4857 = vperm.xlu0 %4856, %v243
      %v4858 = vpop.permute.xlu0 %4857
      %4860 = vset.pattern.permute.xlu0 25
      %4861 = vperm.xlu0 %4860, %v244
      %v4862 = vpop.permute.xlu0 %4861
      %4864 = vset.pattern.permute.xlu0 25
      %4865 = vperm.xlu0 %4864, %v245
      %v4866 = vpop.permute.xlu0 %4865
      %4868 = vset.pattern.permute.xlu0 25
      %4869 = vperm.xlu0 %4868, %v246
      %v4870 = vpop.permute.xlu0 %4869
      %4872 = vset.pattern.permute.xlu0 25
      %4873 = vperm.xlu0 %4872, %v247
      %v4874 = vpop.permute.xlu0 %4873
      %v4876 = vmul.f32 %v313, %v4846
      %v4877 = vmul.f32 %v315, %v4850
      %v4878 = vmul.f32 %v316, %v4854
      %v4879 = vmul.f32 %v301, %v4858
      %v4880 = vmul.f32 %v303, %v4862
      %v4881 = vmul.f32 %v323, %v4866
      %v4882 = vmul.f32 %v309, %v4870
      %v4883 = vmul.f32 %v311, %v4874
      %s4884 = scalar_lea.vmem %s2, 400
      %v4885 = vld [vmem:[%s4884] sm:$0xff]
      %v4886 = vld [vmem:[%s4884 + $0x8] sm:$0xff]
      %v4888 = vsel %vm367, %v4876, 0
      %v4891 = vsel %vm367, %v4877, 0
      %v4894 = vsel %vm367, %v4878, 0
      %v4897 = vsel %vm367, %v4879, 0
      %v4900 = vsel %vm367, %v4880, 0
      %v4903 = vsel %vm367, %v4881, 0
      %v4906 = vsel %vm367, %v4882, 0
      %v4909 = vsel %vm367, %v4883, 0
      %4911 = vmatprep.subr.mxu0 0.0
      %4912 = vmatpush1.msra.mxu0 0.0
      %4913 = vmatprep.subr.mxu0 0.0
      %4914 = vmatpush1.msra.mxu0 0.0
      %4915 = vmatprep.subr.mxu0 0.0
      %4916 = vmatpush1.msra.mxu0 0.0
      %4917 = vmatprep.subr.mxu0 0.0
      %4918 = vmatpush1.msra.mxu0 0.0
      %4919 = vmatprep.subr.mxu0 0.0
      %4920 = vmatpush1.msra.mxu0 0.0
      %4921 = vmatprep.subr.mxu0 0.0
      %4922 = vmatpush1.msra.mxu0 0.0
      %4923 = vmatprep.subr.mxu0 0.0
      %4924 = vmatpush1.msra.mxu0 0.0
      %4925 = vmatprep.subr.mxu0 0.0
      %4926 = vmatpush1.msra.mxu0 0.0
      %4927 = vmatprep.subr.mxu0 0.0
      %4928 = vmatpush1.msra.mxu0 0.0
      %4929 = vmatprep.subr.mxu0 0.0
      %4930 = vmatpush1.msra.mxu0 0.0
      %4931 = vmatprep.subr.mxu0 0.0
      %4932 = vmatpush1.msra.mxu0 0.0
      %4933 = vmatprep.subr.mxu0 0.0
      %4934 = vmatpush1.msra.mxu0 0.0
      %4935 = vmatprep.subr.mxu0 0.0
      %4936 = vmatpush1.msra.mxu0 0.0
      %4937 = vmatprep.subr.mxu0 0.0
      %4938 = vmatpush1.msra.mxu0 0.0
      %4939 = vmatprep.subr.mxu0 0.0
      %4940 = vmatpush1.msra.mxu0 %v4886
      %4941 = vmatprep.subr.mxu0 0.0
      %4942 = vmatpush1.msra.mxu0 %v4885
      %4943 = vmatprep.subr.mxu0 0.0
      %4944 = vmatpush2.msra.mxu0 0.0
      %4945 = vmatprep.subr.mxu0 0.0
      %4946 = vmatpush2.msra.mxu0 0.0
      %4947 = vmatprep.subr.mxu0 0.0
      %4948 = vmatpush2.msra.mxu0 0.0
      %4949 = vmatprep.subr.mxu0 0.0
      %4950 = vmatpush2.msra.mxu0 0.0
      %4951 = vmatprep.subr.mxu0 0.0
      %4952 = vmatpush2.msra.mxu0 0.0
      %4953 = vmatprep.subr.mxu0 0.0
      %4954 = vmatpush2.msra.mxu0 0.0
      %4955 = vmatprep.subr.mxu0 0.0
      %4956 = vmatpush2.msra.mxu0 0.0
      %4957 = vmatprep.subr.mxu0 0.0
      %4958 = vmatpush2.msra.mxu0 0.0
      %4959 = vmatprep.subr.mxu0 0.0
      %4960 = vmatpush2.msra.mxu0 0.0
      %4961 = vmatprep.subr.mxu0 0.0
      %4962 = vmatpush2.msra.mxu0 0.0
      %4963 = vmatprep.subr.mxu0 0.0
      %4964 = vmatpush2.msra.mxu0 0.0
      %4965 = vmatprep.subr.mxu0 0.0
      %4966 = vmatpush2.msra.mxu0 0.0
      %4967 = vmatprep.subr.mxu0 0.0
      %4968 = vmatpush2.msra.mxu0 0.0
      %4969 = vmatprep.subr.mxu0 0.0
      %4970 = vmatpush2.msra.mxu0 0.0
      %4971 = vmatprep.subr.mxu0 0.0
      %4972 = vmatpush2.msra.mxu0 0.0
      %4973 = vmatprep.subr.mxu0 0.0
      %4974 = vmatpush2.msra.mxu0 0.0
      %4975 = vmatprep.mubr.f32.mxu0 0.0
      %4976 = vmatmul.mubr.f32.gmra.mxu0 %v4888
      %v4977 = vpop.f32.mrf.mxu0
      %v4978 = vadd.f32 0.0, %v4977
      %v4979 = vpop.f32.mrf.mxu0
      %4980 = vmatprep.mubr.f32.mxu0 0.0
      %4981 = vmatmul.mubr.f32.gmra.mxu0 %v4891
      %v4982 = vpop.f32.mrf.mxu0
      %v4983 = vadd.f32 0.0, %v4982
      %v4984 = vpop.f32.mrf.mxu0
      %4985 = vmatprep.mubr.f32.mxu0 0.0
      %4986 = vmatmul.mubr.f32.gmra.mxu0 %v4894
      %v4987 = vpop.f32.mrf.mxu0
      %v4988 = vadd.f32 0.0, %v4987
      %v4989 = vpop.f32.mrf.mxu0
      %4990 = vmatprep.mubr.f32.mxu0 0.0
      %4991 = vmatmul.mubr.f32.gmra.mxu0 %v4897
      %v4992 = vpop.f32.mrf.mxu0
      %v4993 = vadd.f32 0.0, %v4992
      %v4994 = vpop.f32.mrf.mxu0
      %4995 = vmatprep.mubr.f32.mxu0 0.0
      %4996 = vmatmul.mubr.f32.gmra.mxu0 %v4900
      %v4997 = vpop.f32.mrf.mxu0
      %v4998 = vadd.f32 0.0, %v4997
      %v4999 = vpop.f32.mrf.mxu0
      %5000 = vmatprep.mubr.f32.mxu0 0.0
      %5001 = vmatmul.mubr.f32.gmra.mxu0 %v4903
      %v5002 = vpop.f32.mrf.mxu0
      %v5003 = vadd.f32 0.0, %v5002
      %v5004 = vpop.f32.mrf.mxu0
      %5005 = vmatprep.mubr.f32.mxu0 0.0
      %5006 = vmatmul.mubr.f32.gmra.mxu0 %v4906
      %v5007 = vpop.f32.mrf.mxu0
      %v5008 = vadd.f32 0.0, %v5007
      %v5009 = vpop.f32.mrf.mxu0
      %5010 = vmatprep.mubr.f32.mxu0 0.0
      %5011 = vmatmul.mubr.f32.gmra.mxu0 %v4909
      %v5012 = vpop.f32.mrf.mxu0
      %v5013 = vadd.f32 0.0, %v5012
      %v5014 = vpop.f32.mrf.mxu0
      %5015 = vdwg.mxu0
      %v5016 = vadd.f32 %v4836, %v4978
      %v5017 = vadd.f32 %v4837, %v4983
      %v5018 = vadd.f32 %v4838, %v4988
      %v5019 = vadd.f32 %v4839, %v4993
      %v5020 = vadd.f32 %v4840, %v4998
      %v5021 = vadd.f32 %v4841, %v5003
      %v5022 = vadd.f32 %v4842, %v5008
      %v5023 = vadd.f32 %v4843, %v5013
      %5024 = vset.pattern.permute.xlu0 26
      %5025 = vperm.xlu0 %5024, %v240
      %v5026 = vpop.permute.xlu0 %5025
      %5028 = vset.pattern.permute.xlu0 26
      %5029 = vperm.xlu0 %5028, %v241
      %v5030 = vpop.permute.xlu0 %5029
      %5032 = vset.pattern.permute.xlu0 26
      %5033 = vperm.xlu0 %5032, %v242
      %v5034 = vpop.permute.xlu0 %5033
      %5036 = vset.pattern.permute.xlu0 26
      %5037 = vperm.xlu0 %5036, %v243
      %v5038 = vpop.permute.xlu0 %5037
      %5040 = vset.pattern.permute.xlu0 26
      %5041 = vperm.xlu0 %5040, %v244
      %v5042 = vpop.permute.xlu0 %5041
      %5044 = vset.pattern.permute.xlu0 26
      %5045 = vperm.xlu0 %5044, %v245
      %v5046 = vpop.permute.xlu0 %5045
      %5048 = vset.pattern.permute.xlu0 26
      %5049 = vperm.xlu0 %5048, %v246
      %v5050 = vpop.permute.xlu0 %5049
      %5052 = vset.pattern.permute.xlu0 26
      %5053 = vperm.xlu0 %5052, %v247
      %v5054 = vpop.permute.xlu0 %5053
      %v5056 = vmul.f32 %v641, %v5026
      %v5057 = vmul.f32 %v643, %v5030
      %v5058 = vmul.f32 %v644, %v5034
      %v5059 = vmul.f32 %v629, %v5038
      %v5060 = vmul.f32 %v631, %v5042
      %v5061 = vmul.f32 %v651, %v5046
      %v5062 = vmul.f32 %v637, %v5050
      %v5063 = vmul.f32 %v639, %v5054
      %s5064 = scalar_lea.vmem %s2, 416
      %v5065 = vld [vmem:[%s5064] sm:$0xff]
      %v5066 = vld [vmem:[%s5064 + $0x8] sm:$0xff]
      %v5068 = vsel %vm367, %v5056, 0
      %v5071 = vsel %vm367, %v5057, 0
      %v5074 = vsel %vm367, %v5058, 0
      %v5077 = vsel %vm367, %v5059, 0
      %v5080 = vsel %vm367, %v5060, 0
      %v5083 = vsel %vm367, %v5061, 0
      %v5086 = vsel %vm367, %v5062, 0
      %v5089 = vsel %vm367, %v5063, 0
      %5091 = vmatprep.subr.mxu0 0.0
      %5092 = vmatpush1.msra.mxu0 0.0
      %5093 = vmatprep.subr.mxu0 0.0
      %5094 = vmatpush1.msra.mxu0 0.0
      %5095 = vmatprep.subr.mxu0 0.0
      %5096 = vmatpush1.msra.mxu0 0.0
      %5097 = vmatprep.subr.mxu0 0.0
      %5098 = vmatpush1.msra.mxu0 0.0
      %5099 = vmatprep.subr.mxu0 0.0
      %5100 = vmatpush1.msra.mxu0 0.0
      %5101 = vmatprep.subr.mxu0 0.0
      %5102 = vmatpush1.msra.mxu0 0.0
      %5103 = vmatprep.subr.mxu0 0.0
      %5104 = vmatpush1.msra.mxu0 0.0
      %5105 = vmatprep.subr.mxu0 0.0
      %5106 = vmatpush1.msra.mxu0 0.0
      %5107 = vmatprep.subr.mxu0 0.0
      %5108 = vmatpush1.msra.mxu0 0.0
      %5109 = vmatprep.subr.mxu0 0.0
      %5110 = vmatpush1.msra.mxu0 0.0
      %5111 = vmatprep.subr.mxu0 0.0
      %5112 = vmatpush1.msra.mxu0 0.0
      %5113 = vmatprep.subr.mxu0 0.0
      %5114 = vmatpush1.msra.mxu0 0.0
      %5115 = vmatprep.subr.mxu0 0.0
      %5116 = vmatpush1.msra.mxu0 0.0
      %5117 = vmatprep.subr.mxu0 0.0
      %5118 = vmatpush1.msra.mxu0 0.0
      %5119 = vmatprep.subr.mxu0 0.0
      %5120 = vmatpush1.msra.mxu0 %v5066
      %5121 = vmatprep.subr.mxu0 0.0
      %5122 = vmatpush1.msra.mxu0 %v5065
      %5123 = vmatprep.subr.mxu0 0.0
      %5124 = vmatpush2.msra.mxu0 0.0
      %5125 = vmatprep.subr.mxu0 0.0
      %5126 = vmatpush2.msra.mxu0 0.0
      %5127 = vmatprep.subr.mxu0 0.0
      %5128 = vmatpush2.msra.mxu0 0.0
      %5129 = vmatprep.subr.mxu0 0.0
      %5130 = vmatpush2.msra.mxu0 0.0
      %5131 = vmatprep.subr.mxu0 0.0
      %5132 = vmatpush2.msra.mxu0 0.0
      %5133 = vmatprep.subr.mxu0 0.0
      %5134 = vmatpush2.msra.mxu0 0.0
      %5135 = vmatprep.subr.mxu0 0.0
      %5136 = vmatpush2.msra.mxu0 0.0
      %5137 = vmatprep.subr.mxu0 0.0
      %5138 = vmatpush2.msra.mxu0 0.0
      %5139 = vmatprep.subr.mxu0 0.0
      %5140 = vmatpush2.msra.mxu0 0.0
      %5141 = vmatprep.subr.mxu0 0.0
      %5142 = vmatpush2.msra.mxu0 0.0
      %5143 = vmatprep.subr.mxu0 0.0
      %5144 = vmatpush2.msra.mxu0 0.0
      %5145 = vmatprep.subr.mxu0 0.0
      %5146 = vmatpush2.msra.mxu0 0.0
      %5147 = vmatprep.subr.mxu0 0.0
      %5148 = vmatpush2.msra.mxu0 0.0
      %5149 = vmatprep.subr.mxu0 0.0
      %5150 = vmatpush2.msra.mxu0 0.0
      %5151 = vmatprep.subr.mxu0 0.0
      %5152 = vmatpush2.msra.mxu0 0.0
      %5153 = vmatprep.subr.mxu0 0.0
      %5154 = vmatpush2.msra.mxu0 0.0
      %5155 = vmatprep.mubr.f32.mxu0 0.0
      %5156 = vmatmul.mubr.f32.gmra.mxu0 %v5068
      %v5157 = vpop.f32.mrf.mxu0
      %v5158 = vadd.f32 0.0, %v5157
      %v5159 = vpop.f32.mrf.mxu0
      %5160 = vmatprep.mubr.f32.mxu0 0.0
      %5161 = vmatmul.mubr.f32.gmra.mxu0 %v5071
      %v5162 = vpop.f32.mrf.mxu0
      %v5163 = vadd.f32 0.0, %v5162
      %v5164 = vpop.f32.mrf.mxu0
      %5165 = vmatprep.mubr.f32.mxu0 0.0
      %5166 = vmatmul.mubr.f32.gmra.mxu0 %v5074
      %v5167 = vpop.f32.mrf.mxu0
      %v5168 = vadd.f32 0.0, %v5167
      %v5169 = vpop.f32.mrf.mxu0
      %5170 = vmatprep.mubr.f32.mxu0 0.0
      %5171 = vmatmul.mubr.f32.gmra.mxu0 %v5077
      %v5172 = vpop.f32.mrf.mxu0
      %v5173 = vadd.f32 0.0, %v5172
      %v5174 = vpop.f32.mrf.mxu0
      %5175 = vmatprep.mubr.f32.mxu0 0.0
      %5176 = vmatmul.mubr.f32.gmra.mxu0 %v5080
      %v5177 = vpop.f32.mrf.mxu0
      %v5178 = vadd.f32 0.0, %v5177
      %v5179 = vpop.f32.mrf.mxu0
      %5180 = vmatprep.mubr.f32.mxu0 0.0
      %5181 = vmatmul.mubr.f32.gmra.mxu0 %v5083
      %v5182 = vpop.f32.mrf.mxu0
      %v5183 = vadd.f32 0.0, %v5182
      %v5184 = vpop.f32.mrf.mxu0
      %5185 = vmatprep.mubr.f32.mxu0 0.0
      %5186 = vmatmul.mubr.f32.gmra.mxu0 %v5086
      %v5187 = vpop.f32.mrf.mxu0
      %v5188 = vadd.f32 0.0, %v5187
      %v5189 = vpop.f32.mrf.mxu0
      %5190 = vmatprep.mubr.f32.mxu0 0.0
      %5191 = vmatmul.mubr.f32.gmra.mxu0 %v5089
      %v5192 = vpop.f32.mrf.mxu0
      %v5193 = vadd.f32 0.0, %v5192
      %v5194 = vpop.f32.mrf.mxu0
      %5195 = vdwg.mxu0
      %v5196 = vadd.f32 %v5016, %v5158
      %v5197 = vadd.f32 %v5017, %v5163
      %v5198 = vadd.f32 %v5018, %v5168
      %v5199 = vadd.f32 %v5019, %v5173
      %v5200 = vadd.f32 %v5020, %v5178
      %v5201 = vadd.f32 %v5021, %v5183
      %v5202 = vadd.f32 %v5022, %v5188
      %v5203 = vadd.f32 %v5023, %v5193
      %v5204 = vld [vmem:[%s3] sm:$0x1]
      %v5206 = vlaneseq
      %v5207 = vshrl.u32 %v5206, 7
      %v5208 = vsub.s32 0, %v5207
      %v5209 = vrot.slane %v5204, %v5208
      %v5211 = vadd.f32 %v5196, %v5209
      %v5212 = vadd.f32 %v5197, %v5209
      %v5213 = vadd.f32 %v5198, %v5209
      %v5214 = vadd.f32 %v5199, %v5209
      %v5215 = vadd.f32 %v5200, %v5209
      %v5216 = vadd.f32 %v5201, %v5209
      %v5217 = vadd.f32 %v5202, %v5209
      %v5218 = vadd.f32 %v5203, %v5209
      %vm5219 = vcmask 64512
      %v5220 = vsel %vm5219, %v5211, 0.0
      %v5221 = vsel %vm5219, %v5212, 0.0
      %v5222 = vadd.f32 %v5220, %v5221
      %v5223 = vsel %vm5219, %v5213, 0.0
      %v5224 = vadd.f32 %v5222, %v5223
      %v5225 = vsel %vm5219, %v5214, 0.0
      %v5226 = vadd.f32 %v5224, %v5225
      %v5227 = vsel %vm5219, %v5215, 0.0
      %v5228 = vadd.f32 %v5226, %v5227
      %v5229 = vsel %vm5219, %v5216, 0.0
      %v5230 = vadd.f32 %v5228, %v5229
      %v5231 = vsel %vm5219, %v5217, 0.0
      %v5232 = vadd.f32 %v5230, %v5231
      %v5233 = vsel %vm5219, %v5218, 0.0
      %v5234 = vadd.f32 %v5232, %v5233
      %v5235 = vrot.slane %v5234, 4
      %v5236 = vadd.f32 %v5234, %v5235
      %v5237 = vrot.slane %v5236, 2
      %v5238 = vadd.f32 %v5236, %v5237
      %v5239 = vrot.slane %v5238, 1
      %v5240 = vadd.f32 %v5238, %v5239
      %v5241 = vrcp.pop 64.0
      %v5242 = vmul.f32 %v5240, %v5241
      %v5243 = vsub.f32 %v5211, %v5242
      %v5244 = vsub.f32 %v5212, %v5242
      %v5245 = vsub.f32 %v5213, %v5242
      %v5246 = vsub.f32 %v5214, %v5242
      %v5247 = vsub.f32 %v5215, %v5242
      %v5248 = vsub.f32 %v5216, %v5242
      %v5249 = vsub.f32 %v5217, %v5242
      %v5250 = vsub.f32 %v5218, %v5242
      %v5251 = vmul.f32 %v5243, %v5243
      %v5252 = vmul.f32 %v5244, %v5244
      %v5253 = vmul.f32 %v5245, %v5245
      %v5254 = vmul.f32 %v5246, %v5246
      %v5255 = vmul.f32 %v5247, %v5247
      %v5256 = vmul.f32 %v5248, %v5248
      %v5257 = vmul.f32 %v5249, %v5249
      %v5258 = vmul.f32 %v5250, %v5250
      %v5259 = vsel %vm5219, %v5251, 0.0
      %v5260 = vsel %vm5219, %v5252, 0.0
      %v5261 = vadd.f32 %v5259, %v5260
      %v5262 = vsel %vm5219, %v5253, 0.0
      %v5263 = vadd.f32 %v5261, %v5262
      %v5264 = vsel %vm5219, %v5254, 0.0
      %v5265 = vadd.f32 %v5263, %v5264
      %v5266 = vsel %vm5219, %v5255, 0.0
      %v5267 = vadd.f32 %v5265, %v5266
      %v5268 = vsel %vm5219, %v5256, 0.0
      %v5269 = vadd.f32 %v5267, %v5268
      %v5270 = vsel %vm5219, %v5257, 0.0
      %v5271 = vadd.f32 %v5269, %v5270
      %v5272 = vsel %vm5219, %v5258, 0.0
      %v5273 = vadd.f32 %v5271, %v5272
      %v5274 = vrot.slane %v5273, 4
      %v5275 = vadd.f32 %v5273, %v5274
      %v5276 = vrot.slane %v5275, 2
      %v5277 = vadd.f32 %v5275, %v5276
      %v5278 = vrot.slane %v5277, 1
      %v5279 = vadd.f32 %v5277, %v5278
      %v5280 = vmul.f32 %v5279, %v5241
      %v5281 = vadd.f32 %v5280, 1e-05
      %v5282 = vrsqrt.pop %v5281
      %v5283 = vmul.f32 %v5243, %v5282
      %v5284 = vmul.f32 %v5244, %v5282
      %v5285 = vmul.f32 %v5245, %v5282
      %v5286 = vmul.f32 %v5246, %v5282
      %v5287 = vmul.f32 %v5247, %v5282
      %v5288 = vmul.f32 %v5248, %v5282
      %v5289 = vmul.f32 %v5249, %v5282
      %v5290 = vmul.f32 %v5250, %v5282
      %vm5291 = vcmp.ge.f32.partialorder %v5283, 0.0
      %vm5292 = vcmp.ge.f32.partialorder %v5284, 0.0
      %vm5293 = vcmp.ge.f32.partialorder %v5285, 0.0
      %vm5294 = vcmp.ge.f32.partialorder %v5286, 0.0
      %vm5295 = vcmp.ge.f32.partialorder %v5287, 0.0
      %vm5296 = vcmp.ge.f32.partialorder %v5288, 0.0
      %vm5297 = vcmp.ge.f32.partialorder %v5289, 0.0
      %vm5298 = vcmp.ge.f32.partialorder %v5290, 0.0
      %v5299 = vmul.f32 %v5283, 0.01
      %v5300 = vmul.f32 %v5284, 0.01
      %v5301 = vmul.f32 %v5285, 0.01
      %v5302 = vmul.f32 %v5286, 0.01
      %v5303 = vmul.f32 %v5287, 0.01
      %v5304 = vmul.f32 %v5288, 0.01
      %v5305 = vmul.f32 %v5289, 0.01
      %v5306 = vmul.f32 %v5290, 0.01
      %v5307 = vsel %vm5291, %v5283, %v5299
      %v5308 = vsel %vm5292, %v5284, %v5300
      %v5309 = vsel %vm5293, %v5285, %v5301
      %v5310 = vsel %vm5294, %v5286, %v5302
      %v5311 = vsel %vm5295, %v5287, %v5303
      %v5312 = vsel %vm5296, %v5288, %v5304
      %v5313 = vsel %vm5297, %v5289, %v5305
      %v5314 = vsel %vm5298, %v5290, %v5306
      %5315 = vst.msk [vmem:[%s197] sm:$0xff] %vm5219, %v5307
      %5316 = vst.msk [vmem:[%s197 + $0x8] sm:$0xff] %vm5219, %v5308
      %5317 = vst.msk [vmem:[%s197 + $0x10] sm:$0xff] %vm5219, %v5309
      %5318 = vst.msk [vmem:[%s197 + $0x18] sm:$0xff] %vm5219, %v5310
      %5319 = vst.msk [vmem:[%s197 + $0x20] sm:$0xff] %vm5219, %v5311
      %5320 = vst.msk [vmem:[%s197 + $0x28] sm:$0xff] %vm5219, %v5312
      %5321 = vst.msk [vmem:[%s197 + $0x30] sm:$0xff] %vm5219, %v5313
      %5322 = vst.msk [vmem:[%s197 + $0x38] sm:$0xff] %vm5219, %v5314
      %p5323 = scmp.lt.s32.totalorder %s15, 1
      %s5324 = scalar_select %p5323, %s15, 1
      %s5325 = smul.addr %s5324, 8
      %s5326 = smul.addr %s5325, 8
      %s5327 = scalar_lea.vmem %s4, %s5326
      // Predicated region
      $region37: #{tpu_custom_call.1} parent=35 // pred_check
        %p5328 = pneg %p122
      $region38: #{tpu_custom_call.1} parent=35 // pred_check_branch
        %5330 = sbr.rel (%p5328) target = $region40
      $region39: #{tpu_custom_call.1} parent=35 // pred_region
        _
      $region40: #{tpu_custom_call.1} parent=35 // pred_fallthru
        _
    $region36: #{tpu_custom_call.1} parent=5 // pred_fallthru
      _
    %p5331 = scmp.le.s32.totalorder 2, %s10
    // Predicated region
    $region41: #{tpu_custom_call.1} parent=5 // pred_check
      %p5332 = pneg %p5331
    $region42: #{tpu_custom_call.1} parent=5 // pred_check_branch
      %5334 = sbr.rel (%p5332) target = $region44
    $region43: #{tpu_custom_call.1} parent=5 // pred_region
      %s5335 = ssub.s32 %s10, 2
      // Predicated region
      $region45: #{tpu_custom_call.1} parent=43 // pred_check
        %p5336 = pneg %p128
      $region46: #{tpu_custom_call.1} parent=43 // pred_check_branch
        %5338 = sbr.rel (%p5336) target = $region48
      $region47: #{tpu_custom_call.1} parent=43 // pred_region
        %p5339 = scmp.lt.s32.totalorder %s16, 1
        %s5340 = scalar_select %p5339, %s16, 1
        %s5341 = smul.addr %s5340, 8
        %s5342 = smul.addr %s5341, 8
        %s5343 = scalar_lea.vmem %s4, %s5342
      $region48: #{tpu_custom_call.1} parent=43 // pred_fallthru
        _
    $region44: #{tpu_custom_call.1} parent=5 // pred_fallthru
      _
  $region6: #{tpu_custom_call.1} parent=0 // loop_footer
    %s14 = sadd.s32 1, %s10
  $region7: #{tpu_custom_call.1} parent=0 // loop_footer_branch
    %9 = sbr.rel target = $region3
  $region8: #{tpu_custom_call.1} parent=0 // loop_exit
    _

</llo_original>
